<compile_context>
chip_gen: v6e
topology: v6e:2x2x1
jax: 0.10.0
libtpu: 0.0.40
codegen_flags: <defaults>
</compile_context>

<pallas_src>
import functools

import jax
import jax.numpy as jnp
from jax.experimental import pallas as pl
from jax.experimental.pallas import tpu as pltpu

LANE = 128  # TPU lane width


def _round_up(x, m):
    return (x + m - 1) // m * m


# ----------------------------- kernels --------------------------------------


def encoder_kernel(x_ref, w_ref, b_ref, h_ref):
    # h = x @ W_enc + b_enc   (bf16 MXU inputs, f32 accumulation, bf16 out)
    h = jnp.dot(x_ref[...], w_ref[...], preferred_element_type=jnp.float32)
    h_ref[...] = (h + b_ref[...]).astype(jnp.bfloat16)


def _sage_accumulate(a_ref, hk_ref, acc_ref):
    k = pl.program_id(1)

    @pl.when(k == 0)
    def _():
        acc_ref[...] = jnp.zeros_like(acc_ref)

    # partial mean aggregation:  [TI, TK](bf16) @ [TK, H](bf16) -> f32 acc
    # (no casts inside the hot k loop; both operands are already bf16)
    acc_ref[...] += jnp.dot(a_ref[...], hk_ref[...],
                            preferred_element_type=jnp.float32)


def _sage_finalize(acc_ref, hi_ref, wl_ref, wr_ref, b_ref):
    # x_new = agg @ W_l + h @ W_r + b_l  (two K=128 dots, no concat temp)
    h_i = hi_ref[...]                                   # bf16 [TI, H]
    x_new = (
        jnp.dot(acc_ref[...].astype(jnp.bfloat16), wl_ref[...],
                preferred_element_type=jnp.float32)
        + jnp.dot(h_i, wr_ref[...], preferred_element_type=jnp.float32)
        + b_ref[...]
    )
    # residual + ReLU in f32
    return jnp.maximum(h_i.astype(jnp.float32) + x_new, 0.0)


def sage_layer_kernel(a_ref, hk_ref, hi_ref, wl_ref, wr_ref, b_ref,
                      out_ref, acc_ref):
    # grid = (row tiles i [parallel], col tiles k [arbitrary, reduction])
    _sage_accumulate(a_ref, hk_ref, acc_ref)

    @pl.when(pl.program_id(1) == pl.num_programs(1) - 1)
    def _():
        out_ref[...] = _sage_finalize(
            acc_ref, hi_ref, wl_ref, wr_ref, b_ref).astype(jnp.bfloat16)


def sage_layer_classifier_kernel(a_ref, hk_ref, hi_ref, wl_ref, wr_ref, b_ref,
                                 wc_ref, bc_ref, out_ref, acc_ref):
    # Last SAGE layer with the classifier + sigmoid fused into the epilogue.
    _sage_accumulate(a_ref, hk_ref, acc_ref)

    @pl.when(pl.program_id(1) == pl.num_programs(1) - 1)
    def _():
        h_new = _sage_finalize(acc_ref, hi_ref, wl_ref, wr_ref, b_ref)
        # logits into a full 128-lane block (column 0 is real) -> lane-dense vst
        logits = (
            jnp.dot(h_new.astype(jnp.bfloat16), wc_ref[...],
                    preferred_element_type=jnp.float32)
            + bc_ref[...]
        )
        # approx reciprocal (EUP) can over/undershoot [0,1] by ~1e-4
        out_ref[...] = pl.reciprocal(1.0 + jnp.exp(-logits), approx=True)


def classifier_kernel(h_ref, w_ref, b_ref, out_ref):
    # standalone classifier, only used when num_layers == 0
    logits = (
        jnp.dot(h_ref[...], w_ref[...], preferred_element_type=jnp.float32)
        + b_ref[...]
    )
    out_ref[...] = pl.reciprocal(1.0 + jnp.exp(-logits), approx=True)


# ----------------------------- wrapper ---------------------------------------


def choose_tiling(num_nodes, tile_nodes=1024):
    """Pick the node tile (multiple of 128) and padded node count.

    tile is grown toward `tile_nodes` (1024 is the HBM-roofline sweet spot)
    but clamped so num_i = n_pad // tile >= 2 whenever possible, so the
    "parallel" row axis can shard across both TensorCores on v7x.
    For tile=2048 on v5e you must also raise vmem_limit_bytes; not default.
    """
    n_lane = _round_up(num_nodes, LANE)
    half = max(LANE, (n_lane // 2) // LANE * LANE)
    tile = min(_round_up(tile_nodes, LANE), half)
    n_pad = _round_up(n_lane, tile)
    return tile, n_pad


def pad_adjacency(adj_mean, n_pad):
    """Zero-pad A to [n_pad, n_pad] and cast to bf16 ONCE (hoisted out of the
    jitted forward: A is static per graph, no per-call O(N^2) pad/cast pass)."""
    n = adj_mean.shape[0]
    ap = jnp.zeros((n_pad, n_pad), jnp.float32).at[:n, :n].set(adj_mean)
    return ap.astype(jnp.bfloat16)


@functools.partial(jax.jit, static_argnames=("tile",))
def node_level_gnn_forward(x, a_pad, params, *, tile):
    """x: [N, D] f32, a_pad: [n_pad, n_pad] bf16 padded mean-aggregation matrix.

    Returns [N] f32 probabilities (sigmoid(classifier(h)).squeeze()).
    """
    n, d = x.shape
    n_pad = a_pad.shape[0]
    hdim = params["w_enc"].shape[1]          # lane-padded hidden width
    num_layers = params["w_l"].shape[0]
    num_i = n_pad // tile
    num_k = n_pad // tile

    # Pad node rows only (feature dim stays at the true D — no 8x lane
    # inflation of the x stream) and pre-cast to bf16 for the MXU.
    # Padded A rows/cols and padded weight rows/cols are exactly zero, so
    # padded nodes / padded hidden lanes never contaminate real outputs.
    xp = jnp.zeros((n_pad, d), jnp.bfloat16).at[:n, :].set(
        x.astype(jnp.bfloat16))

    # ---- encoder: h0 = x @ W_enc + b_enc (bf16 out) --------------------------
    h = pl.pallas_call(
        encoder_kernel,
        out_shape=jax.ShapeDtypeStruct((n_pad, hdim), jnp.bfloat16),
        grid=(num_i,),
        in_specs=[
            pl.BlockSpec((tile, d), lambda i: (i, 0)),
            pl.BlockSpec((d, hdim), lambda i: (0, 0)),
            pl.BlockSpec((1, hdim), lambda i: (0, 0)),
        ],
        out_specs=pl.BlockSpec((tile, hdim), lambda i: (i, 0)),
        compiler_params=pltpu.CompilerParams(
            dimension_semantics=("parallel",)),
    )(xp, params["w_enc"], params["b_enc"])

    # Shared specs for the SAGE layers (A streamed over k; raise pipeline
    # depth on the A spec with pipeline_mode=pl.Buffered(3) if profiling
    # shows exposed DMA at this tile size).
    sage_in_specs = [
        pl.BlockSpec((tile, tile), lambda i, k: (i, k)),   # A tile (bf16)
        pl.BlockSpec((tile, hdim), lambda i, k: (k, 0)),   # h of source nodes
        pl.BlockSpec((tile, hdim), lambda i, k: (i, 0)),   # h of this row tile
        pl.BlockSpec((hdim, hdim), lambda i, k: (0, 0)),   # W_l
        pl.BlockSpec((hdim, hdim), lambda i, k: (0, 0)),   # W_r
        pl.BlockSpec((1, hdim), lambda i, k: (0, 0)),      # b_l
    ]
    sage_compiler_params = pltpu.CompilerParams(
        dimension_semantics=("parallel", "arbitrary"))

    # ---- SAGE layers 0 .. L-2 (bf16 h out) -----------------------------------
    layer_call = pl.pallas_call(
        sage_layer_kernel,
        out_shape=jax.ShapeDtypeStruct((n_pad, hdim), jnp.bfloat16),
        grid=(num_i, num_k),
        in_specs=sage_in_specs,
        out_specs=pl.BlockSpec((tile, hdim), lambda i, k: (i, 0)),
        scratch_shapes=[pltpu.VMEM((tile, hdim), jnp.float32)],
        compiler_params=sage_compiler_params,
    )

    for layer in range(num_layers - 1):
        h = layer_call(a_pad, h, h,
                       params["w_l"][layer], params["w_r"][layer],
                       params["b_l"][layer])

    # ---- last SAGE layer fused with classifier + sigmoid ---------------------
    if num_layers >= 1:
        last = num_layers - 1
        probs = pl.pallas_call(
            sage_layer_classifier_kernel,
            out_shape=jax.ShapeDtypeStruct((n_pad, LANE), jnp.float32),
            grid=(num_i, num_k),
            in_specs=sage_in_specs + [
                pl.BlockSpec((hdim, LANE), lambda i, k: (0, 0)),   # W_cls
                pl.BlockSpec((1, LANE), lambda i, k: (0, 0)),      # b_cls
            ],
            out_specs=pl.BlockSpec((tile, LANE), lambda i, k: (i, 0)),
            scratch_shapes=[pltpu.VMEM((tile, hdim), jnp.float32)],
            compiler_params=sage_compiler_params,
        )(a_pad, h, h,
          params["w_l"][last], params["w_r"][last], params["b_l"][last],
          params["w_cls"], params["b_cls"])
    else:
        probs = pl.pallas_call(
            classifier_kernel,
            out_shape=jax.ShapeDtypeStruct((n_pad, LANE), jnp.float32),
            grid=(num_i,),
            in_specs=[
                pl.BlockSpec((tile, hdim), lambda i: (i, 0)),
                pl.BlockSpec((hdim, LANE), lambda i: (0, 0)),
                pl.BlockSpec((1, LANE), lambda i: (0, 0)),
            ],
            out_specs=pl.BlockSpec((tile, LANE), lambda i: (i, 0)),
            compiler_params=pltpu.CompilerParams(
                dimension_semantics=("parallel",)),
        )(h, params["w_cls"], params["b_cls"])

    # torch .squeeze() on [N, 1] -> [N]; real logits live in column 0
    return probs[:n, 0]


# --------------------------- graph / params ----------------------------------


def build_mean_adjacency(edge_index, num_nodes):
    """Dense mean-aggregation matrix from edge_index [2, E] (src row 0, dst row 1).

    A[i, j] = multiplicity(j->i) / deg_in(i); isolated nodes get a zero row,
    matching PyG scatter-mean semantics.
    """
    src = edge_index[0]
    dst = edge_index[1]
    a = jnp.zeros((num_nodes, num_nodes), jnp.float32).at[dst, src].add(1.0)
    deg = jnp.sum(a, axis=1, keepdims=True)
    return a / jnp.maximum(deg, 1.0)


def init_params(key, input_dim, hidden_channels, num_layers):
    """PyTorch-like uniform(-1/sqrt(fan_in), 1/sqrt(fan_in)) init, padded to
    TPU-friendly layouts: hidden padded to 128 lanes, classifier widened to a
    128-column matmul, MXU operands stored as bf16."""
    d, h, l = input_dim, hidden_channels, num_layers
    h_pad = _round_up(h, LANE)
    keys = jax.random.split(key, 7)

    def u(k, shape, fan_in):
        bound = 1.0 / jnp.sqrt(jnp.float32(fan_in))
        return jax.random.uniform(k, shape, jnp.float32, -bound, bound)

    # logical parameters ([in_features, out_features]; y = x @ W + b)
    w_enc = u(keys[0], (d, h), d)
    b_enc = u(keys[1], (h,), d)
    w_l = u(keys[2], (l, h, h), h)       # SAGEConv lin_l (neighbors, has bias)
    b_l = u(keys[3], (l, h), h)
    w_r = u(keys[4], (l, h, h), h)       # SAGEConv lin_r (self, no bias)
    w_cls = u(keys[5], (h, 1), h)
    b_cls = u(keys[6], (1,), h)

    # padded TPU layouts (padded hidden lanes are exactly zero)
    w_enc_p = jnp.zeros((d, h_pad), jnp.float32).at[:, :h].set(w_enc)
    b_enc_p = jnp.zeros((1, h_pad), jnp.float32).at[0, :h].set(b_enc)
    w_l_p = jnp.zeros((l, h_pad, h_pad), jnp.float32).at[:, :h, :h].set(w_l)
    w_r_p = jnp.zeros((l, h_pad, h_pad), jnp.float32).at[:, :h, :h].set(w_r)
    b_l_p = jnp.zeros((l, 1, h_pad), jnp.float32).at[:, 0, :h].set(b_l)
    w_cls_p = jnp.zeros((h_pad, LANE), jnp.float32).at[:h, 0].set(w_cls[:, 0])
    b_cls_p = jnp.zeros((1, LANE), jnp.float32).at[0, 0].set(b_cls[0])

    return {
        "w_enc": w_enc_p.astype(jnp.bfloat16),
        "b_enc": b_enc_p,
        "w_l": w_l_p.astype(jnp.bfloat16),
        "w_r": w_r_p.astype(jnp.bfloat16),
        "b_l": b_l_p,
        "w_cls": w_cls_p.astype(jnp.bfloat16),
        "b_cls": b_cls_p,
    }


if __name__ == "__main__":
    # Small synthetic graph: 500 nodes (tile clamps to 256 -> 2x2 grid of A
    # tiles, so both v7x TCs get work), 16 input features, hidden 32 (padded
    # to 128), 2 SAGE layers.
    NUM_NODES = 500
    INPUT_DIM = 16
    HIDDEN = 32
    NUM_LAYERS = 2
    NUM_EDGES = 2048

    root = jax.random.PRNGKey(0)
    k_x, k_src, k_dst, k_params = jax.random.split(root, 4)

    x = jax.random.normal(k_x, (NUM_NODES, INPUT_DIM), jnp.float32)
    src = jax.random.randint(k_src, (NUM_EDGES,), 0, NUM_NODES, jnp.int32)
    dst = jax.random.randint(k_dst, (NUM_EDGES,), 0, NUM_NODES, jnp.int32)
    edge_index = jnp.stack([src, dst], axis=0)        # [2, E]

    adj_mean = build_mean_adjacency(edge_index, NUM_NODES)
    params = init_params(k_params, INPUT_DIM, HIDDEN, NUM_LAYERS)

    # Tiling + A pad/cast are done once, outside the jitted forward.
    tile, n_pad = choose_tiling(NUM_NODES, tile_nodes=1024)
    a_pad = pad_adjacency(adj_mean, n_pad)

    out = node_level_gnn_forward(x, a_pad, params, tile=tile)
    out = jax.block_until_ready(out)

    assert out.shape == (NUM_NODES,)
    # bf16 activations/weights (~2^-8 rel. error) and the approx-reciprocal
    # sigmoid (~1e-4) make this inference-accurate, not bit-exact vs torch.
    assert bool(jnp.all((out >= -1e-3) & (out <= 1.0 + 1e-3)))
    print("KERNEL_OK")
</pallas_src>

<mosaic_0001>
module attributes {stable_mosaic.version = 11 : i64} {
  func.func @encoder_kernel(%arg0: i32, %arg1: memref<256x16xbf16, #tpu.memory_space<vmem>>, %arg2: memref<16x128xbf16, #tpu.memory_space<vmem>>, %arg3: memref<1x128xf32, #tpu.memory_space<vmem>>, %arg4: memref<256x128xbf16, #tpu.memory_space<vmem>>) attributes {dimension_semantics = [#tpu.dimension_semantics<parallel>], iteration_bounds = array<i64: 2>, scalar_prefetch = 0 : i64, scratch_operands = 0 : i64, tpu.core_type = #tpu.core_type<tc>, window_params = [{transform_indices = @transform_0, window_bounds = array<i64: 256, 16>}, {pipeline_mode = #tpu.pipeline_mode<synchronous>, transform_indices = @transform_1, window_bounds = array<i64: 16, 128>}, {pipeline_mode = #tpu.pipeline_mode<synchronous>, transform_indices = @transform_2, window_bounds = array<i64: 1, 128>}, {transform_indices = @transform_3, window_bounds = array<i64: 256, 128>}]} {
    %c0 = arith.constant 0 : index
    %c0_0 = arith.constant 0 : index
    %0 = vector.load %arg1[%c0, %c0_0] : memref<256x16xbf16, #tpu.memory_space<vmem>>, vector<256x16xbf16>
    %c0_1 = arith.constant 0 : index
    %c0_2 = arith.constant 0 : index
    %1 = vector.load %arg2[%c0_1, %c0_2] : memref<16x128xbf16, #tpu.memory_space<vmem>>, vector<16x128xbf16>
    %cst = arith.constant dense<0.000000e+00> : vector<256x128xf32>
    %2 = tpu.matmul %0, %1, %cst {dimension_numbers = #tpu.dot_dimension_numbers<[1], [0], [0], [1], [0, 0, 1, 1], [], []>} : vector<256x16xbf16>, vector<16x128xbf16>, vector<256x128xf32> -> vector<256x128xf32>
    %c0_3 = arith.constant 0 : index
    %c0_4 = arith.constant 0 : index
    %3 = vector.load %arg3[%c0_3, %c0_4] : memref<1x128xf32, #tpu.memory_space<vmem>>, vector<1x128xf32>
    %4 = vector.broadcast %3 : vector<1x128xf32> to vector<256x128xf32>
    %5 = arith.addf %2, %4 : vector<256x128xf32>
    %6 = arith.truncf %5 : vector<256x128xf32> to vector<256x128xbf16>
    %c0_5 = arith.constant 0 : index
    %c0_6 = arith.constant 0 : index
    %7 = vector.load %arg4[%c0_5, %c0_6] : memref<256x128xbf16, #tpu.memory_space<vmem>>, vector<256x128xbf16>
    tpu.vector_store %arg4[%c0_5, %c0_6], %6 {strides = array<i32>} : memref<256x128xbf16, #tpu.memory_space<vmem>>, vector<256x128xbf16>,
    return
  }
  func.func @transform_0(%arg0: i32) -> (i32, i32) {
    %c0_i32 = arith.constant 0 : i32
    %c0_i32_0 = arith.constant 0 : i32
    return %arg0, %c0_i32 : i32, i32
  }
  func.func @transform_1(%arg0: i32) -> (i32, i32) {
    %c0_i32 = arith.constant 0 : i32
    %c0_i32_0 = arith.constant 0 : i32
    %c0_i32_1 = arith.constant 0 : i32
    return %c0_i32, %c0_i32_0 : i32, i32
  }
  func.func @transform_2(%arg0: i32) -> (i32, i32) {
    %c0_i32 = arith.constant 0 : i32
    %c0_i32_0 = arith.constant 0 : i32
    %c0_i32_1 = arith.constant 0 : i32
    return %c0_i32, %c0_i32_0 : i32, i32
  }
  func.func @transform_3(%arg0: i32) -> (i32, i32) {
    %c0_i32 = arith.constant 0 : i32
    %c0_i32_0 = arith.constant 0 : i32
    return %arg0, %c0_i32 : i32, i32
  }
}

module attributes {stable_mosaic.version = 11 : i64} {
  func.func @sage_layer_kernel(%arg0: i32, %arg1: i32, %arg2: memref<256x256xbf16, #tpu.memory_space<vmem>>, %arg3: memref<256x128xbf16, #tpu.memory_space<vmem>>, %arg4: memref<256x128xbf16, #tpu.memory_space<vmem>>, %arg5: memref<128x128xbf16, #tpu.memory_space<vmem>>, %arg6: memref<128x128xbf16, #tpu.memory_space<vmem>>, %arg7: memref<1x128xf32, #tpu.memory_space<vmem>>, %arg8: memref<256x128xbf16, #tpu.memory_space<vmem>>, %arg9: memref<256x128xf32, #tpu.memory_space<vmem>>) attributes {dimension_semantics = [#tpu.dimension_semantics<parallel>, #tpu.dimension_semantics<arbitrary>], iteration_bounds = array<i64: 2, 2>, scalar_prefetch = 0 : i64, scratch_operands = 1 : i64, tpu.core_type = #tpu.core_type<tc>, window_params = [{transform_indices = @transform_0, window_bounds = array<i64: 256, 256>}, {transform_indices = @transform_1, window_bounds = array<i64: 256, 128>}, {transform_indices = @transform_2, window_bounds = array<i64: 256, 128>}, {pipeline_mode = #tpu.pipeline_mode<synchronous>, transform_indices = @transform_3, window_bounds = array<i64: 128, 128>}, {pipeline_mode = #tpu.pipeline_mode<synchronous>, transform_indices = @transform_4, window_bounds = array<i64: 128, 128>}, {pipeline_mode = #tpu.pipeline_mode<synchronous>, transform_indices = @transform_5, window_bounds = array<i64: 1, 128>}, {transform_indices = @transform_6, window_bounds = array<i64: 256, 128>}]} {
    %c0_i32 = arith.constant 0 : i32
    %0 = arith.cmpi eq, %arg1, %c0_i32 : i32
    %1 = arith.extui %0 : i1 to i32
    %c0_i32_0 = arith.constant 0 : i32
    %2 = arith.cmpi ne, %1, %c0_i32_0 : i32
    scf.if %2 {
      %cst_9 = arith.constant 0.000000e+00 : f32
      %12 = vector.broadcast %cst_9 : f32 to vector<256x128xf32>
      %c0_10 = arith.constant 0 : index
      %c0_11 = arith.constant 0 : index
      %13 = vector.load %arg9[%c0_10, %c0_11] : memref<256x128xf32, #tpu.memory_space<vmem>>, vector<256x128xf32>
      tpu.vector_store %arg9[%c0_10, %c0_11], %12 {strides = array<i32>} : memref<256x128xf32, #tpu.memory_space<vmem>>, vector<256x128xf32>,
    } else {
    }
    %c0 = arith.constant 0 : index
    %c0_1 = arith.constant 0 : index
    %3 = vector.load %arg9[%c0, %c0_1] : memref<256x128xf32, #tpu.memory_space<vmem>>, vector<256x128xf32>
    %c0_2 = arith.constant 0 : index
    %c0_3 = arith.constant 0 : index
    %4 = vector.load %arg2[%c0_2, %c0_3] : memref<256x256xbf16, #tpu.memory_space<vmem>>, vector<256x256xbf16>
    %c0_4 = arith.constant 0 : index
    %c0_5 = arith.constant 0 : index
    %5 = vector.load %arg3[%c0_4, %c0_5] : memref<256x128xbf16, #tpu.memory_space<vmem>>, vector<256x128xbf16>
    %cst = arith.constant dense<0.000000e+00> : vector<256x128xf32>
    %6 = tpu.matmul %4, %5, %cst {dimension_numbers = #tpu.dot_dimension_numbers<[1], [0], [0], [1], [0, 0, 1, 1], [], []>} : vector<256x256xbf16>, vector<256x128xbf16>, vector<256x128xf32> -> vector<256x128xf32>
    %7 = arith.addf %3, %6 : vector<256x128xf32>
    %c0_6 = arith.constant 0 : index
    %c0_7 = arith.constant 0 : index
    %8 = vector.load %arg9[%c0_6, %c0_7] : memref<256x128xf32, #tpu.memory_space<vmem>>, vector<256x128xf32>
    tpu.vector_store %arg9[%c0_6, %c0_7], %7 {strides = array<i32>} : memref<256x128xf32, #tpu.memory_space<vmem>>, vector<256x128xf32>,
    %c1_i32 = arith.constant 1 : i32
    %9 = arith.cmpi eq, %arg1, %c1_i32 : i32
    %10 = arith.extui %9 : i1 to i32
    %c0_i32_8 = arith.constant 0 : i32
    %11 = arith.cmpi ne, %10, %c0_i32_8 : i32
    scf.if %11 {
      %c0_9 = arith.constant 0 : index
      %c0_10 = arith.constant 0 : index
      %12 = vector.load %arg4[%c0_9, %c0_10] : memref<256x128xbf16, #tpu.memory_space<vmem>>, vector<256x128xbf16>
      %c0_11 = arith.constant 0 : index
      %c0_12 = arith.constant 0 : index
      %13 = vector.load %arg9[%c0_11, %c0_12] : memref<256x128xf32, #tpu.memory_space<vmem>>, vector<256x128xf32>
      %14 = arith.truncf %13 : vector<256x128xf32> to vector<256x128xbf16>
      %c0_13 = arith.constant 0 : index
      %c0_14 = arith.constant 0 : index
      %15 = vector.load %arg5[%c0_13, %c0_14] : memref<128x128xbf16, #tpu.memory_space<vmem>>, vector<128x128xbf16>
      %cst_15 = arith.constant dense<0.000000e+00> : vector<256x128xf32>
      %16 = tpu.matmul %14, %15, %cst_15 {dimension_numbers = #tpu.dot_dimension_numbers<[1], [0], [0], [1], [0, 0, 1, 1], [], []>} : vector<256x128xbf16>, vector<128x128xbf16>, vector<256x128xf32> -> vector<256x128xf32>
      %c0_16 = arith.constant 0 : index
      %c0_17 = arith.constant 0 : index
      %17 = vector.load %arg6[%c0_16, %c0_17] : memref<128x128xbf16, #tpu.memory_space<vmem>>, vector<128x128xbf16>
      %cst_18 = arith.constant dense<0.000000e+00> : vector<256x128xf32>
      %18 = tpu.matmul %12, %17, %cst_18 {dimension_numbers = #tpu.dot_dimension_numbers<[1], [0], [0], [1], [0, 0, 1, 1], [], []>} : vector<256x128xbf16>, vector<128x128xbf16>, vector<256x128xf32> -> vector<256x128xf32>
      %19 = arith.addf %16, %18 : vector<256x128xf32>
      %c0_19 = arith.constant 0 : index
      %c0_20 = arith.constant 0 : index
      %20 = vector.load %arg7[%c0_19, %c0_20] : memref<1x128xf32, #tpu.memory_space<vmem>>, vector<1x128xf32>
      %21 = vector.broadcast %20 : vector<1x128xf32> to vector<256x128xf32>
      %22 = arith.addf %19, %21 : vector<256x128xf32>
      %23 = arith.extf %12 : vector<256x128xbf16> to vector<256x128xf32>
      %24 = arith.addf %23, %22 : vector<256x128xf32>
      %cst_21 = arith.constant 0.000000e+00 : f32
      %25 = vector.broadcast %cst_21 : f32 to vector<256x128xf32>
      %26 = arith.maximumf %24, %25 : vector<256x128xf32>
      %27 = arith.truncf %26 : vector<256x128xf32> to vector<256x128xbf16>
      %c0_22 = arith.constant 0 : index
      %c0_23 = arith.constant 0 : index
      %28 = vector.load %arg8[%c0_22, %c0_23] : memref<256x128xbf16, #tpu.memory_space<vmem>>, vector<256x128xbf16>
      tpu.vector_store %arg8[%c0_22, %c0_23], %27 {strides = array<i32>} : memref<256x128xbf16, #tpu.memory_space<vmem>>, vector<256x128xbf16>,
    } else {
    }
    return
  }
  func.func @transform_0(%arg0: i32, %arg1: i32) -> (i32, i32) {
    %c0_i32 = arith.constant 0 : i32
    return %arg0, %arg1 : i32, i32
  }
  func.func @transform_1(%arg0: i32, %arg1: i32) -> (i32, i32) {
    %c0_i32 = arith.constant 0 : i32
    %c0_i32_0 = arith.constant 0 : i32
    return %arg1, %c0_i32 : i32, i32
  }
  func.func @transform_2(%arg0: i32, %arg1: i32) -> (i32, i32) {
    %c0_i32 = arith.constant 0 : i32
    %c0_i32_0 = arith.constant 0 : i32
    return %arg0, %c0_i32 : i32, i32
  }
  func.func @transform_3(%arg0: i32, %arg1: i32) -> (i32, i32) {
    %c0_i32 = arith.constant 0 : i32
    %c0_i32_0 = arith.constant 0 : i32
    %c0_i32_1 = arith.constant 0 : i32
    return %c0_i32, %c0_i32_0 : i32, i32
  }
  func.func @transform_4(%arg0: i32, %arg1: i32) -> (i32, i32) {
    %c0_i32 = arith.constant 0 : i32
    %c0_i32_0 = arith.constant 0 : i32
    %c0_i32_1 = arith.constant 0 : i32
    return %c0_i32, %c0_i32_0 : i32, i32
  }
  func.func @transform_5(%arg0: i32, %arg1: i32) -> (i32, i32) {
    %c0_i32 = arith.constant 0 : i32
    %c0_i32_0 = arith.constant 0 : i32
    %c0_i32_1 = arith.constant 0 : i32
    return %c0_i32, %c0_i32_0 : i32, i32
  }
  func.func @transform_6(%arg0: i32, %arg1: i32) -> (i32, i32) {
    %c0_i32 = arith.constant 0 : i32
    %c0_i32_0 = arith.constant 0 : i32
    return %arg0, %c0_i32 : i32, i32
  }
}

module attributes {stable_mosaic.version = 11 : i64} {
  func.func @sage_layer_classifier_kernel(%arg0: i32, %arg1: i32, %arg2: memref<256x256xbf16, #tpu.memory_space<vmem>>, %arg3: memref<256x128xbf16, #tpu.memory_space<vmem>>, %arg4: memref<256x128xbf16, #tpu.memory_space<vmem>>, %arg5: memref<128x128xbf16, #tpu.memory_space<vmem>>, %arg6: memref<128x128xbf16, #tpu.memory_space<vmem>>, %arg7: memref<1x128xf32, #tpu.memory_space<vmem>>, %arg8: memref<128x128xbf16, #tpu.memory_space<vmem>>, %arg9: memref<1x128xf32, #tpu.memory_space<vmem>>, %arg10: memref<256x128xf32, #tpu.memory_space<vmem>>, %arg11: memref<256x128xf32, #tpu.memory_space<vmem>>) attributes {dimension_semantics = [#tpu.dimension_semantics<parallel>, #tpu.dimension_semantics<arbitrary>], iteration_bounds = array<i64: 2, 2>, scalar_prefetch = 0 : i64, scratch_operands = 1 : i64, tpu.core_type = #tpu.core_type<tc>, window_params = [{transform_indices = @transform_0, window_bounds = array<i64: 256, 256>}, {transform_indices = @transform_1, window_bounds = array<i64: 256, 128>}, {transform_indices = @transform_2, window_bounds = array<i64: 256, 128>}, {pipeline_mode = #tpu.pipeline_mode<synchronous>, transform_indices = @transform_3, window_bounds = array<i64: 128, 128>}, {pipeline_mode = #tpu.pipeline_mode<synchronous>, transform_indices = @transform_4, window_bounds = array<i64: 128, 128>}, {pipeline_mode = #tpu.pipeline_mode<synchronous>, transform_indices = @transform_5, window_bounds = array<i64: 1, 128>}, {pipeline_mode = #tpu.pipeline_mode<synchronous>, transform_indices = @transform_6, window_bounds = array<i64: 128, 128>}, {pipeline_mode = #tpu.pipeline_mode<synchronous>, transform_indices = @transform_7, window_bounds = array<i64: 1, 128>}, {transform_indices = @transform_8, window_bounds = array<i64: 256, 128>}]} {
    %c0_i32 = arith.constant 0 : i32
    %0 = arith.cmpi eq, %arg1, %c0_i32 : i32
    %1 = arith.extui %0 : i1 to i32
    %c0_i32_0 = arith.constant 0 : i32
    %2 = arith.cmpi ne, %1, %c0_i32_0 : i32
    scf.if %2 {
      %cst_9 = arith.constant 0.000000e+00 : f32
      %12 = vector.broadcast %cst_9 : f32 to vector<256x128xf32>
      %c0_10 = arith.constant 0 : index
      %c0_11 = arith.constant 0 : index
      %13 = vector.load %arg11[%c0_10, %c0_11] : memref<256x128xf32, #tpu.memory_space<vmem>>, vector<256x128xf32>
      tpu.vector_store %arg11[%c0_10, %c0_11], %12 {strides = array<i32>} : memref<256x128xf32, #tpu.memory_space<vmem>>, vector<256x128xf32>,
    } else {
    }
    %c0 = arith.constant 0 : index
    %c0_1 = arith.constant 0 : index
    %3 = vector.load %arg11[%c0, %c0_1] : memref<256x128xf32, #tpu.memory_space<vmem>>, vector<256x128xf32>
    %c0_2 = arith.constant 0 : index
    %c0_3 = arith.constant 0 : index
    %4 = vector.load %arg2[%c0_2, %c0_3] : memref<256x256xbf16, #tpu.memory_space<vmem>>, vector<256x256xbf16>
    %c0_4 = arith.constant 0 : index
    %c0_5 = arith.constant 0 : index
    %5 = vector.load %arg3[%c0_4, %c0_5] : memref<256x128xbf16, #tpu.memory_space<vmem>>, vector<256x128xbf16>
    %cst = arith.constant dense<0.000000e+00> : vector<256x128xf32>
    %6 = tpu.matmul %4, %5, %cst {dimension_numbers = #tpu.dot_dimension_numbers<[1], [0], [0], [1], [0, 0, 1, 1], [], []>} : vector<256x256xbf16>, vector<256x128xbf16>, vector<256x128xf32> -> vector<256x128xf32>
    %7 = arith.addf %3, %6 : vector<256x128xf32>
    %c0_6 = arith.constant 0 : index
    %c0_7 = arith.constant 0 : index
    %8 = vector.load %arg11[%c0_6, %c0_7] : memref<256x128xf32, #tpu.memory_space<vmem>>, vector<256x128xf32>
    tpu.vector_store %arg11[%c0_6, %c0_7], %7 {strides = array<i32>} : memref<256x128xf32, #tpu.memory_space<vmem>>, vector<256x128xf32>,
    %c1_i32 = arith.constant 1 : i32
    %9 = arith.cmpi eq, %arg1, %c1_i32 : i32
    %10 = arith.extui %9 : i1 to i32
    %c0_i32_8 = arith.constant 0 : i32
    %11 = arith.cmpi ne, %10, %c0_i32_8 : i32
    scf.if %11 {
      %c0_9 = arith.constant 0 : index
      %c0_10 = arith.constant 0 : index
      %12 = vector.load %arg4[%c0_9, %c0_10] : memref<256x128xbf16, #tpu.memory_space<vmem>>, vector<256x128xbf16>
      %c0_11 = arith.constant 0 : index
      %c0_12 = arith.constant 0 : index
      %13 = vector.load %arg11[%c0_11, %c0_12] : memref<256x128xf32, #tpu.memory_space<vmem>>, vector<256x128xf32>
      %14 = arith.truncf %13 : vector<256x128xf32> to vector<256x128xbf16>
      %c0_13 = arith.constant 0 : index
      %c0_14 = arith.constant 0 : index
      %15 = vector.load %arg5[%c0_13, %c0_14] : memref<128x128xbf16, #tpu.memory_space<vmem>>, vector<128x128xbf16>
      %cst_15 = arith.constant dense<0.000000e+00> : vector<256x128xf32>
      %16 = tpu.matmul %14, %15, %cst_15 {dimension_numbers = #tpu.dot_dimension_numbers<[1], [0], [0], [1], [0, 0, 1, 1], [], []>} : vector<256x128xbf16>, vector<128x128xbf16>, vector<256x128xf32> -> vector<256x128xf32>
      %c0_16 = arith.constant 0 : index
      %c0_17 = arith.constant 0 : index
      %17 = vector.load %arg6[%c0_16, %c0_17] : memref<128x128xbf16, #tpu.memory_space<vmem>>, vector<128x128xbf16>
      %cst_18 = arith.constant dense<0.000000e+00> : vector<256x128xf32>
      %18 = tpu.matmul %12, %17, %cst_18 {dimension_numbers = #tpu.dot_dimension_numbers<[1], [0], [0], [1], [0, 0, 1, 1], [], []>} : vector<256x128xbf16>, vector<128x128xbf16>, vector<256x128xf32> -> vector<256x128xf32>
      %19 = arith.addf %16, %18 : vector<256x128xf32>
      %c0_19 = arith.constant 0 : index
      %c0_20 = arith.constant 0 : index
      %20 = vector.load %arg7[%c0_19, %c0_20] : memref<1x128xf32, #tpu.memory_space<vmem>>, vector<1x128xf32>
      %21 = vector.broadcast %20 : vector<1x128xf32> to vector<256x128xf32>
      %22 = arith.addf %19, %21 : vector<256x128xf32>
      %23 = arith.extf %12 : vector<256x128xbf16> to vector<256x128xf32>
      %24 = arith.addf %23, %22 : vector<256x128xf32>
      %cst_21 = arith.constant 0.000000e+00 : f32
      %25 = vector.broadcast %cst_21 : f32 to vector<256x128xf32>
      %26 = arith.maximumf %24, %25 : vector<256x128xf32>
      %27 = arith.truncf %26 : vector<256x128xf32> to vector<256x128xbf16>
      %c0_22 = arith.constant 0 : index
      %c0_23 = arith.constant 0 : index
      %28 = vector.load %arg8[%c0_22, %c0_23] : memref<128x128xbf16, #tpu.memory_space<vmem>>, vector<128x128xbf16>
      %cst_24 = arith.constant dense<0.000000e+00> : vector<256x128xf32>
      %29 = tpu.matmul %27, %28, %cst_24 {dimension_numbers = #tpu.dot_dimension_numbers<[1], [0], [0], [1], [0, 0, 1, 1], [], []>} : vector<256x128xbf16>, vector<128x128xbf16>, vector<256x128xf32> -> vector<256x128xf32>
      %c0_25 = arith.constant 0 : index
      %c0_26 = arith.constant 0 : index
      %30 = vector.load %arg9[%c0_25, %c0_26] : memref<1x128xf32, #tpu.memory_space<vmem>>, vector<1x128xf32>
      %31 = vector.broadcast %30 : vector<1x128xf32> to vector<256x128xf32>
      %32 = arith.addf %29, %31 : vector<256x128xf32>
      %cst_27 = arith.constant 0.000000e+00 : f32
      %33 = vector.broadcast %cst_27 : f32 to vector<256x128xf32>
      %34 = arith.subf %33, %32 : vector<256x128xf32>
      %35 = math.exp %34 : vector<256x128xf32>
      %cst_28 = arith.constant 1.000000e+00 : f32
      %36 = vector.broadcast %cst_28 : f32 to vector<256x128xf32>
      %37 = arith.addf %36, %35 : vector<256x128xf32>
      %38 = tpu.reciprocal %37 {approx = true} : vector<256x128xf32> -> vector<256x128xf32>
      %c0_29 = arith.constant 0 : index
      %c0_30 = arith.constant 0 : index
      %39 = vector.load %arg10[%c0_29, %c0_30] : memref<256x128xf32, #tpu.memory_space<vmem>>, vector<256x128xf32>
      tpu.vector_store %arg10[%c0_29, %c0_30], %38 {strides = array<i32>} : memref<256x128xf32, #tpu.memory_space<vmem>>, vector<256x128xf32>,
    } else {
    }
    return
  }
  func.func @transform_0(%arg0: i32, %arg1: i32) -> (i32, i32) {
    %c0_i32 = arith.constant 0 : i32
    return %arg0, %arg1 : i32, i32
  }
  func.func @transform_1(%arg0: i32, %arg1: i32) -> (i32, i32) {
    %c0_i32 = arith.constant 0 : i32
    %c0_i32_0 = arith.constant 0 : i32
    return %arg1, %c0_i32 : i32, i32
  }
  func.func @transform_2(%arg0: i32, %arg1: i32) -> (i32, i32) {
    %c0_i32 = arith.constant 0 : i32
    %c0_i32_0 = arith.constant 0 : i32
    return %arg0, %c0_i32 : i32, i32
  }
  func.func @transform_3(%arg0: i32, %arg1: i32) -> (i32, i32) {
    %c0_i32 = arith.constant 0 : i32
    %c0_i32_0 = arith.constant 0 : i32
    %c0_i32_1 = arith.constant 0 : i32
    return %c0_i32, %c0_i32_0 : i32, i32
  }
  func.func @transform_4(%arg0: i32, %arg1: i32) -> (i32, i32) {
    %c0_i32 = arith.constant 0 : i32
    %c0_i32_0 = arith.constant 0 : i32
    %c0_i32_1 = arith.constant 0 : i32
    return %c0_i32, %c0_i32_0 : i32, i32
  }
  func.func @transform_5(%arg0: i32, %arg1: i32) -> (i32, i32) {
    %c0_i32 = arith.constant 0 : i32
    %c0_i32_0 = arith.constant 0 : i32
    %c0_i32_1 = arith.constant 0 : i32
    return %c0_i32, %c0_i32_0 : i32, i32
  }
  func.func @transform_6(%arg0: i32, %arg1: i32) -> (i32, i32) {
    %c0_i32 = arith.constant 0 : i32
    %c0_i32_0 = arith.constant 0 : i32
    %c0_i32_1 = arith.constant 0 : i32
    return %c0_i32, %c0_i32_0 : i32, i32
  }
  func.func @transform_7(%arg0: i32, %arg1: i32) -> (i32, i32) {
    %c0_i32 = arith.constant 0 : i32
    %c0_i32_0 = arith.constant 0 : i32
    %c0_i32_1 = arith.constant 0 : i32
    return %c0_i32, %c0_i32_0 : i32, i32
  }
  func.func @transform_8(%arg0: i32, %arg1: i32) -> (i32, i32) {
    %c0_i32 = arith.constant 0 : i32
    %c0_i32_0 = arith.constant 0 : i32
    return %arg0, %c0_i32 : i32, i32
  }
}

</mosaic_0001>

<llo_original>
// kernel: node_level_gnn_forward.3
$region0: #{node_level_gnn_forward.3}
  #allocation0 [shape = 'u32[]', space=smem, size = 0x4, offset = 0x4, fixed_abs, tag = 'smem constant byte address 0x4 - core index']
  #allocation1 [shape = 'u32[144,128]{1,0:T(1,128)}', space=vmem, size = 0x12000, scoped, tag = 'internal scratch']
  %s0 = inlined_call_operand.vmem [shape: bf16[512,16], index: 0, kind: input, shape index: {}]
  %s1 = inlined_call_operand.hbm [shape: bf16[16,128], index: 1, kind: input, shape index: {}]
  %s2 = inlined_call_operand.hbm [shape: f32[1,128], index: 2, kind: input, shape index: {}]
  %s3 = inlined_call_operand.vmem [shape: bf16[512,128], index: 3, kind: output, shape index: {}]
  %s4 = sld [smem:[#allocation0]]
  $region53: #{node_level_gnn_forward.3} parent=0
    _
  %s6 = ssub.s32 1, %s4
  %s7 = scalar_select 0, %s6, %s4
  $region1: #{node_level_gnn_forward.3} parent=0
    #allocation2 [shape = 'u8[4096]{0}', space=vmem, size = 0x1000, scoped, tag = 'input window, operand 1, single buffered']
    #allocation3 [shape = 's32[2]{0}', space=sflag, size = 0x8, scoped, tag = 'scoped memory for node_level_gnn_forward.3']
    #allocation4 [shape = 'u8[512]{0}', space=vmem, size = 0x400, scoped, tag = 'input window, operand 2, single buffered']
    #allocation5 [shape = 's32[1]{0}', space=sflag, size = 0x4, scoped, tag = 'scoped memory for node_level_gnn_forward.3']
    %8 = vsyncpa [#allocation3], 0
    %9 = vsyncpa [#allocation5], 0
    loop: start=0, step=1, limit=4
    $region2: #{node_level_gnn_forward.3} parent=1 // loop_pre_header
      _
    $region3: #{node_level_gnn_forward.3} parent=1 // loop_header
      %s11 = sphi 0, %s15
      %p12 = scmp.ge.s32.totalorder %s11, 4
      %s21 = sphi 0, %s23
      %s24 = sphi 0, %s21
      %s25 = sphi 0, %s24
      %s41 = sphi 0, %s25
      %s45 = sphi 0, %s45
      %s47 = sphi 0, %s45
      %s48 = sphi 0, %s47
      %s62 = sphi 0, %s48
      %s66 = sphi 0, %s66
      %s68 = sphi 0, %s66
      %s69 = sphi 0, %s68
      %s83 = sphi 0, %s69
      %s89 = sphi 0, %s91
      %s92 = sphi 0, %s89
      %s93 = sphi 0, %s92
      %s109 = sphi 0, %s93
    $region4: #{node_level_gnn_forward.3} parent=1 // loop_header_branch
      %14 = sbr.rel (%p12) target = $region8
    $region5: #{node_level_gnn_forward.3} parent=1 // loop_body
      %s16 = ssub.s32 %s11, 1
      %s17 = ssub.s32 %s11, 2
      %s18 = sadd.s32 %s11, 1
      %s19 = ssub.s32 %s11, %s18
      %p20 = scmp.eq.s32.totalorder %s19, 0
      %s22 = sadd.s32 %s21, 1
      %s23 = scalar_select %p20, %s21, %s22
      %p26 = pneg %p20
      %p27 = scmp.eq.s32.totalorder %s11, 1
      %p28 = por %p26, %p27
      %p29 = scmp.ne.s32.totalorder %s21, %s24
      %p30 = scmp.eq.s32.totalorder %s11, 0
      %p31 = por %p29, %p30
      %p32 = scmp.ne.s32.totalorder %s21, %s24
      %p33 = scmp.eq.s32.totalorder %s16, 1
      %p34 = por %p32, %p33
      %p35 = scmp.ne.s32.totalorder %s24, %s25
      %p36 = scmp.eq.s32.totalorder %s16, 0
      %p37 = por %p35, %p36
      %p38 = scmp.ne.s32.totalorder %s24, %s25
      %p39 = scmp.eq.s32.totalorder %s17, 1
      %p40 = por %p38, %p39
      %p42 = scmp.ne.s32.totalorder %s25, %s41
      %p43 = scmp.eq.s32.totalorder %s17, 0
      %p44 = por %p42, %p43
      %s46 = sadd.s32 %s45, 1
      %p49 = scmp.eq.s32.totalorder %s11, 1
      %p50 = scmp.ne.s32.totalorder %s45, %s47
      %p51 = scmp.eq.s32.totalorder %s11, 0
      %p52 = por %p50, %p51
      %p53 = scmp.ne.s32.totalorder %s45, %s47
      %p54 = scmp.eq.s32.totalorder %s16, 1
      %p55 = por %p53, %p54
      %p56 = scmp.ne.s32.totalorder %s47, %s48
      %p57 = scmp.eq.s32.totalorder %s16, 0
      %p58 = por %p56, %p57
      %p59 = scmp.ne.s32.totalorder %s47, %s48
      %p60 = scmp.eq.s32.totalorder %s17, 1
      %p61 = por %p59, %p60
      %p63 = scmp.ne.s32.totalorder %s48, %s62
      %p64 = scmp.eq.s32.totalorder %s17, 0
      %p65 = por %p63, %p64
      %s67 = sadd.s32 %s66, 1
      %p70 = scmp.eq.s32.totalorder %s11, 1
      %p71 = scmp.ne.s32.totalorder %s66, %s68
      %p72 = scmp.eq.s32.totalorder %s11, 0
      %p73 = por %p71, %p72
      %p74 = scmp.ne.s32.totalorder %s66, %s68
      %p75 = scmp.eq.s32.totalorder %s16, 1
      %p76 = por %p74, %p75
      %p77 = scmp.ne.s32.totalorder %s68, %s69
      %p78 = scmp.eq.s32.totalorder %s16, 0
      %p79 = por %p77, %p78
      %p80 = scmp.ne.s32.totalorder %s68, %s69
      %p81 = scmp.eq.s32.totalorder %s17, 1
      %p82 = por %p80, %p81
      %p84 = scmp.ne.s32.totalorder %s69, %s83
      %p85 = scmp.eq.s32.totalorder %s17, 0
      %p86 = por %p84, %p85
      %s87 = ssub.s32 %s11, %s18
      %p88 = scmp.eq.s32.totalorder %s87, 0
      %s90 = sadd.s32 %s89, 1
      %s91 = scalar_select %p88, %s89, %s90
      %p94 = pneg %p88
      %p95 = scmp.eq.s32.totalorder %s11, 1
      %p96 = por %p94, %p95
      %p97 = scmp.ne.s32.totalorder %s89, %s92
      %p98 = scmp.eq.s32.totalorder %s11, 0
      %p99 = por %p97, %p98
      %p100 = scmp.ne.s32.totalorder %s89, %s92
      %p101 = scmp.eq.s32.totalorder %s16, 1
      %p102 = por %p100, %p101
      %p103 = scmp.ne.s32.totalorder %s92, %s93
      %p104 = scmp.eq.s32.totalorder %s16, 0
      %p105 = por %p103, %p104
      %p106 = scmp.ne.s32.totalorder %s92, %s93
      %p107 = scmp.eq.s32.totalorder %s17, 1
      %p108 = por %p106, %p107
      %p110 = scmp.ne.s32.totalorder %s93, %s109
      %p111 = scmp.eq.s32.totalorder %s17, 0
      %p112 = por %p110, %p111
      %p113 = scmp.le.s32.totalorder 1, %s11
      %p114 = scmp.lt.s32.totalorder %s11, 3
      %p115 = pnand %p113, %p114
      %p116 = pneg %p115
      // Predicated region
      $region9: #{node_level_gnn_forward.3} parent=5 // pred_check
        _
      $region10: #{node_level_gnn_forward.3} parent=5 // pred_check_branch
        %118 = sbr.rel (%p115) target = $region12
      $region11: #{node_level_gnn_forward.3} parent=5 // pred_region
        %s119 = ssub.s32 %s11, 1
        // Predicated region
        $region13: #{node_level_gnn_forward.3} parent=11 // pred_check
          %p120 = pneg %p58
        $region14: #{node_level_gnn_forward.3} parent=11 // pred_check_branch
          %122 = sbr.rel (%p120) target = $region16
        $region15: #{node_level_gnn_forward.3} parent=11 // pred_region
          %s124 = ssub.s32 128, 128
          %125 = vsyncadd [#allocation3], %s124
          %s126 = sshll.u32 [#allocation2], 4
          %s127 = int_to_ptr.vmem [resolvable:$true] %s126
          %132 = dma.hbm_to_vmem [thread:$0]  %s1, 128, %s127, [#allocation3], 64, 64, 4
        $region16: #{node_level_gnn_forward.3} parent=11 // pred_fallthru
          _
        // Predicated region
        $region17: #{node_level_gnn_forward.3} parent=11 // pred_check
          %p133 = pneg %p79
        $region18: #{node_level_gnn_forward.3} parent=11 // pred_check_branch
          %135 = sbr.rel (%p133) target = $region20
        $region19: #{node_level_gnn_forward.3} parent=11 // pred_region
          %s137 = ssub.s32 16, 16
          %138 = vsyncadd [#allocation5], %s137
          %s140 = sshll.u32 [#allocation4], 4
          %s141 = int_to_ptr.vmem [resolvable:$true] %s140
          %143 = dma.hbm_to_vmem [thread:$0]  %s2, 16, %s141, [#allocation5]
        $region20: #{node_level_gnn_forward.3} parent=11 // pred_fallthru
          _
      $region12: #{node_level_gnn_forward.3} parent=5 // pred_fallthru
        _
      %p144 = scmp.lt.s32.totalorder %s11, 2
      // Predicated region
      $region21: #{node_level_gnn_forward.3} parent=5 // pred_check
        %p145 = pneg %p144
      $region22: #{node_level_gnn_forward.3} parent=5 // pred_check_branch
        %147 = sbr.rel (%p145) target = $region24
      $region23: #{node_level_gnn_forward.3} parent=5 // pred_region
        // Predicated region
        $region25: #{node_level_gnn_forward.3} parent=23 // pred_check
          %p148 = pneg %p31
        $region26: #{node_level_gnn_forward.3} parent=23 // pred_check_branch
          %150 = sbr.rel (%p148) target = $region28
        $region27: #{node_level_gnn_forward.3} parent=23 // pred_region
          %s151 = smul.u32 32, %s11
          %p152 = scmp.lt.s32.totalorder %s151, 63
          %s153 = scalar_select %p152, %s151, 63
          %s154 = smul.addr %s153, 4
          %s155 = scalar_lea.vmem %s0, %s154
          %s156 = smul.u32 32, %s11
        $region28: #{node_level_gnn_forward.3} parent=23 // pred_fallthru
          _
      $region24: #{node_level_gnn_forward.3} parent=5 // pred_fallthru
        _
      %p157 = scmp.le.s32.totalorder 1, %s11
      %p158 = scmp.lt.s32.totalorder %s11, 3
      %p159 = pnand %p157, %p158
      %p160 = pneg %p159
      // Predicated region
      $region29: #{node_level_gnn_forward.3} parent=5 // pred_check
        _
      $region30: #{node_level_gnn_forward.3} parent=5 // pred_check_branch
        %162 = sbr.rel (%p159) target = $region32
      $region31: #{node_level_gnn_forward.3} parent=5 // pred_region
        %s163 = ssub.s32 %s11, 1
        // Predicated region
        $region33: #{node_level_gnn_forward.3} parent=31 // pred_check
          %p164 = pneg %p58
        $region34: #{node_level_gnn_forward.3} parent=31 // pred_check_branch
          %166 = sbr.rel (%p164) target = $region36
        $region35: #{node_level_gnn_forward.3} parent=31 // pred_region
          %167 = dma.done [#allocation3], 128
        $region36: #{node_level_gnn_forward.3} parent=31 // pred_fallthru
          _
        // Predicated region
        $region37: #{node_level_gnn_forward.3} parent=31 // pred_check
          %p168 = pneg %p79
        $region38: #{node_level_gnn_forward.3} parent=31 // pred_check_branch
          %170 = sbr.rel (%p168) target = $region40
        $region39: #{node_level_gnn_forward.3} parent=31 // pred_region
          %171 = dma.done [#allocation5], 16
        $region40: #{node_level_gnn_forward.3} parent=31 // pred_fallthru
          _
        %s172 = smul.u32 32, %s16
        %p173 = scmp.lt.s32.totalorder %s172, 63
        %s174 = scalar_select %p173, %s172, 63
        %s175 = smul.addr %s174, 4
        %s176 = scalar_lea.vmem %s0, %s175
        %p177 = pneg %p37
        %p178 = pneg %p34
        %p179 = pneg %p58
        %p180 = pneg %p55
        %p181 = pneg %p79
        %p182 = pneg %p76
        %p183 = pneg %p105
        %p184 = pneg %p102
        %s185 = smul.u32 32, %s16
        %p186 = scmp.lt.s32.totalorder %s185, 63
        %s187 = scalar_select %p186, %s185, 63
        %s188 = smul.addr %s187, 4
        %s189 = scalar_lea.vmem %s3, %s188
        %s190 = smul.u32 32, %s16
        %p191 = scmp.lt.s32.totalorder %s190, 63
        %s192 = scalar_select %p191, %s190, 63
        %s193 = smul.addr %s192, 4
        %s194 = scalar_lea.vmem %s0, %s193
        %s195 = smul.u32 32, %s16
        %s196 = smul.u32 32, %s16
        %p197 = scmp.lt.s32.totalorder %s196, 63
        %s198 = scalar_select %p197, %s196, 63
        %s199 = smul.addr %s198, 4
        %s200 = scalar_lea.vmem %s3, %s199
        %s201 = smul.u32 32, %s16
        %v203 = vld [vmem:[%s194] sm:$0xf]
        %v204 = vld [vmem:[%s194 + $0x4] sm:$0xf]
        %v205 = vld [vmem:[%s194 + $0x8] sm:$0xf]
        %v206 = vld [vmem:[%s194 + $0xc] sm:$0xf]
        %v207 = vld [vmem:[%s194 + $0x10] sm:$0xf]
        %v208 = vld [vmem:[%s194 + $0x14] sm:$0xf]
        %v209 = vld [vmem:[%s194 + $0x18] sm:$0xf]
        %v210 = vld [vmem:[%s194 + $0x1c] sm:$0xf]
        %v211 = vld [vmem:[%s194 + $0x20] sm:$0xf]
        %v212 = vld [vmem:[%s194 + $0x24] sm:$0xf]
        %v213 = vld [vmem:[%s194 + $0x28] sm:$0xf]
        %v214 = vld [vmem:[%s194 + $0x2c] sm:$0xf]
        %v215 = vld [vmem:[%s194 + $0x30] sm:$0xf]
        %v216 = vld [vmem:[%s194 + $0x34] sm:$0xf]
        %v217 = vld [vmem:[%s194 + $0x38] sm:$0xf]
        %v218 = vld [vmem:[%s194 + $0x3c] sm:$0xf]
        %v219 = vld [vmem:[%s194 + $0x40] sm:$0xf]
        %v220 = vld [vmem:[%s194 + $0x44] sm:$0xf]
        %v221 = vld [vmem:[%s194 + $0x48] sm:$0xf]
        %v222 = vld [vmem:[%s194 + $0x4c] sm:$0xf]
        %v223 = vld [vmem:[%s194 + $0x50] sm:$0xf]
        %v224 = vld [vmem:[%s194 + $0x54] sm:$0xf]
        %v225 = vld [vmem:[%s194 + $0x58] sm:$0xf]
        %v226 = vld [vmem:[%s194 + $0x5c] sm:$0xf]
        %v227 = vld [vmem:[%s194 + $0x60] sm:$0xf]
        %v228 = vld [vmem:[%s194 + $0x64] sm:$0xf]
        %v229 = vld [vmem:[%s194 + $0x68] sm:$0xf]
        %v230 = vld [vmem:[%s194 + $0x6c] sm:$0xf]
        %v231 = vld [vmem:[%s194 + $0x70] sm:$0xf]
        %v232 = vld [vmem:[%s194 + $0x74] sm:$0xf]
        %v233 = vld [vmem:[%s194 + $0x78] sm:$0xf]
        %v234 = vld [vmem:[%s194 + $0x7c] sm:$0xf]
        %v235 = vld [vmem:[#allocation2] sm:$0xf]
        %v236 = vld [vmem:[#allocation2 + $0x4] sm:$0xf]
        %v237 = vld [vmem:[#allocation4] sm:$0x1]
        %v239 = vlaneseq
        %v240 = vshrl.u32 %v239, 7
        %v241 = vsub.s32 0, %v240
        %v242 = vrot.slane %v237, %v241
        %v276 = vunpack.c.l.b16 %v203
        %v277 = vunpack.c.l.b16 %v204
        %v278 = vunpack.c.l.b16 %v205
        %v279 = vunpack.c.l.b16 %v206
        %v280 = vunpack.c.l.b16 %v207
        %v281 = vunpack.c.l.b16 %v208
        %v282 = vunpack.c.l.b16 %v209
        %v283 = vunpack.c.l.b16 %v210
        %v284 = vunpack.c.l.b16 %v211
        %v285 = vunpack.c.l.b16 %v212
        %v286 = vunpack.c.l.b16 %v213
        %v287 = vunpack.c.l.b16 %v214
        %v288 = vunpack.c.l.b16 %v215
        %v289 = vunpack.c.l.b16 %v216
        %v290 = vunpack.c.l.b16 %v217
        %v291 = vunpack.c.l.b16 %v218
        %v292 = vunpack.c.l.b16 %v219
        %v293 = vunpack.c.l.b16 %v220
        %v294 = vunpack.c.l.b16 %v221
        %v295 = vunpack.c.l.b16 %v222
        %v296 = vunpack.c.l.b16 %v223
        %v297 = vunpack.c.l.b16 %v224
        %v298 = vunpack.c.l.b16 %v225
        %v299 = vunpack.c.l.b16 %v226
        %v300 = vunpack.c.l.b16 %v227
        %v301 = vunpack.c.l.b16 %v228
        %v302 = vunpack.c.l.b16 %v229
        %v303 = vunpack.c.l.b16 %v230
        %v304 = vunpack.c.l.b16 %v231
        %v305 = vunpack.c.l.b16 %v232
        %v306 = vunpack.c.l.b16 %v233
        %v307 = vunpack.c.l.b16 %v234
        %v308 = vpack.c.b16 %v277, %v276
        %v309 = vpack.c.b16 %v279, %v278
        %v310 = vpack.c.b16 %v281, %v280
        %v311 = vpack.c.b16 %v283, %v282
        %v312 = vpack.c.b16 %v285, %v284
        %v313 = vpack.c.b16 %v287, %v286
        %v314 = vpack.c.b16 %v289, %v288
        %v315 = vpack.c.b16 %v291, %v290
        %v316 = vpack.c.b16 %v293, %v292
        %v317 = vpack.c.b16 %v295, %v294
        %v318 = vpack.c.b16 %v297, %v296
        %v319 = vpack.c.b16 %v299, %v298
        %v320 = vpack.c.b16 %v301, %v300
        %v321 = vpack.c.b16 %v303, %v302
        %v322 = vpack.c.b16 %v305, %v304
        %v323 = vpack.c.b16 %v307, %v306
        %v326 = vunpack.c.l.b16 %v235
        %v327 = vunpack.c.l.b16 %v236
        %v328 = vpack.c.b16 %v327, %v326
        %vm330 = vcmask 130048
        %v332 = vsel %vm330, %v308, 0
        %v335 = vsel %vm330, %v309, 0
        %v338 = vsel %vm330, %v310, 0
        %v341 = vsel %vm330, %v311, 0
        %v344 = vsel %vm330, %v312, 0
        %v347 = vsel %vm330, %v313, 0
        %v350 = vsel %vm330, %v314, 0
        %v353 = vsel %vm330, %v315, 0
        %v356 = vsel %vm330, %v316, 0
        %v359 = vsel %vm330, %v317, 0
        %v362 = vsel %vm330, %v318, 0
        %v365 = vsel %vm330, %v319, 0
        %v368 = vsel %vm330, %v320, 0
        %v371 = vsel %vm330, %v321, 0
        %v374 = vsel %vm330, %v322, 0
        %v377 = vsel %vm330, %v323, 0
        %379 = vmatprep.subr.bf16.mxu0 0
        %380 = vmatpush1.bf16.msra.mxu0 0
        %381 = vmatprep.subr.bf16.mxu0 0
        %382 = vmatpush1.bf16.msra.mxu0 0
        %383 = vmatprep.subr.bf16.mxu0 0
        %384 = vmatpush1.bf16.msra.mxu0 0
        %385 = vmatprep.subr.bf16.mxu0 0
        %386 = vmatpush1.bf16.msra.mxu0 0
        %387 = vmatprep.subr.bf16.mxu0 0
        %388 = vmatpush1.bf16.msra.mxu0 0
        %389 = vmatprep.subr.bf16.mxu0 0
        %390 = vmatpush1.bf16.msra.mxu0 0
        %391 = vmatprep.subr.bf16.mxu0 0
        %392 = vmatpush1.bf16.msra.mxu0 0
        %393 = vmatprep.subr.bf16.mxu0 0
        %394 = vmatpush1.bf16.msra.mxu0 %v328
        %395 = vmatprep.subr.bf16.mxu0 0
        %396 = vmatpush2.bf16.msra.mxu0 0
        %397 = vmatprep.subr.bf16.mxu0 0
        %398 = vmatpush2.bf16.msra.mxu0 0
        %399 = vmatprep.subr.bf16.mxu0 0
        %400 = vmatpush2.bf16.msra.mxu0 0
        %401 = vmatprep.subr.bf16.mxu0 0
        %402 = vmatpush2.bf16.msra.mxu0 0
        %403 = vmatprep.subr.bf16.mxu0 0
        %404 = vmatpush2.bf16.msra.mxu0 0
        %405 = vmatprep.subr.bf16.mxu0 0
        %406 = vmatpush2.bf16.msra.mxu0 0
        %407 = vmatprep.subr.bf16.mxu0 0
        %408 = vmatpush2.bf16.msra.mxu0 0
        %409 = vmatprep.subr.bf16.mxu0 0
        %410 = vmatpush2.bf16.msra.mxu0 0
        %411 = vmatprep.mubr.bf16.mxu0 0
        %412 = vmatmul.mubr.bf16.gmra.mxu0 %v332
        %v413 = vpop.f32.mrf.mxu0
        %v414 = vadd.f32 %v242, %v413
        %v415 = vpop.f32.mrf.mxu0
        %v416 = vpop.f32.mrf.mxu0
        %v417 = vadd.f32 %v242, %v416
        %v418 = vpop.f32.mrf.mxu0
        %419 = vmatprep.mubr.bf16.mxu0 0
        %420 = vmatmul.mubr.bf16.gmra.mxu0 %v335
        %v421 = vpop.f32.mrf.mxu0
        %v422 = vadd.f32 %v242, %v421
        %v423 = vpop.f32.mrf.mxu0
        %v424 = vpop.f32.mrf.mxu0
        %v425 = vadd.f32 %v242, %v424
        %v426 = vpop.f32.mrf.mxu0
        %427 = vmatprep.mubr.bf16.mxu0 0
        %428 = vmatmul.mubr.bf16.gmra.mxu0 %v338
        %v429 = vpop.f32.mrf.mxu0
        %v430 = vadd.f32 %v242, %v429
        %v431 = vpop.f32.mrf.mxu0
        %v432 = vpop.f32.mrf.mxu0
        %v433 = vadd.f32 %v242, %v432
        %v434 = vpop.f32.mrf.mxu0
        %435 = vmatprep.mubr.bf16.mxu0 0
        %436 = vmatmul.mubr.bf16.gmra.mxu0 %v341
        %v437 = vpop.f32.mrf.mxu0
        %v438 = vadd.f32 %v242, %v437
        %v439 = vpop.f32.mrf.mxu0
        %v440 = vpop.f32.mrf.mxu0
        %v441 = vadd.f32 %v242, %v440
        %v442 = vpop.f32.mrf.mxu0
        %443 = vmatprep.mubr.bf16.mxu0 0
        %444 = vmatmul.mubr.bf16.gmra.mxu0 %v344
        %v445 = vpop.f32.mrf.mxu0
        %v446 = vadd.f32 %v242, %v445
        %v447 = vpop.f32.mrf.mxu0
        %v448 = vpop.f32.mrf.mxu0
        %v449 = vadd.f32 %v242, %v448
        %v450 = vpop.f32.mrf.mxu0
        %451 = vmatprep.mubr.bf16.mxu0 0
        %452 = vmatmul.mubr.bf16.gmra.mxu0 %v347
        %v453 = vpop.f32.mrf.mxu0
        %v454 = vadd.f32 %v242, %v453
        %v455 = vpop.f32.mrf.mxu0
        %v456 = vpop.f32.mrf.mxu0
        %v457 = vadd.f32 %v242, %v456
        %v458 = vpop.f32.mrf.mxu0
        %459 = vmatprep.mubr.bf16.mxu0 0
        %460 = vmatmul.mubr.bf16.gmra.mxu0 %v350
        %v461 = vpop.f32.mrf.mxu0
        %v462 = vadd.f32 %v242, %v461
        %v463 = vpop.f32.mrf.mxu0
        %v464 = vpop.f32.mrf.mxu0
        %v465 = vadd.f32 %v242, %v464
        %v466 = vpop.f32.mrf.mxu0
        %467 = vmatprep.mubr.bf16.mxu0 0
        %468 = vmatmul.mubr.bf16.gmra.mxu0 %v353
        %v469 = vpop.f32.mrf.mxu0
        %v470 = vadd.f32 %v242, %v469
        %v471 = vpop.f32.mrf.mxu0
        %v472 = vpop.f32.mrf.mxu0
        %v473 = vadd.f32 %v242, %v472
        %v474 = vpop.f32.mrf.mxu0
        %475 = vmatprep.mubr.bf16.mxu0 0
        %476 = vmatmul.mubr.bf16.gmra.mxu0 %v356
        %v477 = vpop.f32.mrf.mxu0
        %v478 = vadd.f32 %v242, %v477
        %v479 = vpop.f32.mrf.mxu0
        %v480 = vpop.f32.mrf.mxu0
        %v481 = vadd.f32 %v242, %v480
        %v482 = vpop.f32.mrf.mxu0
        %483 = vmatprep.mubr.bf16.mxu0 0
        %484 = vmatmul.mubr.bf16.gmra.mxu0 %v359
        %v485 = vpop.f32.mrf.mxu0
        %v486 = vadd.f32 %v242, %v485
        %v487 = vpop.f32.mrf.mxu0
        %v488 = vpop.f32.mrf.mxu0
        %v489 = vadd.f32 %v242, %v488
        %v490 = vpop.f32.mrf.mxu0
        %491 = vmatprep.mubr.bf16.mxu0 0
        %492 = vmatmul.mubr.bf16.gmra.mxu0 %v362
        %v493 = vpop.f32.mrf.mxu0
        %v494 = vadd.f32 %v242, %v493
        %v495 = vpop.f32.mrf.mxu0
        %v496 = vpop.f32.mrf.mxu0
        %v497 = vadd.f32 %v242, %v496
        %v498 = vpop.f32.mrf.mxu0
        %499 = vmatprep.mubr.bf16.mxu0 0
        %500 = vmatmul.mubr.bf16.gmra.mxu0 %v365
        %v501 = vpop.f32.mrf.mxu0
        %v502 = vadd.f32 %v242, %v501
        %v503 = vpop.f32.mrf.mxu0
        %v504 = vpop.f32.mrf.mxu0
        %v505 = vadd.f32 %v242, %v504
        %v506 = vpop.f32.mrf.mxu0
        %507 = vmatprep.mubr.bf16.mxu0 0
        %508 = vmatmul.mubr.bf16.gmra.mxu0 %v368
        %v509 = vpop.f32.mrf.mxu0
        %v510 = vadd.f32 %v242, %v509
        %v511 = vpop.f32.mrf.mxu0
        %v512 = vpop.f32.mrf.mxu0
        %v513 = vadd.f32 %v242, %v512
        %v514 = vpop.f32.mrf.mxu0
        %515 = vmatprep.mubr.bf16.mxu0 0
        %516 = vmatmul.mubr.bf16.gmra.mxu0 %v371
        %v517 = vpop.f32.mrf.mxu0
        %v518 = vadd.f32 %v242, %v517
        %v519 = vpop.f32.mrf.mxu0
        %v520 = vpop.f32.mrf.mxu0
        %v521 = vadd.f32 %v242, %v520
        %v522 = vpop.f32.mrf.mxu0
        %523 = vmatprep.mubr.bf16.mxu0 0
        %524 = vmatmul.mubr.bf16.gmra.mxu0 %v374
        %v525 = vpop.f32.mrf.mxu0
        %v526 = vadd.f32 %v242, %v525
        %v527 = vpop.f32.mrf.mxu0
        %v528 = vpop.f32.mrf.mxu0
        %v529 = vadd.f32 %v242, %v528
        %v530 = vpop.f32.mrf.mxu0
        %531 = vmatprep.mubr.bf16.mxu0 0
        %532 = vmatmul.mubr.bf16.gmra.mxu0 %v377
        %v533 = vpop.f32.mrf.mxu0
        %v534 = vadd.f32 %v242, %v533
        %v535 = vpop.f32.mrf.mxu0
        %v536 = vpop.f32.mrf.mxu0
        %v537 = vadd.f32 %v242, %v536
        %v538 = vpop.f32.mrf.mxu0
        %539 = vdwg.mxu0
        %v540 = vpack.c.bf16 %v417, %v414
        %v541 = vpack.c.bf16 %v425, %v422
        %v542 = vpack.c.bf16 %v433, %v430
        %v543 = vpack.c.bf16 %v441, %v438
        %v544 = vpack.c.bf16 %v449, %v446
        %v545 = vpack.c.bf16 %v457, %v454
        %v546 = vpack.c.bf16 %v465, %v462
        %v547 = vpack.c.bf16 %v473, %v470
        %v548 = vpack.c.bf16 %v481, %v478
        %v549 = vpack.c.bf16 %v489, %v486
        %v550 = vpack.c.bf16 %v497, %v494
        %v551 = vpack.c.bf16 %v505, %v502
        %v552 = vpack.c.bf16 %v513, %v510
        %v553 = vpack.c.bf16 %v521, %v518
        %v554 = vpack.c.bf16 %v529, %v526
        %v555 = vpack.c.bf16 %v537, %v534
        %v572 = vunpack.c.l.b16 %v540
        %v573 = vunpack.c.h.b16 %v540
        %v574 = vunpack.c.l.b16 %v541
        %v575 = vunpack.c.h.b16 %v541
        %v576 = vunpack.c.l.b16 %v542
        %v577 = vunpack.c.h.b16 %v542
        %v578 = vunpack.c.l.b16 %v543
        %v579 = vunpack.c.h.b16 %v543
        %v580 = vunpack.c.l.b16 %v544
        %v581 = vunpack.c.h.b16 %v544
        %v582 = vunpack.c.l.b16 %v545
        %v583 = vunpack.c.h.b16 %v545
        %v584 = vunpack.c.l.b16 %v546
        %v585 = vunpack.c.h.b16 %v546
        %v586 = vunpack.c.l.b16 %v547
        %v587 = vunpack.c.h.b16 %v547
        %v588 = vunpack.c.l.b16 %v548
        %v589 = vunpack.c.h.b16 %v548
        %v590 = vunpack.c.l.b16 %v549
        %v591 = vunpack.c.h.b16 %v549
        %v592 = vunpack.c.l.b16 %v550
        %v593 = vunpack.c.h.b16 %v550
        %v594 = vunpack.c.l.b16 %v551
        %v595 = vunpack.c.h.b16 %v551
        %v596 = vunpack.c.l.b16 %v552
        %v597 = vunpack.c.h.b16 %v552
        %v598 = vunpack.c.l.b16 %v553
        %v599 = vunpack.c.h.b16 %v553
        %v600 = vunpack.c.l.b16 %v554
        %v601 = vunpack.c.h.b16 %v554
        %v602 = vunpack.c.l.b16 %v555
        %v603 = vunpack.c.h.b16 %v555
        %v604 = vpack.c.b16 %v572, %v572
        %v605 = vpack.c.b16 %v573, %v573
        %v606 = vpack.c.b16 %v574, %v574
        %v607 = vpack.c.b16 %v575, %v575
        %v608 = vpack.c.b16 %v576, %v576
        %v609 = vpack.c.b16 %v577, %v577
        %v610 = vpack.c.b16 %v578, %v578
        %v611 = vpack.c.b16 %v579, %v579
        %v612 = vpack.c.b16 %v580, %v580
        %v613 = vpack.c.b16 %v581, %v581
        %v614 = vpack.c.b16 %v582, %v582
        %v615 = vpack.c.b16 %v583, %v583
        %v616 = vpack.c.b16 %v584, %v584
        %v617 = vpack.c.b16 %v585, %v585
        %v618 = vpack.c.b16 %v586, %v586
        %v619 = vpack.c.b16 %v587, %v587
        %v620 = vpack.c.b16 %v588, %v588
        %v621 = vpack.c.b16 %v589, %v589
        %v622 = vpack.c.b16 %v590, %v590
        %v623 = vpack.c.b16 %v591, %v591
        %v624 = vpack.c.b16 %v592, %v592
        %v625 = vpack.c.b16 %v593, %v593
        %v626 = vpack.c.b16 %v594, %v594
        %v627 = vpack.c.b16 %v595, %v595
        %v628 = vpack.c.b16 %v596, %v596
        %v629 = vpack.c.b16 %v597, %v597
        %v630 = vpack.c.b16 %v598, %v598
        %v631 = vpack.c.b16 %v599, %v599
        %v632 = vpack.c.b16 %v600, %v600
        %v633 = vpack.c.b16 %v601, %v601
        %v634 = vpack.c.b16 %v602, %v602
        %v635 = vpack.c.b16 %v603, %v603
        %668 = vst [vmem:[%s200] sm:$0xf] %v604
        %669 = vst [vmem:[%s200 + $0x4] sm:$0xf] %v605
        %670 = vst [vmem:[%s200 + $0x8] sm:$0xf] %v606
        %671 = vst [vmem:[%s200 + $0xc] sm:$0xf] %v607
        %672 = vst [vmem:[%s200 + $0x10] sm:$0xf] %v608
        %673 = vst [vmem:[%s200 + $0x14] sm:$0xf] %v609
        %674 = vst [vmem:[%s200 + $0x18] sm:$0xf] %v610
        %675 = vst [vmem:[%s200 + $0x1c] sm:$0xf] %v611
        %676 = vst [vmem:[%s200 + $0x20] sm:$0xf] %v612
        %677 = vst [vmem:[%s200 + $0x24] sm:$0xf] %v613
        %678 = vst [vmem:[%s200 + $0x28] sm:$0xf] %v614
        %679 = vst [vmem:[%s200 + $0x2c] sm:$0xf] %v615
        %680 = vst [vmem:[%s200 + $0x30] sm:$0xf] %v616
        %681 = vst [vmem:[%s200 + $0x34] sm:$0xf] %v617
        %682 = vst [vmem:[%s200 + $0x38] sm:$0xf] %v618
        %683 = vst [vmem:[%s200 + $0x3c] sm:$0xf] %v619
        %684 = vst [vmem:[%s200 + $0x40] sm:$0xf] %v620
        %685 = vst [vmem:[%s200 + $0x44] sm:$0xf] %v621
        %686 = vst [vmem:[%s200 + $0x48] sm:$0xf] %v622
        %687 = vst [vmem:[%s200 + $0x4c] sm:$0xf] %v623
        %688 = vst [vmem:[%s200 + $0x50] sm:$0xf] %v624
        %689 = vst [vmem:[%s200 + $0x54] sm:$0xf] %v625
        %690 = vst [vmem:[%s200 + $0x58] sm:$0xf] %v626
        %691 = vst [vmem:[%s200 + $0x5c] sm:$0xf] %v627
        %692 = vst [vmem:[%s200 + $0x60] sm:$0xf] %v628
        %693 = vst [vmem:[%s200 + $0x64] sm:$0xf] %v629
        %694 = vst [vmem:[%s200 + $0x68] sm:$0xf] %v630
        %695 = vst [vmem:[%s200 + $0x6c] sm:$0xf] %v631
        %696 = vst [vmem:[%s200 + $0x70] sm:$0xf] %v632
        %697 = vst [vmem:[%s200 + $0x74] sm:$0xf] %v633
        %698 = vst [vmem:[%s200 + $0x78] sm:$0xf] %v634
        %699 = vst [vmem:[%s200 + $0x7c] sm:$0xf] %v635
        %s700 = smul.u32 32, %s16
        %p701 = scmp.lt.s32.totalorder %s700, 63
        %s702 = scalar_select %p701, %s700, 63
        %s703 = smul.addr %s702, 4
        %s704 = scalar_lea.vmem %s3, %s703
        // Predicated region
        $region41: #{node_level_gnn_forward.3} parent=31 // pred_check
          %p705 = pneg %p102
        $region42: #{node_level_gnn_forward.3} parent=31 // pred_check_branch
          %707 = sbr.rel (%p705) target = $region44
        $region43: #{node_level_gnn_forward.3} parent=31 // pred_region
          %s708 = smul.u32 32, %s16
        $region44: #{node_level_gnn_forward.3} parent=31 // pred_fallthru
          _
      $region32: #{node_level_gnn_forward.3} parent=5 // pred_fallthru
        _
      %p709 = scmp.le.s32.totalorder 2, %s11
      // Predicated region
      $region45: #{node_level_gnn_forward.3} parent=5 // pred_check
        %p710 = pneg %p709
      $region46: #{node_level_gnn_forward.3} parent=5 // pred_check_branch
        %712 = sbr.rel (%p710) target = $region48
      $region47: #{node_level_gnn_forward.3} parent=5 // pred_region
        %s713 = ssub.s32 %s11, 2
        // Predicated region
        $region49: #{node_level_gnn_forward.3} parent=47 // pred_check
          %p714 = pneg %p108
        $region50: #{node_level_gnn_forward.3} parent=47 // pred_check_branch
          %716 = sbr.rel (%p714) target = $region52
        $region51: #{node_level_gnn_forward.3} parent=47 // pred_region
          %s717 = smul.u32 32, %s17
          %p718 = scmp.lt.s32.totalorder %s717, 63
          %s719 = scalar_select %p718, %s717, 63
          %s720 = smul.addr %s719, 4
          %s721 = scalar_lea.vmem %s3, %s720
        $region52: #{node_level_gnn_forward.3} parent=47 // pred_fallthru
          _
      $region48: #{node_level_gnn_forward.3} parent=5 // pred_fallthru
        _
    $region6: #{node_level_gnn_forward.3} parent=1 // loop_footer
      %s15 = sadd.s32 1, %s11
    $region7: #{node_level_gnn_forward.3} parent=1 // loop_footer_branch
      %10 = sbr.rel target = $region3
    $region8: #{node_level_gnn_forward.3} parent=1 // loop_exit
      _
    %722 = vsyncpa [#allocation3], 1
    %s723 = scalar_lea.sflag [#allocation3], 1
    %724 = vsyncpa %s723, 1
    %725 = vsyncpa [#allocation5], 1

// kernel: node_level_gnn_forward.4
$region0: #{node_level_gnn_forward.4}
  #allocation0 [shape = 'u32[]', space=smem, size = 0x4, offset = 0x4, fixed_abs, tag = 'smem constant byte address 0x4 - core index']
  #allocation1 [shape = 'u32[144,128]{1,0:T(1,128)}', space=vmem, size = 0x12000, scoped, tag = 'internal scratch']
  #allocation2 [shape = 'f32[256,128]{1,0:T(8,128)}', space=vmem, size = 0x20000, scoped, tag = 'scratch operand']
  %s0 = inlined_call_operand.vmem [shape: bf16[512,512], index: 0, kind: input, shape index: {}]
  %s1 = inlined_call_operand.vmem [shape: bf16[512,128], index: 1, kind: input, shape index: {}, may-alias: {1,2}]
  %s2 = inlined_call_operand.vmem [shape: bf16[512,128], index: 2, kind: input, shape index: {}, may-alias: {1,2}]
  %s3 = inlined_call_operand.vmem [shape: bf16[128,128], index: 3, kind: input, shape index: {}]
  %s4 = inlined_call_operand.vmem [shape: bf16[128,128], index: 4, kind: input, shape index: {}]
  %s5 = inlined_call_operand.vmem [shape: f32[1,128], index: 5, kind: input, shape index: {}]
  %s6 = inlined_call_operand.vmem [shape: bf16[512,128], index: 6, kind: output, shape index: {}]
  %s7 = sld [smem:[#allocation0]]
  $region103: #{node_level_gnn_forward.4} parent=0
    _
  %s9 = ssub.s32 1, %s7
  %s10 = scalar_select 0, %s9, %s7
  $region1: #{node_level_gnn_forward.4} parent=0
    #allocation3 [shape = 'u8[262144]{0}', space=vmem, size = 0x40000, scoped, tag = 'input window, operand 0']
    loop: start=0, step=1, limit=6
    $region2: #{node_level_gnn_forward.4} parent=1 // loop_pre_header
      _
    $region3: #{node_level_gnn_forward.4} parent=1 // loop_header
      %s12 = sphi 0, %s16
      %p13 = scmp.ge.s32.totalorder %s12, 6
      %s19 = sphi 0, %s31
      %s20 = sphi 0, %s27
      %s21 = sphi 0, %s19
      %s22 = sphi 0, %s20
      %s23 = sphi 0, %s21
      %s24 = sphi 0, %s22
      %s36 = sphi 0, %s38
      %s39 = sphi 0, %s36
      %s40 = sphi 0, %s39
      %s56 = sphi 0, %s40
      %s62 = sphi 0, %s64
      %s65 = sphi 0, %s62
      %s66 = sphi 0, %s65
      %s82 = sphi 0, %s66
      %s88 = sphi 0, %s90
      %s91 = sphi 0, %s88
      %s92 = sphi 0, %s91
      %s108 = sphi 0, %s92
      %s112 = sphi 0, %s112
      %s114 = sphi 0, %s112
      %s115 = sphi 0, %s114
      %s129 = sphi 0, %s115
      %s133 = sphi 0, %s133
      %s135 = sphi 0, %s133
      %s136 = sphi 0, %s135
      %s150 = sphi 0, %s136
      %s154 = sphi 0, %s154
      %s156 = sphi 0, %s154
      %s157 = sphi 0, %s156
      %s171 = sphi 0, %s157
      %s177 = sphi 0, %s179
      %s180 = sphi 0, %s177
      %s181 = sphi 0, %s180
      %s197 = sphi 0, %s181
    $region4: #{node_level_gnn_forward.4} parent=1 // loop_header_branch
      %15 = sbr.rel (%p13) target = $region8
    $region5: #{node_level_gnn_forward.4} parent=1 // loop_body
      %s17 = ssub.s32 %s12, 1
      %s18 = ssub.s32 %s12, 2
      %s25 = sadd.s32 1, %s20
      %p26 = scmp.ge.s32.totalorder %s25, 2
      %s27 = scalar_select %p26, 0, %s25
      %s28 = sadd.s32 1, %s19
      %s29 = scalar_select %p26, %s28, %s19
      %p30 = scmp.ge.s32.totalorder %s29, 2
      %s31 = scalar_select %p30, 0, %s29
      %s32 = ssub.s32 %s19, %s31
      %s33 = ssub.s32 %s20, %s27
      %s34 = sor.u32 %s32, %s33
      %p35 = scmp.eq.s32.totalorder %s34, 0
      %s37 = sadd.s32 %s36, 1
      %s38 = scalar_select %p35, %s36, %s37
      %p41 = pneg %p35
      %p42 = scmp.eq.s32.totalorder %s12, 3
      %p43 = por %p41, %p42
      %p44 = scmp.ne.s32.totalorder %s36, %s39
      %p45 = scmp.eq.s32.totalorder %s12, 0
      %p46 = por %p44, %p45
      %p47 = scmp.ne.s32.totalorder %s36, %s39
      %p48 = scmp.eq.s32.totalorder %s17, 3
      %p49 = por %p47, %p48
      %p50 = scmp.ne.s32.totalorder %s39, %s40
      %p51 = scmp.eq.s32.totalorder %s17, 0
      %p52 = por %p50, %p51
      %p53 = scmp.ne.s32.totalorder %s39, %s40
      %p54 = scmp.eq.s32.totalorder %s18, 3
      %p55 = por %p53, %p54
      %p57 = scmp.ne.s32.totalorder %s40, %s56
      %p58 = scmp.eq.s32.totalorder %s18, 0
      %p59 = por %p57, %p58
      %s60 = ssub.s32 %s20, %s27
      %p61 = scmp.eq.s32.totalorder %s60, 0
      %s63 = sadd.s32 %s62, 1
      %s64 = scalar_select %p61, %s62, %s63
      %p67 = pneg %p61
      %p68 = scmp.eq.s32.totalorder %s12, 3
      %p69 = por %p67, %p68
      %p70 = scmp.ne.s32.totalorder %s62, %s65
      %p71 = scmp.eq.s32.totalorder %s12, 0
      %p72 = por %p70, %p71
      %p73 = scmp.ne.s32.totalorder %s62, %s65
      %p74 = scmp.eq.s32.totalorder %s17, 3
      %p75 = por %p73, %p74
      %p76 = scmp.ne.s32.totalorder %s65, %s66
      %p77 = scmp.eq.s32.totalorder %s17, 0
      %p78 = por %p76, %p77
      %p79 = scmp.ne.s32.totalorder %s65, %s66
      %p80 = scmp.eq.s32.totalorder %s18, 3
      %p81 = por %p79, %p80
      %p83 = scmp.ne.s32.totalorder %s66, %s82
      %p84 = scmp.eq.s32.totalorder %s18, 0
      %p85 = por %p83, %p84
      %s86 = ssub.s32 %s19, %s31
      %p87 = scmp.eq.s32.totalorder %s86, 0
      %s89 = sadd.s32 %s88, 1
      %s90 = scalar_select %p87, %s88, %s89
      %p93 = pneg %p87
      %p94 = scmp.eq.s32.totalorder %s12, 3
      %p95 = por %p93, %p94
      %p96 = scmp.ne.s32.totalorder %s88, %s91
      %p97 = scmp.eq.s32.totalorder %s12, 0
      %p98 = por %p96, %p97
      %p99 = scmp.ne.s32.totalorder %s88, %s91
      %p100 = scmp.eq.s32.totalorder %s17, 3
      %p101 = por %p99, %p100
      %p102 = scmp.ne.s32.totalorder %s91, %s92
      %p103 = scmp.eq.s32.totalorder %s17, 0
      %p104 = por %p102, %p103
      %p105 = scmp.ne.s32.totalorder %s91, %s92
      %p106 = scmp.eq.s32.totalorder %s18, 3
      %p107 = por %p105, %p106
      %p109 = scmp.ne.s32.totalorder %s92, %s108
      %p110 = scmp.eq.s32.totalorder %s18, 0
      %p111 = por %p109, %p110
      %s113 = sadd.s32 %s112, 1
      %p116 = scmp.eq.s32.totalorder %s12, 3
      %p117 = scmp.ne.s32.totalorder %s112, %s114
      %p118 = scmp.eq.s32.totalorder %s12, 0
      %p119 = por %p117, %p118
      %p120 = scmp.ne.s32.totalorder %s112, %s114
      %p121 = scmp.eq.s32.totalorder %s17, 3
      %p122 = por %p120, %p121
      %p123 = scmp.ne.s32.totalorder %s114, %s115
      %p124 = scmp.eq.s32.totalorder %s17, 0
      %p125 = por %p123, %p124
      %p126 = scmp.ne.s32.totalorder %s114, %s115
      %p127 = scmp.eq.s32.totalorder %s18, 3
      %p128 = por %p126, %p127
      %p130 = scmp.ne.s32.totalorder %s115, %s129
      %p131 = scmp.eq.s32.totalorder %s18, 0
      %p132 = por %p130, %p131
      %s134 = sadd.s32 %s133, 1
      %p137 = scmp.eq.s32.totalorder %s12, 3
      %p138 = scmp.ne.s32.totalorder %s133, %s135
      %p139 = scmp.eq.s32.totalorder %s12, 0
      %p140 = por %p138, %p139
      %p141 = scmp.ne.s32.totalorder %s133, %s135
      %p142 = scmp.eq.s32.totalorder %s17, 3
      %p143 = por %p141, %p142
      %p144 = scmp.ne.s32.totalorder %s135, %s136
      %p145 = scmp.eq.s32.totalorder %s17, 0
      %p146 = por %p144, %p145
      %p147 = scmp.ne.s32.totalorder %s135, %s136
      %p148 = scmp.eq.s32.totalorder %s18, 3
      %p149 = por %p147, %p148
      %p151 = scmp.ne.s32.totalorder %s136, %s150
      %p152 = scmp.eq.s32.totalorder %s18, 0
      %p153 = por %p151, %p152
      %s155 = sadd.s32 %s154, 1
      %p158 = scmp.eq.s32.totalorder %s12, 3
      %p159 = scmp.ne.s32.totalorder %s154, %s156
      %p160 = scmp.eq.s32.totalorder %s12, 0
      %p161 = por %p159, %p160
      %p162 = scmp.ne.s32.totalorder %s154, %s156
      %p163 = scmp.eq.s32.totalorder %s17, 3
      %p164 = por %p162, %p163
      %p165 = scmp.ne.s32.totalorder %s156, %s157
      %p166 = scmp.eq.s32.totalorder %s17, 0
      %p167 = por %p165, %p166
      %p168 = scmp.ne.s32.totalorder %s156, %s157
      %p169 = scmp.eq.s32.totalorder %s18, 3
      %p170 = por %p168, %p169
      %p172 = scmp.ne.s32.totalorder %s157, %s171
      %p173 = scmp.eq.s32.totalorder %s18, 0
      %p174 = por %p172, %p173
      %s175 = ssub.s32 %s19, %s31
      %p176 = scmp.eq.s32.totalorder %s175, 0
      %s178 = sadd.s32 %s177, 1
      %s179 = scalar_select %p176, %s177, %s178
      %p182 = pneg %p176
      %p183 = scmp.eq.s32.totalorder %s12, 3
      %p184 = por %p182, %p183
      %p185 = scmp.ne.s32.totalorder %s177, %s180
      %p186 = scmp.eq.s32.totalorder %s12, 0
      %p187 = por %p185, %p186
      %p188 = scmp.ne.s32.totalorder %s177, %s180
      %p189 = scmp.eq.s32.totalorder %s17, 3
      %p190 = por %p188, %p189
      %p191 = scmp.ne.s32.totalorder %s180, %s181
      %p192 = scmp.eq.s32.totalorder %s17, 0
      %p193 = por %p191, %p192
      %p194 = scmp.ne.s32.totalorder %s180, %s181
      %p195 = scmp.eq.s32.totalorder %s18, 3
      %p196 = por %p194, %p195
      %p198 = scmp.ne.s32.totalorder %s181, %s197
      %p199 = scmp.eq.s32.totalorder %s18, 0
      %p200 = por %p198, %p199
      %p201 = scmp.le.s32.totalorder 1, %s12
      %p202 = scmp.lt.s32.totalorder %s12, 5
      %p203 = pnand %p201, %p202
      %p204 = pneg %p203
      // Predicated region
      $region9: #{node_level_gnn_forward.4} parent=5 // pred_check
        _
      $region10: #{node_level_gnn_forward.4} parent=5 // pred_check_branch
        %206 = sbr.rel (%p203) target = $region12
      $region11: #{node_level_gnn_forward.4} parent=5 // pred_region
        %s207 = ssub.s32 %s12, 1
        // Predicated region
        $region13: #{node_level_gnn_forward.4} parent=11 // pred_check
          %p208 = pneg %p125
        $region14: #{node_level_gnn_forward.4} parent=11 // pred_check_branch
          %210 = sbr.rel (%p208) target = $region16
        $region15: #{node_level_gnn_forward.4} parent=11 // pred_region
          _
        $region16: #{node_level_gnn_forward.4} parent=11 // pred_fallthru
          _
        // Predicated region
        $region17: #{node_level_gnn_forward.4} parent=11 // pred_check
          %p211 = pneg %p146
        $region18: #{node_level_gnn_forward.4} parent=11 // pred_check_branch
          %213 = sbr.rel (%p211) target = $region20
        $region19: #{node_level_gnn_forward.4} parent=11 // pred_region
          _
        $region20: #{node_level_gnn_forward.4} parent=11 // pred_fallthru
          _
        // Predicated region
        $region21: #{node_level_gnn_forward.4} parent=11 // pred_check
          %p214 = pneg %p167
        $region22: #{node_level_gnn_forward.4} parent=11 // pred_check_branch
          %216 = sbr.rel (%p214) target = $region24
        $region23: #{node_level_gnn_forward.4} parent=11 // pred_region
          _
        $region24: #{node_level_gnn_forward.4} parent=11 // pred_fallthru
          _
      $region12: #{node_level_gnn_forward.4} parent=5 // pred_fallthru
        _
      %p217 = scmp.lt.s32.totalorder %s12, 4
      // Predicated region
      $region25: #{node_level_gnn_forward.4} parent=5 // pred_check
        %p218 = pneg %p217
      $region26: #{node_level_gnn_forward.4} parent=5 // pred_check_branch
        %220 = sbr.rel (%p218) target = $region28
      $region27: #{node_level_gnn_forward.4} parent=5 // pred_region
        // Predicated region
        $region29: #{node_level_gnn_forward.4} parent=27 // pred_check
          %p221 = pneg %p46
        $region30: #{node_level_gnn_forward.4} parent=27 // pred_check_branch
          %223 = sbr.rel (%p221) target = $region32
        $region31: #{node_level_gnn_forward.4} parent=27 // pred_region
          %s224 = sand.u32 %s36, 1
          %s225 = sand.u32 %s36, 1
          %s226 = smul.addr %s225, 256
          %s227 = scalar_lea.vmem [#allocation3], %s226
          %s228 = smul.u32 32, %s19
          %s229 = smul.u32 2, %s20
          %s230 = smul.addr %s228, 4
          %s231 = sadd.s32 %s229, %s230
          %s232 = smul.addr %s231, 4
          %s233 = scalar_lea.vmem %s0, %s232
          // Predicated region
          $region33: #{node_level_gnn_forward.4} parent=31 // pred_check
            _
          $region34: #{node_level_gnn_forward.4} parent=31 // pred_check_branch
            %235 = sbr.rel (0) target = $region36
          $region35: #{node_level_gnn_forward.4} parent=31 // pred_region
            // Predicated region
            $region37: #{node_level_gnn_forward.4} parent=35 // pred_check
              _
            $region38: #{node_level_gnn_forward.4} parent=35 // pred_check_branch
              %237 = sbr.rel (0) target = $region40
            $region39: #{node_level_gnn_forward.4} parent=35 // pred_region
              // Predicated region
              $region52: #{node_level_gnn_forward.4} parent=39 // pred_check
                _
              $region53: #{node_level_gnn_forward.4} parent=39 // pred_check_branch
                %315 = sbr.rel (0) target = $region55
              $region54: #{node_level_gnn_forward.4} parent=39 // pred_region
                loop: start=0, step=1, limit=1
                $region56: #{node_level_gnn_forward.4} parent=54 // loop_pre_header
                  _
                $region57: #{node_level_gnn_forward.4} parent=54 // loop_header
                  %s317 = sphi 0, %s321
                  %p318 = scmp.ge.s32.totalorder %s317, 1
                  %s322 = sphi %s233, %s233
                  %s323 = sphi %s227, %s227
                $region58: #{node_level_gnn_forward.4} parent=54 // loop_header_branch
                  %320 = sbr.rel (%p318) target = $region62
                $region59: #{node_level_gnn_forward.4} parent=54 // loop_body
                  %v324 = vld [vmem:[%s322] sm:$0xff]
                  %325 = vst [vmem:[%s323] sm:$0xff] %v324
                  %v326 = vld [vmem:[%s322 + $0x10] sm:$0xff]
                  %327 = vst [vmem:[%s323 + $0x8] sm:$0xff] %v326
                  %v328 = vld [vmem:[%s322 + $0x20] sm:$0xff]
                  %329 = vst [vmem:[%s323 + $0x10] sm:$0xff] %v328
                  %v330 = vld [vmem:[%s322 + $0x30] sm:$0xff]
                  %331 = vst [vmem:[%s323 + $0x18] sm:$0xff] %v330
                  %v332 = vld [vmem:[%s322 + $0x40] sm:$0xff]
                  %333 = vst [vmem:[%s323 + $0x20] sm:$0xff] %v332
                  %v334 = vld [vmem:[%s322 + $0x50] sm:$0xff]
                  %335 = vst [vmem:[%s323 + $0x28] sm:$0xff] %v334
                  %v336 = vld [vmem:[%s322 + $0x60] sm:$0xff]
                  %337 = vst [vmem:[%s323 + $0x30] sm:$0xff] %v336
                  %v338 = vld [vmem:[%s322 + $0x70] sm:$0xff]
                  %339 = vst [vmem:[%s323 + $0x38] sm:$0xff] %v338
                  %v340 = vld [vmem:[%s322 + $0x80] sm:$0xff]
                  %341 = vst [vmem:[%s323 + $0x40] sm:$0xff] %v340
                  %v342 = vld [vmem:[%s322 + $0x90] sm:$0xff]
                  %343 = vst [vmem:[%s323 + $0x48] sm:$0xff] %v342
                  %v344 = vld [vmem:[%s322 + $0xa0] sm:$0xff]
                  %345 = vst [vmem:[%s323 + $0x50] sm:$0xff] %v344
                  %v346 = vld [vmem:[%s322 + $0xb0] sm:$0xff]
                  %347 = vst [vmem:[%s323 + $0x58] sm:$0xff] %v346
                  %v348 = vld [vmem:[%s322 + $0xc0] sm:$0xff]
                  %349 = vst [vmem:[%s323 + $0x60] sm:$0xff] %v348
                  %v350 = vld [vmem:[%s322 + $0xd0] sm:$0xff]
                  %351 = vst [vmem:[%s323 + $0x68] sm:$0xff] %v350
                  %v352 = vld [vmem:[%s322 + $0xe0] sm:$0xff]
                  %353 = vst [vmem:[%s323 + $0x70] sm:$0xff] %v352
                  %v354 = vld [vmem:[%s322 + $0xf0] sm:$0xff]
                  %355 = vst [vmem:[%s323 + $0x78] sm:$0xff] %v354
                  %v356 = vld [vmem:[%s322 + $0x100] sm:$0xff]
                  %357 = vst [vmem:[%s323 + $0x80] sm:$0xff] %v356
                  %v358 = vld [vmem:[%s322 + $0x110] sm:$0xff]
                  %359 = vst [vmem:[%s323 + $0x88] sm:$0xff] %v358
                  %v360 = vld [vmem:[%s322 + $0x120] sm:$0xff]
                  %361 = vst [vmem:[%s323 + $0x90] sm:$0xff] %v360
                  %v362 = vld [vmem:[%s322 + $0x130] sm:$0xff]
                  %363 = vst [vmem:[%s323 + $0x98] sm:$0xff] %v362
                  %v364 = vld [vmem:[%s322 + $0x140] sm:$0xff]
                  %365 = vst [vmem:[%s323 + $0xa0] sm:$0xff] %v364
                  %v366 = vld [vmem:[%s322 + $0x150] sm:$0xff]
                  %367 = vst [vmem:[%s323 + $0xa8] sm:$0xff] %v366
                  %v368 = vld [vmem:[%s322 + $0x160] sm:$0xff]
                  %369 = vst [vmem:[%s323 + $0xb0] sm:$0xff] %v368
                  %v370 = vld [vmem:[%s322 + $0x170] sm:$0xff]
                  %371 = vst [vmem:[%s323 + $0xb8] sm:$0xff] %v370
                  %v372 = vld [vmem:[%s322 + $0x180] sm:$0xff]
                  %373 = vst [vmem:[%s323 + $0xc0] sm:$0xff] %v372
                  %v374 = vld [vmem:[%s322 + $0x190] sm:$0xff]
                  %375 = vst [vmem:[%s323 + $0xc8] sm:$0xff] %v374
                  %v376 = vld [vmem:[%s322 + $0x1a0] sm:$0xff]
                  %377 = vst [vmem:[%s323 + $0xd0] sm:$0xff] %v376
                  %v378 = vld [vmem:[%s322 + $0x1b0] sm:$0xff]
                  %379 = vst [vmem:[%s323 + $0xd8] sm:$0xff] %v378
                  %v380 = vld [vmem:[%s322 + $0x1c0] sm:$0xff]
                  %381 = vst [vmem:[%s323 + $0xe0] sm:$0xff] %v380
                  %v382 = vld [vmem:[%s322 + $0x1d0] sm:$0xff]
                  %383 = vst [vmem:[%s323 + $0xe8] sm:$0xff] %v382
                  %v384 = vld [vmem:[%s322 + $0x1e0] sm:$0xff]
                  %385 = vst [vmem:[%s323 + $0xf0] sm:$0xff] %v384
                  %v386 = vld [vmem:[%s322 + $0x1f0] sm:$0xff]
                  %387 = vst [vmem:[%s323 + $0xf8] sm:$0xff] %v386
                $region60: #{node_level_gnn_forward.4} parent=54 // loop_footer
                  %s321 = sadd.s32 1, %s317
                $region61: #{node_level_gnn_forward.4} parent=54 // loop_footer_branch
                  %316 = sbr.rel target = $region57
                $region62: #{node_level_gnn_forward.4} parent=54 // loop_exit
                  _
              $region55: #{node_level_gnn_forward.4} parent=39 // pred_fallthru
                _
              // Predicated region
              $region63: #{node_level_gnn_forward.4} parent=39 // pred_check
                _
              $region64: #{node_level_gnn_forward.4} parent=39 // pred_check_branch
                %389 = sbr.rel target = $region66
              $region65: #{node_level_gnn_forward.4} parent=39 // pred_region
                _
              $region66: #{node_level_gnn_forward.4} parent=39 // pred_fallthru
                _
            $region40: #{node_level_gnn_forward.4} parent=35 // pred_fallthru
              _
            // Predicated region
            $region41: #{node_level_gnn_forward.4} parent=35 // pred_check
              _
            $region42: #{node_level_gnn_forward.4} parent=35 // pred_check_branch
              %239 = sbr.rel target = $region44
            $region43: #{node_level_gnn_forward.4} parent=35 // pred_region
              %s241 = ssub.s32 256, 1
              loop: start=0, step=1, limit=1
              $region45: #{node_level_gnn_forward.4} parent=43 // loop_pre_header
                _
              $region46: #{node_level_gnn_forward.4} parent=43 // loop_header
                %s243 = sphi 0, %s247
                %p244 = scmp.ge.s32.totalorder %s243, 1
                %s248 = sphi %s233, %s233
                %s249 = sphi %s227, %s227
              $region47: #{node_level_gnn_forward.4} parent=43 // loop_header_branch
                %246 = sbr.rel (%p244) target = $region51
              $region48: #{node_level_gnn_forward.4} parent=43 // loop_body
                %v250 = vld [vmem:[%s248] sm:%s241]
                %251 = vst [vmem:[%s249] sm:%s241] %v250
                %v252 = vld [vmem:[%s248 + $0x10] sm:%s241]
                %253 = vst [vmem:[%s249 + $0x8] sm:%s241] %v252
                %v254 = vld [vmem:[%s248 + $0x20] sm:%s241]
                %255 = vst [vmem:[%s249 + $0x10] sm:%s241] %v254
                %v256 = vld [vmem:[%s248 + $0x30] sm:%s241]
                %257 = vst [vmem:[%s249 + $0x18] sm:%s241] %v256
                %v258 = vld [vmem:[%s248 + $0x40] sm:%s241]
                %259 = vst [vmem:[%s249 + $0x20] sm:%s241] %v258
                %v260 = vld [vmem:[%s248 + $0x50] sm:%s241]
                %261 = vst [vmem:[%s249 + $0x28] sm:%s241] %v260
                %v262 = vld [vmem:[%s248 + $0x60] sm:%s241]
                %263 = vst [vmem:[%s249 + $0x30] sm:%s241] %v262
                %v264 = vld [vmem:[%s248 + $0x70] sm:%s241]
                %265 = vst [vmem:[%s249 + $0x38] sm:%s241] %v264
                %v266 = vld [vmem:[%s248 + $0x80] sm:%s241]
                %267 = vst [vmem:[%s249 + $0x40] sm:%s241] %v266
                %v268 = vld [vmem:[%s248 + $0x90] sm:%s241]
                %269 = vst [vmem:[%s249 + $0x48] sm:%s241] %v268
                %v270 = vld [vmem:[%s248 + $0xa0] sm:%s241]
                %271 = vst [vmem:[%s249 + $0x50] sm:%s241] %v270
                %v272 = vld [vmem:[%s248 + $0xb0] sm:%s241]
                %273 = vst [vmem:[%s249 + $0x58] sm:%s241] %v272
                %v274 = vld [vmem:[%s248 + $0xc0] sm:%s241]
                %275 = vst [vmem:[%s249 + $0x60] sm:%s241] %v274
                %v276 = vld [vmem:[%s248 + $0xd0] sm:%s241]
                %277 = vst [vmem:[%s249 + $0x68] sm:%s241] %v276
                %v278 = vld [vmem:[%s248 + $0xe0] sm:%s241]
                %279 = vst [vmem:[%s249 + $0x70] sm:%s241] %v278
                %v280 = vld [vmem:[%s248 + $0xf0] sm:%s241]
                %281 = vst [vmem:[%s249 + $0x78] sm:%s241] %v280
                %v282 = vld [vmem:[%s248 + $0x100] sm:%s241]
                %283 = vst [vmem:[%s249 + $0x80] sm:%s241] %v282
                %v284 = vld [vmem:[%s248 + $0x110] sm:%s241]
                %285 = vst [vmem:[%s249 + $0x88] sm:%s241] %v284
                %v286 = vld [vmem:[%s248 + $0x120] sm:%s241]
                %287 = vst [vmem:[%s249 + $0x90] sm:%s241] %v286
                %v288 = vld [vmem:[%s248 + $0x130] sm:%s241]
                %289 = vst [vmem:[%s249 + $0x98] sm:%s241] %v288
                %v290 = vld [vmem:[%s248 + $0x140] sm:%s241]
                %291 = vst [vmem:[%s249 + $0xa0] sm:%s241] %v290
                %v292 = vld [vmem:[%s248 + $0x150] sm:%s241]
                %293 = vst [vmem:[%s249 + $0xa8] sm:%s241] %v292
                %v294 = vld [vmem:[%s248 + $0x160] sm:%s241]
                %295 = vst [vmem:[%s249 + $0xb0] sm:%s241] %v294
                %v296 = vld [vmem:[%s248 + $0x170] sm:%s241]
                %297 = vst [vmem:[%s249 + $0xb8] sm:%s241] %v296
                %v298 = vld [vmem:[%s248 + $0x180] sm:%s241]
                %299 = vst [vmem:[%s249 + $0xc0] sm:%s241] %v298
                %v300 = vld [vmem:[%s248 + $0x190] sm:%s241]
                %301 = vst [vmem:[%s249 + $0xc8] sm:%s241] %v300
                %v302 = vld [vmem:[%s248 + $0x1a0] sm:%s241]
                %303 = vst [vmem:[%s249 + $0xd0] sm:%s241] %v302
                %v304 = vld [vmem:[%s248 + $0x1b0] sm:%s241]
                %305 = vst [vmem:[%s249 + $0xd8] sm:%s241] %v304
                %v306 = vld [vmem:[%s248 + $0x1c0] sm:%s241]
                %307 = vst [vmem:[%s249 + $0xe0] sm:%s241] %v306
                %v308 = vld [vmem:[%s248 + $0x1d0] sm:%s241]
                %309 = vst [vmem:[%s249 + $0xe8] sm:%s241] %v308
                %v310 = vld [vmem:[%s248 + $0x1e0] sm:%s241]
                %311 = vst [vmem:[%s249 + $0xf0] sm:%s241] %v310
                %v312 = vld [vmem:[%s248 + $0x1f0] sm:%s241]
                %313 = vst [vmem:[%s249 + $0xf8] sm:%s241] %v312
              $region49: #{node_level_gnn_forward.4} parent=43 // loop_footer
                %s247 = sadd.s32 1, %s243
              $region50: #{node_level_gnn_forward.4} parent=43 // loop_footer_branch
                %242 = sbr.rel target = $region46
              $region51: #{node_level_gnn_forward.4} parent=43 // loop_exit
                _
            $region44: #{node_level_gnn_forward.4} parent=35 // pred_fallthru
              _
          $region36: #{node_level_gnn_forward.4} parent=31 // pred_fallthru
            _
          %390 = vnop
        $region32: #{node_level_gnn_forward.4} parent=27 // pred_fallthru
          _
        // Predicated region
        $region67: #{node_level_gnn_forward.4} parent=27 // pred_check
          %p391 = pneg %p72
        $region68: #{node_level_gnn_forward.4} parent=27 // pred_check_branch
          %393 = sbr.rel (%p391) target = $region70
        $region69: #{node_level_gnn_forward.4} parent=27 // pred_region
          %s394 = smul.u32 32, %s20
          %p395 = scmp.lt.s32.totalorder %s394, 63
          %s396 = scalar_select %p395, %s394, 63
          %s397 = smul.addr %s396, 4
          %s398 = scalar_lea.vmem %s1, %s397
          %s399 = smul.u32 32, %s20
        $region70: #{node_level_gnn_forward.4} parent=27 // pred_fallthru
          _
        // Predicated region
        $region71: #{node_level_gnn_forward.4} parent=27 // pred_check
          %p400 = pneg %p98
        $region72: #{node_level_gnn_forward.4} parent=27 // pred_check_branch
          %402 = sbr.rel (%p400) target = $region74
        $region73: #{node_level_gnn_forward.4} parent=27 // pred_region
          %s403 = smul.u32 32, %s19
          %p404 = scmp.lt.s32.totalorder %s403, 63
          %s405 = scalar_select %p404, %s403, 63
          %s406 = smul.addr %s405, 4
          %s407 = scalar_lea.vmem %s2, %s406
          %s408 = smul.u32 32, %s19
        $region74: #{node_level_gnn_forward.4} parent=27 // pred_fallthru
          _
      $region28: #{node_level_gnn_forward.4} parent=5 // pred_fallthru
        _
      %p409 = scmp.le.s32.totalorder 1, %s12
      %p410 = scmp.lt.s32.totalorder %s12, 5
      %p411 = pnand %p409, %p410
      %p412 = pneg %p411
      // Predicated region
      $region75: #{node_level_gnn_forward.4} parent=5 // pred_check
        _
      $region76: #{node_level_gnn_forward.4} parent=5 // pred_check_branch
        %414 = sbr.rel (%p411) target = $region78
      $region77: #{node_level_gnn_forward.4} parent=5 // pred_region
        %s415 = ssub.s32 %s12, 1
        %s416 = sand.u32 %s39, 1
        %s417 = sand.u32 %s39, 1
        %s418 = smul.addr %s417, 256
        %s419 = scalar_lea.vmem [#allocation3], %s418
        // Predicated region
        $region79: #{node_level_gnn_forward.4} parent=77 // pred_check
          %p420 = pneg %p52
        $region80: #{node_level_gnn_forward.4} parent=77 // pred_check_branch
          %422 = sbr.rel (%p420) target = $region82
        $region81: #{node_level_gnn_forward.4} parent=77 // pred_region
          _
        $region82: #{node_level_gnn_forward.4} parent=77 // pred_fallthru
          _
        %s423 = sand.u32 %s39, 1
        %s424 = sand.u32 %s39, 1
        %s425 = smul.addr %s424, 256
        %s426 = scalar_lea.vmem [#allocation3], %s425
        %p427 = pneg %p52
        %p428 = pneg %p49
        %s429 = smul.u32 32, %s22
        %p430 = scmp.lt.s32.totalorder %s429, 63
        %s431 = scalar_select %p430, %s429, 63
        %s432 = smul.addr %s431, 4
        %s433 = scalar_lea.vmem %s1, %s432
        %p434 = pneg %p78
        %p435 = pneg %p75
        %s436 = smul.u32 32, %s21
        %p437 = scmp.lt.s32.totalorder %s436, 63
        %s438 = scalar_select %p437, %s436, 63
        %s439 = smul.addr %s438, 4
        %s440 = scalar_lea.vmem %s2, %s439
        %p441 = pneg %p104
        %p442 = pneg %p101
        %p443 = pneg %p125
        %p444 = pneg %p122
        %p445 = pneg %p146
        %p446 = pneg %p143
        %p447 = pneg %p167
        %p448 = pneg %p164
        %p449 = pneg %p193
        %p450 = pneg %p190
        %s451 = smul.u32 32, %s21
        %p452 = scmp.lt.s32.totalorder %s451, 63
        %s453 = scalar_select %p452, %s451, 63
        %s454 = smul.addr %s453, 4
        %s455 = scalar_lea.vmem %s6, %s454
        %s456 = smul.u32 32, %s21
        %s457 = smul.u32 2, %s22
        %s458 = smul.u32 32, %s22
        %p459 = scmp.lt.s32.totalorder %s458, 63
        %s460 = scalar_select %p459, %s458, 63
        %s461 = smul.addr %s460, 4
        %s462 = scalar_lea.vmem %s1, %s461
        %s463 = smul.u32 32, %s22
        %s464 = smul.u32 32, %s21
        %p465 = scmp.lt.s32.totalorder %s464, 63
        %s466 = scalar_select %p465, %s464, 63
        %s467 = smul.addr %s466, 4
        %s468 = scalar_lea.vmem %s2, %s467
        %s469 = smul.u32 32, %s21
        %s470 = smul.u32 32, %s21
        %p471 = scmp.lt.s32.totalorder %s470, 63
        %s472 = scalar_select %p471, %s470, 63
        %s473 = smul.addr %s472, 4
        %s474 = scalar_lea.vmem %s6, %s473
        %s475 = smul.u32 32, %s21
        %p477 = scmp.eq.s32.totalorder %s22, 0
        // Predicated region
        $region83: #{node_level_gnn_forward.4} parent=77 // pred_check
          %p478 = pneg %p477
        $region84: #{node_level_gnn_forward.4} parent=77 // pred_check_branch
          %480 = sbr.rel (%p478) target = $region86
        $region85: #{node_level_gnn_forward.4} parent=77 // pred_region
          %481 = vst [vmem:[#allocation2] sm:$0xff] 0.0
          %482 = vst [vmem:[#allocation2 + $0x8] sm:$0xff] 0.0
          %483 = vst [vmem:[#allocation2 + $0x10] sm:$0xff] 0.0
          %484 = vst [vmem:[#allocation2 + $0x18] sm:$0xff] 0.0
          %485 = vst [vmem:[#allocation2 + $0x20] sm:$0xff] 0.0
          %486 = vst [vmem:[#allocation2 + $0x28] sm:$0xff] 0.0
          %487 = vst [vmem:[#allocation2 + $0x30] sm:$0xff] 0.0
          %488 = vst [vmem:[#allocation2 + $0x38] sm:$0xff] 0.0
          %489 = vst [vmem:[#allocation2 + $0x40] sm:$0xff] 0.0
          %490 = vst [vmem:[#allocation2 + $0x48] sm:$0xff] 0.0
          %491 = vst [vmem:[#allocation2 + $0x50] sm:$0xff] 0.0
          %492 = vst [vmem:[#allocation2 + $0x58] sm:$0xff] 0.0
          %493 = vst [vmem:[#allocation2 + $0x60] sm:$0xff] 0.0
          %494 = vst [vmem:[#allocation2 + $0x68] sm:$0xff] 0.0
          %495 = vst [vmem:[#allocation2 + $0x70] sm:$0xff] 0.0
          %496 = vst [vmem:[#allocation2 + $0x78] sm:$0xff] 0.0
          %497 = vst [vmem:[#allocation2 + $0x80] sm:$0xff] 0.0
          %498 = vst [vmem:[#allocation2 + $0x88] sm:$0xff] 0.0
          %499 = vst [vmem:[#allocation2 + $0x90] sm:$0xff] 0.0
          %500 = vst [vmem:[#allocation2 + $0x98] sm:$0xff] 0.0
          %501 = vst [vmem:[#allocation2 + $0xa0] sm:$0xff] 0.0
          %502 = vst [vmem:[#allocation2 + $0xa8] sm:$0xff] 0.0
          %503 = vst [vmem:[#allocation2 + $0xb0] sm:$0xff] 0.0
          %504 = vst [vmem:[#allocation2 + $0xb8] sm:$0xff] 0.0
          %505 = vst [vmem:[#allocation2 + $0xc0] sm:$0xff] 0.0
          %506 = vst [vmem:[#allocation2 + $0xc8] sm:$0xff] 0.0
          %507 = vst [vmem:[#allocation2 + $0xd0] sm:$0xff] 0.0
          %508 = vst [vmem:[#allocation2 + $0xd8] sm:$0xff] 0.0
          %509 = vst [vmem:[#allocation2 + $0xe0] sm:$0xff] 0.0
          %510 = vst [vmem:[#allocation2 + $0xe8] sm:$0xff] 0.0
          %511 = vst [vmem:[#allocation2 + $0xf0] sm:$0xff] 0.0
          %512 = vst [vmem:[#allocation2 + $0xf8] sm:$0xff] 0.0
        $region86: #{node_level_gnn_forward.4} parent=77 // pred_fallthru
          _
        %v513 = vld [vmem:[#allocation2] sm:$0xff]
        %v514 = vld [vmem:[#allocation2 + $0x8] sm:$0xff]
        %v515 = vld [vmem:[#allocation2 + $0x10] sm:$0xff]
        %v516 = vld [vmem:[#allocation2 + $0x18] sm:$0xff]
        %v517 = vld [vmem:[#allocation2 + $0x20] sm:$0xff]
        %v518 = vld [vmem:[#allocation2 + $0x28] sm:$0xff]
        %v519 = vld [vmem:[#allocation2 + $0x30] sm:$0xff]
        %v520 = vld [vmem:[#allocation2 + $0x38] sm:$0xff]
        %v521 = vld [vmem:[#allocation2 + $0x40] sm:$0xff]
        %v522 = vld [vmem:[#allocation2 + $0x48] sm:$0xff]
        %v523 = vld [vmem:[#allocation2 + $0x50] sm:$0xff]
        %v524 = vld [vmem:[#allocation2 + $0x58] sm:$0xff]
        %v525 = vld [vmem:[#allocation2 + $0x60] sm:$0xff]
        %v526 = vld [vmem:[#allocation2 + $0x68] sm:$0xff]
        %v527 = vld [vmem:[#allocation2 + $0x70] sm:$0xff]
        %v528 = vld [vmem:[#allocation2 + $0x78] sm:$0xff]
        %v529 = vld [vmem:[#allocation2 + $0x80] sm:$0xff]
        %v530 = vld [vmem:[#allocation2 + $0x88] sm:$0xff]
        %v531 = vld [vmem:[#allocation2 + $0x90] sm:$0xff]
        %v532 = vld [vmem:[#allocation2 + $0x98] sm:$0xff]
        %v533 = vld [vmem:[#allocation2 + $0xa0] sm:$0xff]
        %v534 = vld [vmem:[#allocation2 + $0xa8] sm:$0xff]
        %v535 = vld [vmem:[#allocation2 + $0xb0] sm:$0xff]
        %v536 = vld [vmem:[#allocation2 + $0xb8] sm:$0xff]
        %v537 = vld [vmem:[#allocation2 + $0xc0] sm:$0xff]
        %v538 = vld [vmem:[#allocation2 + $0xc8] sm:$0xff]
        %v539 = vld [vmem:[#allocation2 + $0xd0] sm:$0xff]
        %v540 = vld [vmem:[#allocation2 + $0xd8] sm:$0xff]
        %v541 = vld [vmem:[#allocation2 + $0xe0] sm:$0xff]
        %v542 = vld [vmem:[#allocation2 + $0xe8] sm:$0xff]
        %v543 = vld [vmem:[#allocation2 + $0xf0] sm:$0xff]
        %v544 = vld [vmem:[#allocation2 + $0xf8] sm:$0xff]
        %v545 = vld [vmem:[%s419] sm:$0xff]
        %v546 = vld [vmem:[%s419 + $0x8] sm:$0xff]
        %v547 = vld [vmem:[%s419 + $0x10] sm:$0xff]
        %v548 = vld [vmem:[%s419 + $0x18] sm:$0xff]
        %v549 = vld [vmem:[%s419 + $0x20] sm:$0xff]
        %v550 = vld [vmem:[%s419 + $0x28] sm:$0xff]
        %v551 = vld [vmem:[%s419 + $0x30] sm:$0xff]
        %v552 = vld [vmem:[%s419 + $0x38] sm:$0xff]
        %v553 = vld [vmem:[%s419 + $0x40] sm:$0xff]
        %v554 = vld [vmem:[%s419 + $0x48] sm:$0xff]
        %v555 = vld [vmem:[%s419 + $0x50] sm:$0xff]
        %v556 = vld [vmem:[%s419 + $0x58] sm:$0xff]
        %v557 = vld [vmem:[%s419 + $0x60] sm:$0xff]
        %v558 = vld [vmem:[%s419 + $0x68] sm:$0xff]
        %v559 = vld [vmem:[%s419 + $0x70] sm:$0xff]
        %v560 = vld [vmem:[%s419 + $0x78] sm:$0xff]
        %v561 = vld [vmem:[%s419 + $0x80] sm:$0xff]
        %v562 = vld [vmem:[%s419 + $0x88] sm:$0xff]
        %v563 = vld [vmem:[%s419 + $0x90] sm:$0xff]
        %v564 = vld [vmem:[%s419 + $0x98] sm:$0xff]
        %v565 = vld [vmem:[%s419 + $0xa0] sm:$0xff]
        %v566 = vld [vmem:[%s419 + $0xa8] sm:$0xff]
        %v567 = vld [vmem:[%s419 + $0xb0] sm:$0xff]
        %v568 = vld [vmem:[%s419 + $0xb8] sm:$0xff]
        %v569 = vld [vmem:[%s419 + $0xc0] sm:$0xff]
        %v570 = vld [vmem:[%s419 + $0xc8] sm:$0xff]
        %v571 = vld [vmem:[%s419 + $0xd0] sm:$0xff]
        %v572 = vld [vmem:[%s419 + $0xd8] sm:$0xff]
        %v573 = vld [vmem:[%s419 + $0xe0] sm:$0xff]
        %v574 = vld [vmem:[%s419 + $0xe8] sm:$0xff]
        %v575 = vld [vmem:[%s419 + $0xf0] sm:$0xff]
        %v576 = vld [vmem:[%s419 + $0xf8] sm:$0xff]
        %v577 = vld [vmem:[%s462] sm:$0xf]
        %v578 = vld [vmem:[%s462 + $0x4] sm:$0xf]
        %v579 = vld [vmem:[%s462 + $0x8] sm:$0xf]
        %v580 = vld [vmem:[%s462 + $0xc] sm:$0xf]
        %v581 = vld [vmem:[%s462 + $0x10] sm:$0xf]
        %v582 = vld [vmem:[%s462 + $0x14] sm:$0xf]
        %v583 = vld [vmem:[%s462 + $0x18] sm:$0xf]
        %v584 = vld [vmem:[%s462 + $0x1c] sm:$0xf]
        %v585 = vld [vmem:[%s462 + $0x20] sm:$0xf]
        %v586 = vld [vmem:[%s462 + $0x24] sm:$0xf]
        %v587 = vld [vmem:[%s462 + $0x28] sm:$0xf]
        %v588 = vld [vmem:[%s462 + $0x2c] sm:$0xf]
        %v589 = vld [vmem:[%s462 + $0x30] sm:$0xf]
        %v590 = vld [vmem:[%s462 + $0x34] sm:$0xf]
        %v591 = vld [vmem:[%s462 + $0x38] sm:$0xf]
        %v592 = vld [vmem:[%s462 + $0x3c] sm:$0xf]
        %v593 = vld [vmem:[%s462 + $0x40] sm:$0xf]
        %v594 = vld [vmem:[%s462 + $0x44] sm:$0xf]
        %v595 = vld [vmem:[%s462 + $0x48] sm:$0xf]
        %v596 = vld [vmem:[%s462 + $0x4c] sm:$0xf]
        %v597 = vld [vmem:[%s462 + $0x50] sm:$0xf]
        %v598 = vld [vmem:[%s462 + $0x54] sm:$0xf]
        %v599 = vld [vmem:[%s462 + $0x58] sm:$0xf]
        %v600 = vld [vmem:[%s462 + $0x5c] sm:$0xf]
        %v601 = vld [vmem:[%s462 + $0x60] sm:$0xf]
        %v602 = vld [vmem:[%s462 + $0x64] sm:$0xf]
        %v603 = vld [vmem:[%s462 + $0x68] sm:$0xf]
        %v604 = vld [vmem:[%s462 + $0x6c] sm:$0xf]
        %v605 = vld [vmem:[%s462 + $0x70] sm:$0xf]
        %v606 = vld [vmem:[%s462 + $0x74] sm:$0xf]
        %v607 = vld [vmem:[%s462 + $0x78] sm:$0xf]
        %v608 = vld [vmem:[%s462 + $0x7c] sm:$0xf]
        %v641 = vunpack.c.l.b16 %v545
        %v642 = vunpack.c.h.b16 %v545
        %v643 = vunpack.c.l.b16 %v546
        %v644 = vunpack.c.h.b16 %v546
        %v645 = vunpack.c.l.b16 %v547
        %v646 = vunpack.c.h.b16 %v547
        %v647 = vunpack.c.l.b16 %v548
        %v648 = vunpack.c.h.b16 %v548
        %v649 = vunpack.c.l.b16 %v549
        %v650 = vunpack.c.h.b16 %v549
        %v651 = vunpack.c.l.b16 %v550
        %v652 = vunpack.c.h.b16 %v550
        %v653 = vunpack.c.l.b16 %v551
        %v654 = vunpack.c.h.b16 %v551
        %v655 = vunpack.c.l.b16 %v552
        %v656 = vunpack.c.h.b16 %v552
        %v657 = vunpack.c.l.b16 %v553
        %v658 = vunpack.c.h.b16 %v553
        %v659 = vunpack.c.l.b16 %v554
        %v660 = vunpack.c.h.b16 %v554
        %v661 = vunpack.c.l.b16 %v555
        %v662 = vunpack.c.h.b16 %v555
        %v663 = vunpack.c.l.b16 %v556
        %v664 = vunpack.c.h.b16 %v556
        %v665 = vunpack.c.l.b16 %v557
        %v666 = vunpack.c.h.b16 %v557
        %v667 = vunpack.c.l.b16 %v558
        %v668 = vunpack.c.h.b16 %v558
        %v669 = vunpack.c.l.b16 %v559
        %v670 = vunpack.c.h.b16 %v559
        %v671 = vunpack.c.l.b16 %v560
        %v672 = vunpack.c.h.b16 %v560
        %v673 = vunpack.c.l.b16 %v561
        %v674 = vunpack.c.h.b16 %v561
        %v675 = vunpack.c.l.b16 %v562
        %v676 = vunpack.c.h.b16 %v562
        %v677 = vunpack.c.l.b16 %v563
        %v678 = vunpack.c.h.b16 %v563
        %v679 = vunpack.c.l.b16 %v564
        %v680 = vunpack.c.h.b16 %v564
        %v681 = vunpack.c.l.b16 %v565
        %v682 = vunpack.c.h.b16 %v565
        %v683 = vunpack.c.l.b16 %v566
        %v684 = vunpack.c.h.b16 %v566
        %v685 = vunpack.c.l.b16 %v567
        %v686 = vunpack.c.h.b16 %v567
        %v687 = vunpack.c.l.b16 %v568
        %v688 = vunpack.c.h.b16 %v568
        %v689 = vunpack.c.l.b16 %v569
        %v690 = vunpack.c.h.b16 %v569
        %v691 = vunpack.c.l.b16 %v570
        %v692 = vunpack.c.h.b16 %v570
        %v693 = vunpack.c.l.b16 %v571
        %v694 = vunpack.c.h.b16 %v571
        %v695 = vunpack.c.l.b16 %v572
        %v696 = vunpack.c.h.b16 %v572
        %v697 = vunpack.c.l.b16 %v573
        %v698 = vunpack.c.h.b16 %v573
        %v699 = vunpack.c.l.b16 %v574
        %v700 = vunpack.c.h.b16 %v574
        %v701 = vunpack.c.l.b16 %v575
        %v702 = vunpack.c.h.b16 %v575
        %v703 = vunpack.c.l.b16 %v576
        %v704 = vunpack.c.h.b16 %v576
        %v705 = vpack.c.b16 %v643, %v641
        %v706 = vpack.c.b16 %v644, %v642
        %v707 = vpack.c.b16 %v647, %v645
        %v708 = vpack.c.b16 %v648, %v646
        %v709 = vpack.c.b16 %v651, %v649
        %v710 = vpack.c.b16 %v652, %v650
        %v711 = vpack.c.b16 %v655, %v653
        %v712 = vpack.c.b16 %v656, %v654
        %v713 = vpack.c.b16 %v659, %v657
        %v714 = vpack.c.b16 %v660, %v658
        %v715 = vpack.c.b16 %v663, %v661
        %v716 = vpack.c.b16 %v664, %v662
        %v717 = vpack.c.b16 %v667, %v665
        %v718 = vpack.c.b16 %v668, %v666
        %v719 = vpack.c.b16 %v671, %v669
        %v720 = vpack.c.b16 %v672, %v670
        %v721 = vpack.c.b16 %v675, %v673
        %v722 = vpack.c.b16 %v676, %v674
        %v723 = vpack.c.b16 %v679, %v677
        %v724 = vpack.c.b16 %v680, %v678
        %v725 = vpack.c.b16 %v683, %v681
        %v726 = vpack.c.b16 %v684, %v682
        %v727 = vpack.c.b16 %v687, %v685
        %v728 = vpack.c.b16 %v688, %v686
        %v729 = vpack.c.b16 %v691, %v689
        %v730 = vpack.c.b16 %v692, %v690
        %v731 = vpack.c.b16 %v695, %v693
        %v732 = vpack.c.b16 %v696, %v694
        %v733 = vpack.c.b16 %v699, %v697
        %v734 = vpack.c.b16 %v700, %v698
        %v735 = vpack.c.b16 %v703, %v701
        %v736 = vpack.c.b16 %v704, %v702
        %v801 = vunpack.c.l.b16 %v577
        %v802 = vunpack.c.l.b16 %v578
        %v803 = vunpack.c.l.b16 %v579
        %v804 = vunpack.c.l.b16 %v580
        %v805 = vunpack.c.l.b16 %v581
        %v806 = vunpack.c.l.b16 %v582
        %v807 = vunpack.c.l.b16 %v583
        %v808 = vunpack.c.l.b16 %v584
        %v809 = vunpack.c.l.b16 %v585
        %v810 = vunpack.c.l.b16 %v586
        %v811 = vunpack.c.l.b16 %v587
        %v812 = vunpack.c.l.b16 %v588
        %v813 = vunpack.c.l.b16 %v589
        %v814 = vunpack.c.l.b16 %v590
        %v815 = vunpack.c.l.b16 %v591
        %v816 = vunpack.c.l.b16 %v592
        %v817 = vunpack.c.l.b16 %v593
        %v818 = vunpack.c.l.b16 %v594
        %v819 = vunpack.c.l.b16 %v595
        %v820 = vunpack.c.l.b16 %v596
        %v821 = vunpack.c.l.b16 %v597
        %v822 = vunpack.c.l.b16 %v598
        %v823 = vunpack.c.l.b16 %v599
        %v824 = vunpack.c.l.b16 %v600
        %v825 = vunpack.c.l.b16 %v601
        %v826 = vunpack.c.l.b16 %v602
        %v827 = vunpack.c.l.b16 %v603
        %v828 = vunpack.c.l.b16 %v604
        %v829 = vunpack.c.l.b16 %v605
        %v830 = vunpack.c.l.b16 %v606
        %v831 = vunpack.c.l.b16 %v607
        %v832 = vunpack.c.l.b16 %v608
        %v833 = vpack.c.b16 %v802, %v801
        %v834 = vpack.c.b16 %v804, %v803
        %v835 = vpack.c.b16 %v806, %v805
        %v836 = vpack.c.b16 %v808, %v807
        %v837 = vpack.c.b16 %v810, %v809
        %v838 = vpack.c.b16 %v812, %v811
        %v839 = vpack.c.b16 %v814, %v813
        %v840 = vpack.c.b16 %v816, %v815
        %v841 = vpack.c.b16 %v818, %v817
        %v842 = vpack.c.b16 %v820, %v819
        %v843 = vpack.c.b16 %v822, %v821
        %v844 = vpack.c.b16 %v824, %v823
        %v845 = vpack.c.b16 %v826, %v825
        %v846 = vpack.c.b16 %v828, %v827
        %v847 = vpack.c.b16 %v830, %v829
        %v848 = vpack.c.b16 %v832, %v831
        %865 = vmatprep.subr.bf16.mxu0 0
        %866 = vmatpush1.bf16.msra.mxu0 %v840
        %867 = vmatprep.subr.bf16.mxu0 0
        %868 = vmatpush1.bf16.msra.mxu0 %v839
        %869 = vmatprep.subr.bf16.mxu0 0
        %870 = vmatpush1.bf16.msra.mxu0 %v838
        %871 = vmatprep.subr.bf16.mxu0 0
        %872 = vmatpush1.bf16.msra.mxu0 %v837
        %873 = vmatprep.subr.bf16.mxu0 0
        %874 = vmatpush1.bf16.msra.mxu0 %v836
        %875 = vmatprep.subr.bf16.mxu0 0
        %876 = vmatpush1.bf16.msra.mxu0 %v835
        %877 = vmatprep.subr.bf16.mxu0 0
        %878 = vmatpush1.bf16.msra.mxu0 %v834
        %879 = vmatprep.subr.bf16.mxu0 0
        %880 = vmatpush1.bf16.msra.mxu0 %v833
        %881 = vmatprep.subr.bf16.mxu0 0
        %882 = vmatpush2.bf16.msra.mxu0 %v848
        %883 = vmatprep.subr.bf16.mxu0 0
        %884 = vmatpush2.bf16.msra.mxu0 %v847
        %885 = vmatprep.subr.bf16.mxu0 0
        %886 = vmatpush2.bf16.msra.mxu0 %v846
        %887 = vmatprep.subr.bf16.mxu0 0
        %888 = vmatpush2.bf16.msra.mxu0 %v845
        %889 = vmatprep.subr.bf16.mxu0 0
        %890 = vmatpush2.bf16.msra.mxu0 %v844
        %891 = vmatprep.subr.bf16.mxu0 0
        %892 = vmatpush2.bf16.msra.mxu0 %v843
        %893 = vmatprep.subr.bf16.mxu0 0
        %894 = vmatpush2.bf16.msra.mxu0 %v842
        %895 = vmatprep.subr.bf16.mxu0 0
        %896 = vmatpush2.bf16.msra.mxu0 %v841
        %897 = vmatprep.mubr.bf16.mxu0 %v706
        %898 = vmatmul.mubr.bf16.gmra.mxu0 %v705
        %v899 = vpop.f32.mrf.mxu0
        %v900 = vadd.f32 0.0, %v899
        %v901 = vpop.f32.mrf.mxu0
        %v902 = vpop.f32.mrf.mxu0
        %v903 = vadd.f32 0.0, %v902
        %v904 = vpop.f32.mrf.mxu0
        %905 = vmatprep.mubr.bf16.mxu0 %v708
        %906 = vmatmul.mubr.bf16.gmra.mxu0 %v707
        %v907 = vpop.f32.mrf.mxu0
        %v908 = vadd.f32 0.0, %v907
        %v909 = vpop.f32.mrf.mxu0
        %v910 = vpop.f32.mrf.mxu0
        %v911 = vadd.f32 0.0, %v910
        %v912 = vpop.f32.mrf.mxu0
        %913 = vmatprep.mubr.bf16.mxu0 %v710
        %914 = vmatmul.mubr.bf16.gmra.mxu0 %v709
        %v915 = vpop.f32.mrf.mxu0
        %v916 = vadd.f32 0.0, %v915
        %v917 = vpop.f32.mrf.mxu0
        %v918 = vpop.f32.mrf.mxu0
        %v919 = vadd.f32 0.0, %v918
        %v920 = vpop.f32.mrf.mxu0
        %921 = vmatprep.mubr.bf16.mxu0 %v712
        %922 = vmatmul.mubr.bf16.gmra.mxu0 %v711
        %v923 = vpop.f32.mrf.mxu0
        %v924 = vadd.f32 0.0, %v923
        %v925 = vpop.f32.mrf.mxu0
        %v926 = vpop.f32.mrf.mxu0
        %v927 = vadd.f32 0.0, %v926
        %v928 = vpop.f32.mrf.mxu0
        %929 = vmatprep.mubr.bf16.mxu0 %v714
        %930 = vmatmul.mubr.bf16.gmra.mxu0 %v713
        %v931 = vpop.f32.mrf.mxu0
        %v932 = vadd.f32 0.0, %v931
        %v933 = vpop.f32.mrf.mxu0
        %v934 = vpop.f32.mrf.mxu0
        %v935 = vadd.f32 0.0, %v934
        %v936 = vpop.f32.mrf.mxu0
        %937 = vmatprep.mubr.bf16.mxu0 %v716
        %938 = vmatmul.mubr.bf16.gmra.mxu0 %v715
        %v939 = vpop.f32.mrf.mxu0
        %v940 = vadd.f32 0.0, %v939
        %v941 = vpop.f32.mrf.mxu0
        %v942 = vpop.f32.mrf.mxu0
        %v943 = vadd.f32 0.0, %v942
        %v944 = vpop.f32.mrf.mxu0
        %945 = vmatprep.mubr.bf16.mxu0 %v718
        %946 = vmatmul.mubr.bf16.gmra.mxu0 %v717
        %v947 = vpop.f32.mrf.mxu0
        %v948 = vadd.f32 0.0, %v947
        %v949 = vpop.f32.mrf.mxu0
        %v950 = vpop.f32.mrf.mxu0
        %v951 = vadd.f32 0.0, %v950
        %v952 = vpop.f32.mrf.mxu0
        %953 = vmatprep.mubr.bf16.mxu0 %v720
        %954 = vmatmul.mubr.bf16.gmra.mxu0 %v719
        %v955 = vpop.f32.mrf.mxu0
        %v956 = vadd.f32 0.0, %v955
        %v957 = vpop.f32.mrf.mxu0
        %v958 = vpop.f32.mrf.mxu0
        %v959 = vadd.f32 0.0, %v958
        %v960 = vpop.f32.mrf.mxu0
        %961 = vmatprep.mubr.bf16.mxu0 %v722
        %962 = vmatmul.mubr.bf16.gmra.mxu0 %v721
        %v963 = vpop.f32.mrf.mxu0
        %v964 = vadd.f32 0.0, %v963
        %v965 = vpop.f32.mrf.mxu0
        %v966 = vpop.f32.mrf.mxu0
        %v967 = vadd.f32 0.0, %v966
        %v968 = vpop.f32.mrf.mxu0
        %969 = vmatprep.mubr.bf16.mxu0 %v724
        %970 = vmatmul.mubr.bf16.gmra.mxu0 %v723
        %v971 = vpop.f32.mrf.mxu0
        %v972 = vadd.f32 0.0, %v971
        %v973 = vpop.f32.mrf.mxu0
        %v974 = vpop.f32.mrf.mxu0
        %v975 = vadd.f32 0.0, %v974
        %v976 = vpop.f32.mrf.mxu0
        %977 = vmatprep.mubr.bf16.mxu0 %v726
        %978 = vmatmul.mubr.bf16.gmra.mxu0 %v725
        %v979 = vpop.f32.mrf.mxu0
        %v980 = vadd.f32 0.0, %v979
        %v981 = vpop.f32.mrf.mxu0
        %v982 = vpop.f32.mrf.mxu0
        %v983 = vadd.f32 0.0, %v982
        %v984 = vpop.f32.mrf.mxu0
        %985 = vmatprep.mubr.bf16.mxu0 %v728
        %986 = vmatmul.mubr.bf16.gmra.mxu0 %v727
        %v987 = vpop.f32.mrf.mxu0
        %v988 = vadd.f32 0.0, %v987
        %v989 = vpop.f32.mrf.mxu0
        %v990 = vpop.f32.mrf.mxu0
        %v991 = vadd.f32 0.0, %v990
        %v992 = vpop.f32.mrf.mxu0
        %993 = vmatprep.mubr.bf16.mxu0 %v730
        %994 = vmatmul.mubr.bf16.gmra.mxu0 %v729
        %v995 = vpop.f32.mrf.mxu0
        %v996 = vadd.f32 0.0, %v995
        %v997 = vpop.f32.mrf.mxu0
        %v998 = vpop.f32.mrf.mxu0
        %v999 = vadd.f32 0.0, %v998
        %v1000 = vpop.f32.mrf.mxu0
        %1001 = vmatprep.mubr.bf16.mxu0 %v732
        %1002 = vmatmul.mubr.bf16.gmra.mxu0 %v731
        %v1003 = vpop.f32.mrf.mxu0
        %v1004 = vadd.f32 0.0, %v1003
        %v1005 = vpop.f32.mrf.mxu0
        %v1006 = vpop.f32.mrf.mxu0
        %v1007 = vadd.f32 0.0, %v1006
        %v1008 = vpop.f32.mrf.mxu0
        %1009 = vmatprep.mubr.bf16.mxu0 %v734
        %1010 = vmatmul.mubr.bf16.gmra.mxu0 %v733
        %v1011 = vpop.f32.mrf.mxu0
        %v1012 = vadd.f32 0.0, %v1011
        %v1013 = vpop.f32.mrf.mxu0
        %v1014 = vpop.f32.mrf.mxu0
        %v1015 = vadd.f32 0.0, %v1014
        %v1016 = vpop.f32.mrf.mxu0
        %1017 = vmatprep.mubr.bf16.mxu0 %v736
        %1018 = vmatmul.mubr.bf16.gmra.mxu0 %v735
        %v1019 = vpop.f32.mrf.mxu0
        %v1020 = vadd.f32 0.0, %v1019
        %v1021 = vpop.f32.mrf.mxu0
        %v1022 = vpop.f32.mrf.mxu0
        %v1023 = vadd.f32 0.0, %v1022
        %v1024 = vpop.f32.mrf.mxu0
        %1025 = vdwg.mxu0
        %v1026 = vadd.f32 %v513, %v900
        %v1027 = vadd.f32 %v514, %v903
        %v1028 = vadd.f32 %v515, %v908
        %v1029 = vadd.f32 %v516, %v911
        %v1030 = vadd.f32 %v517, %v916
        %v1031 = vadd.f32 %v518, %v919
        %v1032 = vadd.f32 %v519, %v924
        %v1033 = vadd.f32 %v520, %v927
        %v1034 = vadd.f32 %v521, %v932
        %v1035 = vadd.f32 %v522, %v935
        %v1036 = vadd.f32 %v523, %v940
        %v1037 = vadd.f32 %v524, %v943
        %v1038 = vadd.f32 %v525, %v948
        %v1039 = vadd.f32 %v526, %v951
        %v1040 = vadd.f32 %v527, %v956
        %v1041 = vadd.f32 %v528, %v959
        %v1042 = vadd.f32 %v529, %v964
        %v1043 = vadd.f32 %v530, %v967
        %v1044 = vadd.f32 %v531, %v972
        %v1045 = vadd.f32 %v532, %v975
        %v1046 = vadd.f32 %v533, %v980
        %v1047 = vadd.f32 %v534, %v983
        %v1048 = vadd.f32 %v535, %v988
        %v1049 = vadd.f32 %v536, %v991
        %v1050 = vadd.f32 %v537, %v996
        %v1051 = vadd.f32 %v538, %v999
        %v1052 = vadd.f32 %v539, %v1004
        %v1053 = vadd.f32 %v540, %v1007
        %v1054 = vadd.f32 %v541, %v1012
        %v1055 = vadd.f32 %v542, %v1015
        %v1056 = vadd.f32 %v543, %v1020
        %v1057 = vadd.f32 %v544, %v1023
        %1058 = vst [vmem:[#allocation2] sm:$0xff] %v1026
        %1059 = vst [vmem:[#allocation2 + $0x8] sm:$0xff] %v1027
        %1060 = vst [vmem:[#allocation2 + $0x10] sm:$0xff] %v1028
        %1061 = vst [vmem:[#allocation2 + $0x18] sm:$0xff] %v1029
        %1062 = vst [vmem:[#allocation2 + $0x20] sm:$0xff] %v1030
        %1063 = vst [vmem:[#allocation2 + $0x28] sm:$0xff] %v1031
        %1064 = vst [vmem:[#allocation2 + $0x30] sm:$0xff] %v1032
        %1065 = vst [vmem:[#allocation2 + $0x38] sm:$0xff] %v1033
        %1066 = vst [vmem:[#allocation2 + $0x40] sm:$0xff] %v1034
        %1067 = vst [vmem:[#allocation2 + $0x48] sm:$0xff] %v1035
        %1068 = vst [vmem:[#allocation2 + $0x50] sm:$0xff] %v1036
        %1069 = vst [vmem:[#allocation2 + $0x58] sm:$0xff] %v1037
        %1070 = vst [vmem:[#allocation2 + $0x60] sm:$0xff] %v1038
        %1071 = vst [vmem:[#allocation2 + $0x68] sm:$0xff] %v1039
        %1072 = vst [vmem:[#allocation2 + $0x70] sm:$0xff] %v1040
        %1073 = vst [vmem:[#allocation2 + $0x78] sm:$0xff] %v1041
        %1074 = vst [vmem:[#allocation2 + $0x80] sm:$0xff] %v1042
        %1075 = vst [vmem:[#allocation2 + $0x88] sm:$0xff] %v1043
        %1076 = vst [vmem:[#allocation2 + $0x90] sm:$0xff] %v1044
        %1077 = vst [vmem:[#allocation2 + $0x98] sm:$0xff] %v1045
        %1078 = vst [vmem:[#allocation2 + $0xa0] sm:$0xff] %v1046
        %1079 = vst [vmem:[#allocation2 + $0xa8] sm:$0xff] %v1047
        %1080 = vst [vmem:[#allocation2 + $0xb0] sm:$0xff] %v1048
        %1081 = vst [vmem:[#allocation2 + $0xb8] sm:$0xff] %v1049
        %1082 = vst [vmem:[#allocation2 + $0xc0] sm:$0xff] %v1050
        %1083 = vst [vmem:[#allocation2 + $0xc8] sm:$0xff] %v1051
        %1084 = vst [vmem:[#allocation2 + $0xd0] sm:$0xff] %v1052
        %1085 = vst [vmem:[#allocation2 + $0xd8] sm:$0xff] %v1053
        %1086 = vst [vmem:[#allocation2 + $0xe0] sm:$0xff] %v1054
        %1087 = vst [vmem:[#allocation2 + $0xe8] sm:$0xff] %v1055
        %1088 = vst [vmem:[#allocation2 + $0xf0] sm:$0xff] %v1056
        %1089 = vst [vmem:[#allocation2 + $0xf8] sm:$0xff] %v1057
        %p1090 = scmp.eq.s32.totalorder %s22, 1
        // Predicated region
        $region87: #{node_level_gnn_forward.4} parent=77 // pred_check
          %p1091 = pneg %p1090
        $region88: #{node_level_gnn_forward.4} parent=77 // pred_check_branch
          %1093 = sbr.rel (%p1091) target = $region90
        $region89: #{node_level_gnn_forward.4} parent=77 // pred_region
          %v1094 = vld [vmem:[%s468] sm:$0xf]
          %v1095 = vld [vmem:[%s468 + $0x4] sm:$0xf]
          %v1096 = vld [vmem:[%s468 + $0x8] sm:$0xf]
          %v1097 = vld [vmem:[%s468 + $0xc] sm:$0xf]
          %v1098 = vld [vmem:[%s468 + $0x10] sm:$0xf]
          %v1099 = vld [vmem:[%s468 + $0x14] sm:$0xf]
          %v1100 = vld [vmem:[%s468 + $0x18] sm:$0xf]
          %v1101 = vld [vmem:[%s468 + $0x1c] sm:$0xf]
          %v1102 = vld [vmem:[%s468 + $0x20] sm:$0xf]
          %v1103 = vld [vmem:[%s468 + $0x24] sm:$0xf]
          %v1104 = vld [vmem:[%s468 + $0x28] sm:$0xf]
          %v1105 = vld [vmem:[%s468 + $0x2c] sm:$0xf]
          %v1106 = vld [vmem:[%s468 + $0x30] sm:$0xf]
          %v1107 = vld [vmem:[%s468 + $0x34] sm:$0xf]
          %v1108 = vld [vmem:[%s468 + $0x38] sm:$0xf]
          %v1109 = vld [vmem:[%s468 + $0x3c] sm:$0xf]
          %v1110 = vld [vmem:[%s468 + $0x40] sm:$0xf]
          %v1111 = vld [vmem:[%s468 + $0x44] sm:$0xf]
          %v1112 = vld [vmem:[%s468 + $0x48] sm:$0xf]
          %v1113 = vld [vmem:[%s468 + $0x4c] sm:$0xf]
          %v1114 = vld [vmem:[%s468 + $0x50] sm:$0xf]
          %v1115 = vld [vmem:[%s468 + $0x54] sm:$0xf]
          %v1116 = vld [vmem:[%s468 + $0x58] sm:$0xf]
          %v1117 = vld [vmem:[%s468 + $0x5c] sm:$0xf]
          %v1118 = vld [vmem:[%s468 + $0x60] sm:$0xf]
          %v1119 = vld [vmem:[%s468 + $0x64] sm:$0xf]
          %v1120 = vld [vmem:[%s468 + $0x68] sm:$0xf]
          %v1121 = vld [vmem:[%s468 + $0x6c] sm:$0xf]
          %v1122 = vld [vmem:[%s468 + $0x70] sm:$0xf]
          %v1123 = vld [vmem:[%s468 + $0x74] sm:$0xf]
          %v1124 = vld [vmem:[%s468 + $0x78] sm:$0xf]
          %v1125 = vld [vmem:[%s468 + $0x7c] sm:$0xf]
          %v1126 = vld [vmem:[#allocation2] sm:$0xff]
          %v1127 = vld [vmem:[#allocation2 + $0x8] sm:$0xff]
          %v1128 = vld [vmem:[#allocation2 + $0x10] sm:$0xff]
          %v1129 = vld [vmem:[#allocation2 + $0x18] sm:$0xff]
          %v1130 = vld [vmem:[#allocation2 + $0x20] sm:$0xff]
          %v1131 = vld [vmem:[#allocation2 + $0x28] sm:$0xff]
          %v1132 = vld [vmem:[#allocation2 + $0x30] sm:$0xff]
          %v1133 = vld [vmem:[#allocation2 + $0x38] sm:$0xff]
          %v1134 = vld [vmem:[#allocation2 + $0x40] sm:$0xff]
          %v1135 = vld [vmem:[#allocation2 + $0x48] sm:$0xff]
          %v1136 = vld [vmem:[#allocation2 + $0x50] sm:$0xff]
          %v1137 = vld [vmem:[#allocation2 + $0x58] sm:$0xff]
          %v1138 = vld [vmem:[#allocation2 + $0x60] sm:$0xff]
          %v1139 = vld [vmem:[#allocation2 + $0x68] sm:$0xff]
          %v1140 = vld [vmem:[#allocation2 + $0x70] sm:$0xff]
          %v1141 = vld [vmem:[#allocation2 + $0x78] sm:$0xff]
          %v1142 = vld [vmem:[#allocation2 + $0x80] sm:$0xff]
          %v1143 = vld [vmem:[#allocation2 + $0x88] sm:$0xff]
          %v1144 = vld [vmem:[#allocation2 + $0x90] sm:$0xff]
          %v1145 = vld [vmem:[#allocation2 + $0x98] sm:$0xff]
          %v1146 = vld [vmem:[#allocation2 + $0xa0] sm:$0xff]
          %v1147 = vld [vmem:[#allocation2 + $0xa8] sm:$0xff]
          %v1148 = vld [vmem:[#allocation2 + $0xb0] sm:$0xff]
          %v1149 = vld [vmem:[#allocation2 + $0xb8] sm:$0xff]
          %v1150 = vld [vmem:[#allocation2 + $0xc0] sm:$0xff]
          %v1151 = vld [vmem:[#allocation2 + $0xc8] sm:$0xff]
          %v1152 = vld [vmem:[#allocation2 + $0xd0] sm:$0xff]
          %v1153 = vld [vmem:[#allocation2 + $0xd8] sm:$0xff]
          %v1154 = vld [vmem:[#allocation2 + $0xe0] sm:$0xff]
          %v1155 = vld [vmem:[#allocation2 + $0xe8] sm:$0xff]
          %v1156 = vld [vmem:[#allocation2 + $0xf0] sm:$0xff]
          %v1157 = vld [vmem:[#allocation2 + $0xf8] sm:$0xff]
          %v1158 = vpack.c.bf16 %v1127, %v1126
          %v1159 = vpack.c.bf16 %v1129, %v1128
          %v1160 = vpack.c.bf16 %v1131, %v1130
          %v1161 = vpack.c.bf16 %v1133, %v1132
          %v1162 = vpack.c.bf16 %v1135, %v1134
          %v1163 = vpack.c.bf16 %v1137, %v1136
          %v1164 = vpack.c.bf16 %v1139, %v1138
          %v1165 = vpack.c.bf16 %v1141, %v1140
          %v1166 = vpack.c.bf16 %v1143, %v1142
          %v1167 = vpack.c.bf16 %v1145, %v1144
          %v1168 = vpack.c.bf16 %v1147, %v1146
          %v1169 = vpack.c.bf16 %v1149, %v1148
          %v1170 = vpack.c.bf16 %v1151, %v1150
          %v1171 = vpack.c.bf16 %v1153, %v1152
          %v1172 = vpack.c.bf16 %v1155, %v1154
          %v1173 = vpack.c.bf16 %v1157, %v1156
          %v1174 = vld [vmem:[%s3] sm:$0xf]
          %v1175 = vld [vmem:[%s3 + $0x4] sm:$0xf]
          %v1176 = vld [vmem:[%s3 + $0x8] sm:$0xf]
          %v1177 = vld [vmem:[%s3 + $0xc] sm:$0xf]
          %v1178 = vld [vmem:[%s3 + $0x10] sm:$0xf]
          %v1179 = vld [vmem:[%s3 + $0x14] sm:$0xf]
          %v1180 = vld [vmem:[%s3 + $0x18] sm:$0xf]
          %v1181 = vld [vmem:[%s3 + $0x1c] sm:$0xf]
          %v1182 = vld [vmem:[%s3 + $0x20] sm:$0xf]
          %v1183 = vld [vmem:[%s3 + $0x24] sm:$0xf]
          %v1184 = vld [vmem:[%s3 + $0x28] sm:$0xf]
          %v1185 = vld [vmem:[%s3 + $0x2c] sm:$0xf]
          %v1186 = vld [vmem:[%s3 + $0x30] sm:$0xf]
          %v1187 = vld [vmem:[%s3 + $0x34] sm:$0xf]
          %v1188 = vld [vmem:[%s3 + $0x38] sm:$0xf]
          %v1189 = vld [vmem:[%s3 + $0x3c] sm:$0xf]
          %v1190 = vld [vmem:[%s4] sm:$0xf]
          %v1191 = vld [vmem:[%s4 + $0x4] sm:$0xf]
          %v1192 = vld [vmem:[%s4 + $0x8] sm:$0xf]
          %v1193 = vld [vmem:[%s4 + $0xc] sm:$0xf]
          %v1194 = vld [vmem:[%s4 + $0x10] sm:$0xf]
          %v1195 = vld [vmem:[%s4 + $0x14] sm:$0xf]
          %v1196 = vld [vmem:[%s4 + $0x18] sm:$0xf]
          %v1197 = vld [vmem:[%s4 + $0x1c] sm:$0xf]
          %v1198 = vld [vmem:[%s4 + $0x20] sm:$0xf]
          %v1199 = vld [vmem:[%s4 + $0x24] sm:$0xf]
          %v1200 = vld [vmem:[%s4 + $0x28] sm:$0xf]
          %v1201 = vld [vmem:[%s4 + $0x2c] sm:$0xf]
          %v1202 = vld [vmem:[%s4 + $0x30] sm:$0xf]
          %v1203 = vld [vmem:[%s4 + $0x34] sm:$0xf]
          %v1204 = vld [vmem:[%s4 + $0x38] sm:$0xf]
          %v1205 = vld [vmem:[%s4 + $0x3c] sm:$0xf]
          %v1238 = vunpack.c.l.b16 %v1094
          %v1239 = vunpack.c.l.b16 %v1095
          %v1240 = vunpack.c.l.b16 %v1096
          %v1241 = vunpack.c.l.b16 %v1097
          %v1242 = vunpack.c.l.b16 %v1098
          %v1243 = vunpack.c.l.b16 %v1099
          %v1244 = vunpack.c.l.b16 %v1100
          %v1245 = vunpack.c.l.b16 %v1101
          %v1246 = vunpack.c.l.b16 %v1102
          %v1247 = vunpack.c.l.b16 %v1103
          %v1248 = vunpack.c.l.b16 %v1104
          %v1249 = vunpack.c.l.b16 %v1105
          %v1250 = vunpack.c.l.b16 %v1106
          %v1251 = vunpack.c.l.b16 %v1107
          %v1252 = vunpack.c.l.b16 %v1108
          %v1253 = vunpack.c.l.b16 %v1109
          %v1254 = vunpack.c.l.b16 %v1110
          %v1255 = vunpack.c.l.b16 %v1111
          %v1256 = vunpack.c.l.b16 %v1112
          %v1257 = vunpack.c.l.b16 %v1113
          %v1258 = vunpack.c.l.b16 %v1114
          %v1259 = vunpack.c.l.b16 %v1115
          %v1260 = vunpack.c.l.b16 %v1116
          %v1261 = vunpack.c.l.b16 %v1117
          %v1262 = vunpack.c.l.b16 %v1118
          %v1263 = vunpack.c.l.b16 %v1119
          %v1264 = vunpack.c.l.b16 %v1120
          %v1265 = vunpack.c.l.b16 %v1121
          %v1266 = vunpack.c.l.b16 %v1122
          %v1267 = vunpack.c.l.b16 %v1123
          %v1268 = vunpack.c.l.b16 %v1124
          %v1269 = vunpack.c.l.b16 %v1125
          %v1270 = vpack.c.b16 %v1239, %v1238
          %v1271 = vpack.c.b16 %v1241, %v1240
          %v1272 = vpack.c.b16 %v1243, %v1242
          %v1273 = vpack.c.b16 %v1245, %v1244
          %v1274 = vpack.c.b16 %v1247, %v1246
          %v1275 = vpack.c.b16 %v1249, %v1248
          %v1276 = vpack.c.b16 %v1251, %v1250
          %v1277 = vpack.c.b16 %v1253, %v1252
          %v1278 = vpack.c.b16 %v1255, %v1254
          %v1279 = vpack.c.b16 %v1257, %v1256
          %v1280 = vpack.c.b16 %v1259, %v1258
          %v1281 = vpack.c.b16 %v1261, %v1260
          %v1282 = vpack.c.b16 %v1263, %v1262
          %v1283 = vpack.c.b16 %v1265, %v1264
          %v1284 = vpack.c.b16 %v1267, %v1266
          %v1285 = vpack.c.b16 %v1269, %v1268
          %v1318 = vunpack.c.l.b16 %v1190
          %v1319 = vunpack.c.l.b16 %v1191
          %v1320 = vunpack.c.l.b16 %v1192
          %v1321 = vunpack.c.l.b16 %v1193
          %v1322 = vunpack.c.l.b16 %v1194
          %v1323 = vunpack.c.l.b16 %v1195
          %v1324 = vunpack.c.l.b16 %v1196
          %v1325 = vunpack.c.l.b16 %v1197
          %v1326 = vunpack.c.l.b16 %v1198
          %v1327 = vunpack.c.l.b16 %v1199
          %v1328 = vunpack.c.l.b16 %v1200
          %v1329 = vunpack.c.l.b16 %v1201
          %v1330 = vunpack.c.l.b16 %v1202
          %v1331 = vunpack.c.l.b16 %v1203
          %v1332 = vunpack.c.l.b16 %v1204
          %v1333 = vunpack.c.l.b16 %v1205
          %v1334 = vpack.c.b16 %v1319, %v1318
          %v1335 = vpack.c.b16 %v1321, %v1320
          %v1336 = vpack.c.b16 %v1323, %v1322
          %v1337 = vpack.c.b16 %v1325, %v1324
          %v1338 = vpack.c.b16 %v1327, %v1326
          %v1339 = vpack.c.b16 %v1329, %v1328
          %v1340 = vpack.c.b16 %v1331, %v1330
          %v1341 = vpack.c.b16 %v1333, %v1332
          %1350 = vmatprep.subr.bf16.mxu0 0
          %1351 = vmatpush1.bf16.msra.mxu0 %v1341
          %1352 = vmatprep.subr.bf16.mxu0 0
          %1353 = vmatpush1.bf16.msra.mxu0 %v1340
          %1354 = vmatprep.subr.bf16.mxu0 0
          %1355 = vmatpush1.bf16.msra.mxu0 %v1339
          %1356 = vmatprep.subr.bf16.mxu0 0
          %1357 = vmatpush1.bf16.msra.mxu0 %v1338
          %1358 = vmatprep.subr.bf16.mxu0 0
          %1359 = vmatpush1.bf16.msra.mxu0 %v1337
          %1360 = vmatprep.subr.bf16.mxu0 0
          %1361 = vmatpush1.bf16.msra.mxu0 %v1336
          %1362 = vmatprep.subr.bf16.mxu0 0
          %1363 = vmatpush1.bf16.msra.mxu0 %v1335
          %1364 = vmatprep.subr.bf16.mxu0 0
          %1365 = vmatpush1.bf16.msra.mxu0 %v1334
          %1366 = vmatprep.subr.bf16.mxu0 0
          %1367 = vmatpush2.bf16.msra.mxu0 0
          %1368 = vmatprep.subr.bf16.mxu0 0
          %1369 = vmatpush2.bf16.msra.mxu0 0
          %1370 = vmatprep.subr.bf16.mxu0 0
          %1371 = vmatpush2.bf16.msra.mxu0 0
          %1372 = vmatprep.subr.bf16.mxu0 0
          %1373 = vmatpush2.bf16.msra.mxu0 0
          %1374 = vmatprep.subr.bf16.mxu0 0
          %1375 = vmatpush2.bf16.msra.mxu0 0
          %1376 = vmatprep.subr.bf16.mxu0 0
          %1377 = vmatpush2.bf16.msra.mxu0 0
          %1378 = vmatprep.subr.bf16.mxu0 0
          %1379 = vmatpush2.bf16.msra.mxu0 0
          %1380 = vmatprep.subr.bf16.mxu0 0
          %1381 = vmatpush2.bf16.msra.mxu0 0
          %1382 = vmatprep.mubr.bf16.mxu0 0
          %1383 = vmatmul.mubr.bf16.gmra.mxu0 %v1270
          %v1384 = vpop.f32.mrf.mxu0
          %v1385 = vadd.f32 0.0, %v1384
          %v1386 = vpop.f32.mrf.mxu0
          %v1387 = vpop.f32.mrf.mxu0
          %v1388 = vadd.f32 0.0, %v1387
          %v1389 = vpop.f32.mrf.mxu0
          %1390 = vmatprep.mubr.bf16.mxu0 0
          %1391 = vmatmul.mubr.bf16.gmra.mxu0 %v1271
          %v1392 = vpop.f32.mrf.mxu0
          %v1393 = vadd.f32 0.0, %v1392
          %v1394 = vpop.f32.mrf.mxu0
          %v1395 = vpop.f32.mrf.mxu0
          %v1396 = vadd.f32 0.0, %v1395
          %v1397 = vpop.f32.mrf.mxu0
          %1398 = vmatprep.mubr.bf16.mxu0 0
          %1399 = vmatmul.mubr.bf16.gmra.mxu0 %v1272
          %v1400 = vpop.f32.mrf.mxu0
          %v1401 = vadd.f32 0.0, %v1400
          %v1402 = vpop.f32.mrf.mxu0
          %v1403 = vpop.f32.mrf.mxu0
          %v1404 = vadd.f32 0.0, %v1403
          %v1405 = vpop.f32.mrf.mxu0
          %1406 = vmatprep.mubr.bf16.mxu0 0
          %1407 = vmatmul.mubr.bf16.gmra.mxu0 %v1273
          %v1408 = vpop.f32.mrf.mxu0
          %v1409 = vadd.f32 0.0, %v1408
          %v1410 = vpop.f32.mrf.mxu0
          %v1411 = vpop.f32.mrf.mxu0
          %v1412 = vadd.f32 0.0, %v1411
          %v1413 = vpop.f32.mrf.mxu0
          %1414 = vmatprep.mubr.bf16.mxu0 0
          %1415 = vmatmul.mubr.bf16.gmra.mxu0 %v1274
          %v1416 = vpop.f32.mrf.mxu0
          %v1417 = vadd.f32 0.0, %v1416
          %v1418 = vpop.f32.mrf.mxu0
          %v1419 = vpop.f32.mrf.mxu0
          %v1420 = vadd.f32 0.0, %v1419
          %v1421 = vpop.f32.mrf.mxu0
          %1422 = vmatprep.mubr.bf16.mxu0 0
          %1423 = vmatmul.mubr.bf16.gmra.mxu0 %v1275
          %v1424 = vpop.f32.mrf.mxu0
          %v1425 = vadd.f32 0.0, %v1424
          %v1426 = vpop.f32.mrf.mxu0
          %v1427 = vpop.f32.mrf.mxu0
          %v1428 = vadd.f32 0.0, %v1427
          %v1429 = vpop.f32.mrf.mxu0
          %1430 = vmatprep.mubr.bf16.mxu0 0
          %1431 = vmatmul.mubr.bf16.gmra.mxu0 %v1276
          %v1432 = vpop.f32.mrf.mxu0
          %v1433 = vadd.f32 0.0, %v1432
          %v1434 = vpop.f32.mrf.mxu0
          %v1435 = vpop.f32.mrf.mxu0
          %v1436 = vadd.f32 0.0, %v1435
          %v1437 = vpop.f32.mrf.mxu0
          %1438 = vmatprep.mubr.bf16.mxu0 0
          %1439 = vmatmul.mubr.bf16.gmra.mxu0 %v1277
          %v1440 = vpop.f32.mrf.mxu0
          %v1441 = vadd.f32 0.0, %v1440
          %v1442 = vpop.f32.mrf.mxu0
          %v1443 = vpop.f32.mrf.mxu0
          %v1444 = vadd.f32 0.0, %v1443
          %v1445 = vpop.f32.mrf.mxu0
          %1446 = vmatprep.mubr.bf16.mxu0 0
          %1447 = vmatmul.mubr.bf16.gmra.mxu0 %v1278
          %v1448 = vpop.f32.mrf.mxu0
          %v1449 = vadd.f32 0.0, %v1448
          %v1450 = vpop.f32.mrf.mxu0
          %v1451 = vpop.f32.mrf.mxu0
          %v1452 = vadd.f32 0.0, %v1451
          %v1453 = vpop.f32.mrf.mxu0
          %1454 = vmatprep.mubr.bf16.mxu0 0
          %1455 = vmatmul.mubr.bf16.gmra.mxu0 %v1279
          %v1456 = vpop.f32.mrf.mxu0
          %v1457 = vadd.f32 0.0, %v1456
          %v1458 = vpop.f32.mrf.mxu0
          %v1459 = vpop.f32.mrf.mxu0
          %v1460 = vadd.f32 0.0, %v1459
          %v1461 = vpop.f32.mrf.mxu0
          %1462 = vmatprep.mubr.bf16.mxu0 0
          %1463 = vmatmul.mubr.bf16.gmra.mxu0 %v1280
          %v1464 = vpop.f32.mrf.mxu0
          %v1465 = vadd.f32 0.0, %v1464
          %v1466 = vpop.f32.mrf.mxu0
          %v1467 = vpop.f32.mrf.mxu0
          %v1468 = vadd.f32 0.0, %v1467
          %v1469 = vpop.f32.mrf.mxu0
          %1470 = vmatprep.mubr.bf16.mxu0 0
          %1471 = vmatmul.mubr.bf16.gmra.mxu0 %v1281
          %v1472 = vpop.f32.mrf.mxu0
          %v1473 = vadd.f32 0.0, %v1472
          %v1474 = vpop.f32.mrf.mxu0
          %v1475 = vpop.f32.mrf.mxu0
          %v1476 = vadd.f32 0.0, %v1475
          %v1477 = vpop.f32.mrf.mxu0
          %1478 = vmatprep.mubr.bf16.mxu0 0
          %1479 = vmatmul.mubr.bf16.gmra.mxu0 %v1282
          %v1480 = vpop.f32.mrf.mxu0
          %v1481 = vadd.f32 0.0, %v1480
          %v1482 = vpop.f32.mrf.mxu0
          %v1483 = vpop.f32.mrf.mxu0
          %v1484 = vadd.f32 0.0, %v1483
          %v1485 = vpop.f32.mrf.mxu0
          %1486 = vmatprep.mubr.bf16.mxu0 0
          %1487 = vmatmul.mubr.bf16.gmra.mxu0 %v1283
          %v1488 = vpop.f32.mrf.mxu0
          %v1489 = vadd.f32 0.0, %v1488
          %v1490 = vpop.f32.mrf.mxu0
          %v1491 = vpop.f32.mrf.mxu0
          %v1492 = vadd.f32 0.0, %v1491
          %v1493 = vpop.f32.mrf.mxu0
          %1494 = vmatprep.mubr.bf16.mxu0 0
          %1495 = vmatmul.mubr.bf16.gmra.mxu0 %v1284
          %v1496 = vpop.f32.mrf.mxu0
          %v1497 = vadd.f32 0.0, %v1496
          %v1498 = vpop.f32.mrf.mxu0
          %v1499 = vpop.f32.mrf.mxu0
          %v1500 = vadd.f32 0.0, %v1499
          %v1501 = vpop.f32.mrf.mxu0
          %1502 = vmatprep.mubr.bf16.mxu0 0
          %1503 = vmatmul.mubr.bf16.gmra.mxu0 %v1285
          %v1504 = vpop.f32.mrf.mxu0
          %v1505 = vadd.f32 0.0, %v1504
          %v1506 = vpop.f32.mrf.mxu0
          %v1507 = vpop.f32.mrf.mxu0
          %v1508 = vadd.f32 0.0, %v1507
          %v1509 = vpop.f32.mrf.mxu0
          %1510 = vdwg.mxu0
          %v1527 = vunpack.c.l.b16 %v1174
          %v1528 = vunpack.c.l.b16 %v1175
          %v1529 = vunpack.c.l.b16 %v1176
          %v1530 = vunpack.c.l.b16 %v1177
          %v1531 = vunpack.c.l.b16 %v1178
          %v1532 = vunpack.c.l.b16 %v1179
          %v1533 = vunpack.c.l.b16 %v1180
          %v1534 = vunpack.c.l.b16 %v1181
          %v1535 = vunpack.c.l.b16 %v1182
          %v1536 = vunpack.c.l.b16 %v1183
          %v1537 = vunpack.c.l.b16 %v1184
          %v1538 = vunpack.c.l.b16 %v1185
          %v1539 = vunpack.c.l.b16 %v1186
          %v1540 = vunpack.c.l.b16 %v1187
          %v1541 = vunpack.c.l.b16 %v1188
          %v1542 = vunpack.c.l.b16 %v1189
          %v1543 = vpack.c.b16 %v1528, %v1527
          %v1544 = vpack.c.b16 %v1530, %v1529
          %v1545 = vpack.c.b16 %v1532, %v1531
          %v1546 = vpack.c.b16 %v1534, %v1533
          %v1547 = vpack.c.b16 %v1536, %v1535
          %v1548 = vpack.c.b16 %v1538, %v1537
          %v1549 = vpack.c.b16 %v1540, %v1539
          %v1550 = vpack.c.b16 %v1542, %v1541
          %1559 = vmatprep.subr.bf16.mxu0 0
          %1560 = vmatpush1.bf16.msra.mxu0 %v1550
          %1561 = vmatprep.subr.bf16.mxu0 0
          %1562 = vmatpush1.bf16.msra.mxu0 %v1549
          %1563 = vmatprep.subr.bf16.mxu0 0
          %1564 = vmatpush1.bf16.msra.mxu0 %v1548
          %1565 = vmatprep.subr.bf16.mxu0 0
          %1566 = vmatpush1.bf16.msra.mxu0 %v1547
          %1567 = vmatprep.subr.bf16.mxu0 0
          %1568 = vmatpush1.bf16.msra.mxu0 %v1546
          %1569 = vmatprep.subr.bf16.mxu0 0
          %1570 = vmatpush1.bf16.msra.mxu0 %v1545
          %1571 = vmatprep.subr.bf16.mxu0 0
          %1572 = vmatpush1.bf16.msra.mxu0 %v1544
          %1573 = vmatprep.subr.bf16.mxu0 0
          %1574 = vmatpush1.bf16.msra.mxu0 %v1543
          %1575 = vmatprep.subr.bf16.mxu0 0
          %1576 = vmatpush2.bf16.msra.mxu0 0
          %1577 = vmatprep.subr.bf16.mxu0 0
          %1578 = vmatpush2.bf16.msra.mxu0 0
          %1579 = vmatprep.subr.bf16.mxu0 0
          %1580 = vmatpush2.bf16.msra.mxu0 0
          %1581 = vmatprep.subr.bf16.mxu0 0
          %1582 = vmatpush2.bf16.msra.mxu0 0
          %1583 = vmatprep.subr.bf16.mxu0 0
          %1584 = vmatpush2.bf16.msra.mxu0 0
          %1585 = vmatprep.subr.bf16.mxu0 0
          %1586 = vmatpush2.bf16.msra.mxu0 0
          %1587 = vmatprep.subr.bf16.mxu0 0
          %1588 = vmatpush2.bf16.msra.mxu0 0
          %1589 = vmatprep.subr.bf16.mxu0 0
          %1590 = vmatpush2.bf16.msra.mxu0 0
          %1591 = vmatprep.mubr.bf16.mxu0 0
          %1592 = vmatmul.mubr.bf16.gmra.mxu0 %v1158
          %v1593 = vpop.f32.mrf.mxu0
          %v1594 = vadd.f32 %v1385, %v1593
          %v1595 = vpop.f32.mrf.mxu0
          %v1596 = vpop.f32.mrf.mxu0
          %v1597 = vadd.f32 %v1388, %v1596
          %v1598 = vpop.f32.mrf.mxu0
          %1599 = vmatprep.mubr.bf16.mxu0 0
          %1600 = vmatmul.mubr.bf16.gmra.mxu0 %v1159
          %v1601 = vpop.f32.mrf.mxu0
          %v1602 = vadd.f32 %v1393, %v1601
          %v1603 = vpop.f32.mrf.mxu0
          %v1604 = vpop.f32.mrf.mxu0
          %v1605 = vadd.f32 %v1396, %v1604
          %v1606 = vpop.f32.mrf.mxu0
          %1607 = vmatprep.mubr.bf16.mxu0 0
          %1608 = vmatmul.mubr.bf16.gmra.mxu0 %v1160
          %v1609 = vpop.f32.mrf.mxu0
          %v1610 = vadd.f32 %v1401, %v1609
          %v1611 = vpop.f32.mrf.mxu0
          %v1612 = vpop.f32.mrf.mxu0
          %v1613 = vadd.f32 %v1404, %v1612
          %v1614 = vpop.f32.mrf.mxu0
          %1615 = vmatprep.mubr.bf16.mxu0 0
          %1616 = vmatmul.mubr.bf16.gmra.mxu0 %v1161
          %v1617 = vpop.f32.mrf.mxu0
          %v1618 = vadd.f32 %v1409, %v1617
          %v1619 = vpop.f32.mrf.mxu0
          %v1620 = vpop.f32.mrf.mxu0
          %v1621 = vadd.f32 %v1412, %v1620
          %v1622 = vpop.f32.mrf.mxu0
          %1623 = vmatprep.mubr.bf16.mxu0 0
          %1624 = vmatmul.mubr.bf16.gmra.mxu0 %v1162
          %v1625 = vpop.f32.mrf.mxu0
          %v1626 = vadd.f32 %v1417, %v1625
          %v1627 = vpop.f32.mrf.mxu0
          %v1628 = vpop.f32.mrf.mxu0
          %v1629 = vadd.f32 %v1420, %v1628
          %v1630 = vpop.f32.mrf.mxu0
          %1631 = vmatprep.mubr.bf16.mxu0 0
          %1632 = vmatmul.mubr.bf16.gmra.mxu0 %v1163
          %v1633 = vpop.f32.mrf.mxu0
          %v1634 = vadd.f32 %v1425, %v1633
          %v1635 = vpop.f32.mrf.mxu0
          %v1636 = vpop.f32.mrf.mxu0
          %v1637 = vadd.f32 %v1428, %v1636
          %v1638 = vpop.f32.mrf.mxu0
          %1639 = vmatprep.mubr.bf16.mxu0 0
          %1640 = vmatmul.mubr.bf16.gmra.mxu0 %v1164
          %v1641 = vpop.f32.mrf.mxu0
          %v1642 = vadd.f32 %v1433, %v1641
          %v1643 = vpop.f32.mrf.mxu0
          %v1644 = vpop.f32.mrf.mxu0
          %v1645 = vadd.f32 %v1436, %v1644
          %v1646 = vpop.f32.mrf.mxu0
          %1647 = vmatprep.mubr.bf16.mxu0 0
          %1648 = vmatmul.mubr.bf16.gmra.mxu0 %v1165
          %v1649 = vpop.f32.mrf.mxu0
          %v1650 = vadd.f32 %v1441, %v1649
          %v1651 = vpop.f32.mrf.mxu0
          %v1652 = vpop.f32.mrf.mxu0
          %v1653 = vadd.f32 %v1444, %v1652
          %v1654 = vpop.f32.mrf.mxu0
          %1655 = vmatprep.mubr.bf16.mxu0 0
          %1656 = vmatmul.mubr.bf16.gmra.mxu0 %v1166
          %v1657 = vpop.f32.mrf.mxu0
          %v1658 = vadd.f32 %v1449, %v1657
          %v1659 = vpop.f32.mrf.mxu0
          %v1660 = vpop.f32.mrf.mxu0
          %v1661 = vadd.f32 %v1452, %v1660
          %v1662 = vpop.f32.mrf.mxu0
          %1663 = vmatprep.mubr.bf16.mxu0 0
          %1664 = vmatmul.mubr.bf16.gmra.mxu0 %v1167
          %v1665 = vpop.f32.mrf.mxu0
          %v1666 = vadd.f32 %v1457, %v1665
          %v1667 = vpop.f32.mrf.mxu0
          %v1668 = vpop.f32.mrf.mxu0
          %v1669 = vadd.f32 %v1460, %v1668
          %v1670 = vpop.f32.mrf.mxu0
          %1671 = vmatprep.mubr.bf16.mxu0 0
          %1672 = vmatmul.mubr.bf16.gmra.mxu0 %v1168
          %v1673 = vpop.f32.mrf.mxu0
          %v1674 = vadd.f32 %v1465, %v1673
          %v1675 = vpop.f32.mrf.mxu0
          %v1676 = vpop.f32.mrf.mxu0
          %v1677 = vadd.f32 %v1468, %v1676
          %v1678 = vpop.f32.mrf.mxu0
          %1679 = vmatprep.mubr.bf16.mxu0 0
          %1680 = vmatmul.mubr.bf16.gmra.mxu0 %v1169
          %v1681 = vpop.f32.mrf.mxu0
          %v1682 = vadd.f32 %v1473, %v1681
          %v1683 = vpop.f32.mrf.mxu0
          %v1684 = vpop.f32.mrf.mxu0
          %v1685 = vadd.f32 %v1476, %v1684
          %v1686 = vpop.f32.mrf.mxu0
          %1687 = vmatprep.mubr.bf16.mxu0 0
          %1688 = vmatmul.mubr.bf16.gmra.mxu0 %v1170
          %v1689 = vpop.f32.mrf.mxu0
          %v1690 = vadd.f32 %v1481, %v1689
          %v1691 = vpop.f32.mrf.mxu0
          %v1692 = vpop.f32.mrf.mxu0
          %v1693 = vadd.f32 %v1484, %v1692
          %v1694 = vpop.f32.mrf.mxu0
          %1695 = vmatprep.mubr.bf16.mxu0 0
          %1696 = vmatmul.mubr.bf16.gmra.mxu0 %v1171
          %v1697 = vpop.f32.mrf.mxu0
          %v1698 = vadd.f32 %v1489, %v1697
          %v1699 = vpop.f32.mrf.mxu0
          %v1700 = vpop.f32.mrf.mxu0
          %v1701 = vadd.f32 %v1492, %v1700
          %v1702 = vpop.f32.mrf.mxu0
          %1703 = vmatprep.mubr.bf16.mxu0 0
          %1704 = vmatmul.mubr.bf16.gmra.mxu0 %v1172
          %v1705 = vpop.f32.mrf.mxu0
          %v1706 = vadd.f32 %v1497, %v1705
          %v1707 = vpop.f32.mrf.mxu0
          %v1708 = vpop.f32.mrf.mxu0
          %v1709 = vadd.f32 %v1500, %v1708
          %v1710 = vpop.f32.mrf.mxu0
          %1711 = vmatprep.mubr.bf16.mxu0 0
          %1712 = vmatmul.mubr.bf16.gmra.mxu0 %v1173
          %v1713 = vpop.f32.mrf.mxu0
          %v1714 = vadd.f32 %v1505, %v1713
          %v1715 = vpop.f32.mrf.mxu0
          %v1716 = vpop.f32.mrf.mxu0
          %v1717 = vadd.f32 %v1508, %v1716
          %v1718 = vpop.f32.mrf.mxu0
          %1719 = vdwg.mxu0
          %v1720 = vld [vmem:[%s5] sm:$0x1]
          %v1722 = vlaneseq
          %v1723 = vshrl.u32 %v1722, 7
          %v1724 = vsub.s32 0, %v1723
          %v1725 = vrot.slane %v1720, %v1724
          %v1727 = vadd.f32 %v1594, %v1725
          %v1728 = vadd.f32 %v1597, %v1725
          %v1729 = vadd.f32 %v1602, %v1725
          %v1730 = vadd.f32 %v1605, %v1725
          %v1731 = vadd.f32 %v1610, %v1725
          %v1732 = vadd.f32 %v1613, %v1725
          %v1733 = vadd.f32 %v1618, %v1725
          %v1734 = vadd.f32 %v1621, %v1725
          %v1735 = vadd.f32 %v1626, %v1725
          %v1736 = vadd.f32 %v1629, %v1725
          %v1737 = vadd.f32 %v1634, %v1725
          %v1738 = vadd.f32 %v1637, %v1725
          %v1739 = vadd.f32 %v1642, %v1725
          %v1740 = vadd.f32 %v1645, %v1725
          %v1741 = vadd.f32 %v1650, %v1725
          %v1742 = vadd.f32 %v1653, %v1725
          %v1743 = vadd.f32 %v1658, %v1725
          %v1744 = vadd.f32 %v1661, %v1725
          %v1745 = vadd.f32 %v1666, %v1725
          %v1746 = vadd.f32 %v1669, %v1725
          %v1747 = vadd.f32 %v1674, %v1725
          %v1748 = vadd.f32 %v1677, %v1725
          %v1749 = vadd.f32 %v1682, %v1725
          %v1750 = vadd.f32 %v1685, %v1725
          %v1751 = vadd.f32 %v1690, %v1725
          %v1752 = vadd.f32 %v1693, %v1725
          %v1753 = vadd.f32 %v1698, %v1725
          %v1754 = vadd.f32 %v1701, %v1725
          %v1755 = vadd.f32 %v1706, %v1725
          %v1756 = vadd.f32 %v1709, %v1725
          %v1757 = vadd.f32 %v1714, %v1725
          %v1758 = vadd.f32 %v1717, %v1725
          %v1759 = vunpack.c.l.bf16 %v1094
          %v1760 = vunpack.c.l.bf16 %v1095
          %v1761 = vunpack.c.l.bf16 %v1096
          %v1762 = vunpack.c.l.bf16 %v1097
          %v1763 = vunpack.c.l.bf16 %v1098
          %v1764 = vunpack.c.l.bf16 %v1099
          %v1765 = vunpack.c.l.bf16 %v1100
          %v1766 = vunpack.c.l.bf16 %v1101
          %v1767 = vunpack.c.l.bf16 %v1102
          %v1768 = vunpack.c.l.bf16 %v1103
          %v1769 = vunpack.c.l.bf16 %v1104
          %v1770 = vunpack.c.l.bf16 %v1105
          %v1771 = vunpack.c.l.bf16 %v1106
          %v1772 = vunpack.c.l.bf16 %v1107
          %v1773 = vunpack.c.l.bf16 %v1108
          %v1774 = vunpack.c.l.bf16 %v1109
          %v1775 = vunpack.c.l.bf16 %v1110
          %v1776 = vunpack.c.l.bf16 %v1111
          %v1777 = vunpack.c.l.bf16 %v1112
          %v1778 = vunpack.c.l.bf16 %v1113
          %v1779 = vunpack.c.l.bf16 %v1114
          %v1780 = vunpack.c.l.bf16 %v1115
          %v1781 = vunpack.c.l.bf16 %v1116
          %v1782 = vunpack.c.l.bf16 %v1117
          %v1783 = vunpack.c.l.bf16 %v1118
          %v1784 = vunpack.c.l.bf16 %v1119
          %v1785 = vunpack.c.l.bf16 %v1120
          %v1786 = vunpack.c.l.bf16 %v1121
          %v1787 = vunpack.c.l.bf16 %v1122
          %v1788 = vunpack.c.l.bf16 %v1123
          %v1789 = vunpack.c.l.bf16 %v1124
          %v1790 = vunpack.c.l.bf16 %v1125
          %v1791 = vadd.f32 %v1759, %v1727
          %v1792 = vadd.f32 %v1760, %v1728
          %v1793 = vadd.f32 %v1761, %v1729
          %v1794 = vadd.f32 %v1762, %v1730
          %v1795 = vadd.f32 %v1763, %v1731
          %v1796 = vadd.f32 %v1764, %v1732
          %v1797 = vadd.f32 %v1765, %v1733
          %v1798 = vadd.f32 %v1766, %v1734
          %v1799 = vadd.f32 %v1767, %v1735
          %v1800 = vadd.f32 %v1768, %v1736
          %v1801 = vadd.f32 %v1769, %v1737
          %v1802 = vadd.f32 %v1770, %v1738
          %v1803 = vadd.f32 %v1771, %v1739
          %v1804 = vadd.f32 %v1772, %v1740
          %v1805 = vadd.f32 %v1773, %v1741
          %v1806 = vadd.f32 %v1774, %v1742
          %v1807 = vadd.f32 %v1775, %v1743
          %v1808 = vadd.f32 %v1776, %v1744
          %v1809 = vadd.f32 %v1777, %v1745
          %v1810 = vadd.f32 %v1778, %v1746
          %v1811 = vadd.f32 %v1779, %v1747
          %v1812 = vadd.f32 %v1780, %v1748
          %v1813 = vadd.f32 %v1781, %v1749
          %v1814 = vadd.f32 %v1782, %v1750
          %v1815 = vadd.f32 %v1783, %v1751
          %v1816 = vadd.f32 %v1784, %v1752
          %v1817 = vadd.f32 %v1785, %v1753
          %v1818 = vadd.f32 %v1786, %v1754
          %v1819 = vadd.f32 %v1787, %v1755
          %v1820 = vadd.f32 %v1788, %v1756
          %v1821 = vadd.f32 %v1789, %v1757
          %v1822 = vadd.f32 %v1790, %v1758
          %v1823 = vmax.f32 %v1791, 0.0
          %v1824 = vmax.f32 %v1792, 0.0
          %v1825 = vmax.f32 %v1793, 0.0
          %v1826 = vmax.f32 %v1794, 0.0
          %v1827 = vmax.f32 %v1795, 0.0
          %v1828 = vmax.f32 %v1796, 0.0
          %v1829 = vmax.f32 %v1797, 0.0
          %v1830 = vmax.f32 %v1798, 0.0
          %v1831 = vmax.f32 %v1799, 0.0
          %v1832 = vmax.f32 %v1800, 0.0
          %v1833 = vmax.f32 %v1801, 0.0
          %v1834 = vmax.f32 %v1802, 0.0
          %v1835 = vmax.f32 %v1803, 0.0
          %v1836 = vmax.f32 %v1804, 0.0
          %v1837 = vmax.f32 %v1805, 0.0
          %v1838 = vmax.f32 %v1806, 0.0
          %v1839 = vmax.f32 %v1807, 0.0
          %v1840 = vmax.f32 %v1808, 0.0
          %v1841 = vmax.f32 %v1809, 0.0
          %v1842 = vmax.f32 %v1810, 0.0
          %v1843 = vmax.f32 %v1811, 0.0
          %v1844 = vmax.f32 %v1812, 0.0
          %v1845 = vmax.f32 %v1813, 0.0
          %v1846 = vmax.f32 %v1814, 0.0
          %v1847 = vmax.f32 %v1815, 0.0
          %v1848 = vmax.f32 %v1816, 0.0
          %v1849 = vmax.f32 %v1817, 0.0
          %v1850 = vmax.f32 %v1818, 0.0
          %v1851 = vmax.f32 %v1819, 0.0
          %v1852 = vmax.f32 %v1820, 0.0
          %v1853 = vmax.f32 %v1821, 0.0
          %v1854 = vmax.f32 %v1822, 0.0
          %v1855 = vpack.c.bf16 %v1824, %v1823
          %v1856 = vpack.c.bf16 %v1826, %v1825
          %v1857 = vpack.c.bf16 %v1828, %v1827
          %v1858 = vpack.c.bf16 %v1830, %v1829
          %v1859 = vpack.c.bf16 %v1832, %v1831
          %v1860 = vpack.c.bf16 %v1834, %v1833
          %v1861 = vpack.c.bf16 %v1836, %v1835
          %v1862 = vpack.c.bf16 %v1838, %v1837
          %v1863 = vpack.c.bf16 %v1840, %v1839
          %v1864 = vpack.c.bf16 %v1842, %v1841
          %v1865 = vpack.c.bf16 %v1844, %v1843
          %v1866 = vpack.c.bf16 %v1846, %v1845
          %v1867 = vpack.c.bf16 %v1848, %v1847
          %v1868 = vpack.c.bf16 %v1850, %v1849
          %v1869 = vpack.c.bf16 %v1852, %v1851
          %v1870 = vpack.c.bf16 %v1854, %v1853
          %v1887 = vunpack.c.l.b16 %v1855
          %v1888 = vunpack.c.h.b16 %v1855
          %v1889 = vunpack.c.l.b16 %v1856
          %v1890 = vunpack.c.h.b16 %v1856
          %v1891 = vunpack.c.l.b16 %v1857
          %v1892 = vunpack.c.h.b16 %v1857
          %v1893 = vunpack.c.l.b16 %v1858
          %v1894 = vunpack.c.h.b16 %v1858
          %v1895 = vunpack.c.l.b16 %v1859
          %v1896 = vunpack.c.h.b16 %v1859
          %v1897 = vunpack.c.l.b16 %v1860
          %v1898 = vunpack.c.h.b16 %v1860
          %v1899 = vunpack.c.l.b16 %v1861
          %v1900 = vunpack.c.h.b16 %v1861
          %v1901 = vunpack.c.l.b16 %v1862
          %v1902 = vunpack.c.h.b16 %v1862
          %v1903 = vunpack.c.l.b16 %v1863
          %v1904 = vunpack.c.h.b16 %v1863
          %v1905 = vunpack.c.l.b16 %v1864
          %v1906 = vunpack.c.h.b16 %v1864
          %v1907 = vunpack.c.l.b16 %v1865
          %v1908 = vunpack.c.h.b16 %v1865
          %v1909 = vunpack.c.l.b16 %v1866
          %v1910 = vunpack.c.h.b16 %v1866
          %v1911 = vunpack.c.l.b16 %v1867
          %v1912 = vunpack.c.h.b16 %v1867
          %v1913 = vunpack.c.l.b16 %v1868
          %v1914 = vunpack.c.h.b16 %v1868
          %v1915 = vunpack.c.l.b16 %v1869
          %v1916 = vunpack.c.h.b16 %v1869
          %v1917 = vunpack.c.l.b16 %v1870
          %v1918 = vunpack.c.h.b16 %v1870
          %v1919 = vpack.c.b16 %v1887, %v1887
          %v1920 = vpack.c.b16 %v1888, %v1888
          %v1921 = vpack.c.b16 %v1889, %v1889
          %v1922 = vpack.c.b16 %v1890, %v1890
          %v1923 = vpack.c.b16 %v1891, %v1891
          %v1924 = vpack.c.b16 %v1892, %v1892
          %v1925 = vpack.c.b16 %v1893, %v1893
          %v1926 = vpack.c.b16 %v1894, %v1894
          %v1927 = vpack.c.b16 %v1895, %v1895
          %v1928 = vpack.c.b16 %v1896, %v1896
          %v1929 = vpack.c.b16 %v1897, %v1897
          %v1930 = vpack.c.b16 %v1898, %v1898
          %v1931 = vpack.c.b16 %v1899, %v1899
          %v1932 = vpack.c.b16 %v1900, %v1900
          %v1933 = vpack.c.b16 %v1901, %v1901
          %v1934 = vpack.c.b16 %v1902, %v1902
          %v1935 = vpack.c.b16 %v1903, %v1903
          %v1936 = vpack.c.b16 %v1904, %v1904
          %v1937 = vpack.c.b16 %v1905, %v1905
          %v1938 = vpack.c.b16 %v1906, %v1906
          %v1939 = vpack.c.b16 %v1907, %v1907
          %v1940 = vpack.c.b16 %v1908, %v1908
          %v1941 = vpack.c.b16 %v1909, %v1909
          %v1942 = vpack.c.b16 %v1910, %v1910
          %v1943 = vpack.c.b16 %v1911, %v1911
          %v1944 = vpack.c.b16 %v1912, %v1912
          %v1945 = vpack.c.b16 %v1913, %v1913
          %v1946 = vpack.c.b16 %v1914, %v1914
          %v1947 = vpack.c.b16 %v1915, %v1915
          %v1948 = vpack.c.b16 %v1916, %v1916
          %v1949 = vpack.c.b16 %v1917, %v1917
          %v1950 = vpack.c.b16 %v1918, %v1918
          %1983 = vst [vmem:[%s474] sm:$0xf] %v1919
          %1984 = vst [vmem:[%s474 + $0x4] sm:$0xf] %v1920
          %1985 = vst [vmem:[%s474 + $0x8] sm:$0xf] %v1921
          %1986 = vst [vmem:[%s474 + $0xc] sm:$0xf] %v1922
          %1987 = vst [vmem:[%s474 + $0x10] sm:$0xf] %v1923
          %1988 = vst [vmem:[%s474 + $0x14] sm:$0xf] %v1924
          %1989 = vst [vmem:[%s474 + $0x18] sm:$0xf] %v1925
          %1990 = vst [vmem:[%s474 + $0x1c] sm:$0xf] %v1926
          %1991 = vst [vmem:[%s474 + $0x20] sm:$0xf] %v1927
          %1992 = vst [vmem:[%s474 + $0x24] sm:$0xf] %v1928
          %1993 = vst [vmem:[%s474 + $0x28] sm:$0xf] %v1929
          %1994 = vst [vmem:[%s474 + $0x2c] sm:$0xf] %v1930
          %1995 = vst [vmem:[%s474 + $0x30] sm:$0xf] %v1931
          %1996 = vst [vmem:[%s474 + $0x34] sm:$0xf] %v1932
          %1997 = vst [vmem:[%s474 + $0x38] sm:$0xf] %v1933
          %1998 = vst [vmem:[%s474 + $0x3c] sm:$0xf] %v1934
          %1999 = vst [vmem:[%s474 + $0x40] sm:$0xf] %v1935
          %2000 = vst [vmem:[%s474 + $0x44] sm:$0xf] %v1936
          %2001 = vst [vmem:[%s474 + $0x48] sm:$0xf] %v1937
          %2002 = vst [vmem:[%s474 + $0x4c] sm:$0xf] %v1938
          %2003 = vst [vmem:[%s474 + $0x50] sm:$0xf] %v1939
          %2004 = vst [vmem:[%s474 + $0x54] sm:$0xf] %v1940
          %2005 = vst [vmem:[%s474 + $0x58] sm:$0xf] %v1941
          %2006 = vst [vmem:[%s474 + $0x5c] sm:$0xf] %v1942
          %2007 = vst [vmem:[%s474 + $0x60] sm:$0xf] %v1943
          %2008 = vst [vmem:[%s474 + $0x64] sm:$0xf] %v1944
          %2009 = vst [vmem:[%s474 + $0x68] sm:$0xf] %v1945
          %2010 = vst [vmem:[%s474 + $0x6c] sm:$0xf] %v1946
          %2011 = vst [vmem:[%s474 + $0x70] sm:$0xf] %v1947
          %2012 = vst [vmem:[%s474 + $0x74] sm:$0xf] %v1948
          %2013 = vst [vmem:[%s474 + $0x78] sm:$0xf] %v1949
          %2014 = vst [vmem:[%s474 + $0x7c] sm:$0xf] %v1950
        $region90: #{node_level_gnn_forward.4} parent=77 // pred_fallthru
          _
        %s2015 = smul.u32 32, %s21
        %p2016 = scmp.lt.s32.totalorder %s2015, 63
        %s2017 = scalar_select %p2016, %s2015, 63
        %s2018 = smul.addr %s2017, 4
        %s2019 = scalar_lea.vmem %s6, %s2018
        // Predicated region
        $region91: #{node_level_gnn_forward.4} parent=77 // pred_check
          %p2020 = pneg %p190
        $region92: #{node_level_gnn_forward.4} parent=77 // pred_check_branch
          %2022 = sbr.rel (%p2020) target = $region94
        $region93: #{node_level_gnn_forward.4} parent=77 // pred_region
          %s2023 = smul.u32 32, %s21
        $region94: #{node_level_gnn_forward.4} parent=77 // pred_fallthru
          _
      $region78: #{node_level_gnn_forward.4} parent=5 // pred_fallthru
        _
      %p2024 = scmp.le.s32.totalorder 2, %s12
      // Predicated region
      $region95: #{node_level_gnn_forward.4} parent=5 // pred_check
        %p2025 = pneg %p2024
      $region96: #{node_level_gnn_forward.4} parent=5 // pred_check_branch
        %2027 = sbr.rel (%p2025) target = $region98
      $region97: #{node_level_gnn_forward.4} parent=5 // pred_region
        %s2028 = ssub.s32 %s12, 2
        // Predicated region
        $region99: #{node_level_gnn_forward.4} parent=97 // pred_check
          %p2029 = pneg %p196
        $region100: #{node_level_gnn_forward.4} parent=97 // pred_check_branch
          %2031 = sbr.rel (%p2029) target = $region102
        $region101: #{node_level_gnn_forward.4} parent=97 // pred_region
          %s2032 = smul.u32 32, %s23
          %p2033 = scmp.lt.s32.totalorder %s2032, 63
          %s2034 = scalar_select %p2033, %s2032, 63
          %s2035 = smul.addr %s2034, 4
          %s2036 = scalar_lea.vmem %s6, %s2035
        $region102: #{node_level_gnn_forward.4} parent=97 // pred_fallthru
          _
      $region98: #{node_level_gnn_forward.4} parent=5 // pred_fallthru
        _
    $region6: #{node_level_gnn_forward.4} parent=1 // loop_footer
      %s16 = sadd.s32 1, %s12
    $region7: #{node_level_gnn_forward.4} parent=1 // loop_footer_branch
      %11 = sbr.rel target = $region3
    $region8: #{node_level_gnn_forward.4} parent=1 // loop_exit
      _

// kernel: node_level_gnn_forward.5
$region0: #{node_level_gnn_forward.5}
  #allocation0 [shape = 'u32[]', space=smem, size = 0x4, offset = 0x4, fixed_abs, tag = 'smem constant byte address 0x4 - core index']
  #allocation1 [shape = 'u32[144,128]{1,0:T(1,128)}', space=vmem, size = 0x12000, scoped, tag = 'internal scratch']
  #allocation2 [shape = 'f32[256,128]{1,0:T(8,128)}', space=vmem, size = 0x20000, scoped, tag = 'scratch operand']
  %s0 = inlined_call_operand.vmem [shape: bf16[512,512], index: 0, kind: input, shape index: {}]
  %s1 = inlined_call_operand.vmem [shape: bf16[512,128], index: 1, kind: input, shape index: {}, may-alias: {1,2}]
  %s2 = inlined_call_operand.vmem [shape: bf16[512,128], index: 2, kind: input, shape index: {}, may-alias: {1,2}]
  %s3 = inlined_call_operand.vmem [shape: bf16[128,128], index: 3, kind: input, shape index: {}]
  %s4 = inlined_call_operand.vmem [shape: bf16[128,128], index: 4, kind: input, shape index: {}]
  %s5 = inlined_call_operand.vmem [shape: f32[1,128], index: 5, kind: input, shape index: {}]
  %s6 = inlined_call_operand.vmem [shape: bf16[128,128], index: 6, kind: input, shape index: {}]
  %s7 = inlined_call_operand.vmem [shape: f32[1,128], index: 7, kind: input, shape index: {}]
  %s8 = inlined_call_operand.vmem [shape: f32[512,128], index: 8, kind: output, shape index: {}]
  %s9 = sld [smem:[#allocation0]]
  $region111: #{node_level_gnn_forward.5} parent=0
    _
  %s11 = ssub.s32 1, %s9
  %s12 = scalar_select 0, %s11, %s9
  $region1: #{node_level_gnn_forward.5} parent=0
    #allocation3 [shape = 'u8[262144]{0}', space=vmem, size = 0x40000, scoped, tag = 'input window, operand 0']
    loop: start=0, step=1, limit=6
    $region2: #{node_level_gnn_forward.5} parent=1 // loop_pre_header
      _
    $region3: #{node_level_gnn_forward.5} parent=1 // loop_header
      %s14 = sphi 0, %s18
      %p15 = scmp.ge.s32.totalorder %s14, 6
      %s21 = sphi 0, %s33
      %s22 = sphi 0, %s29
      %s23 = sphi 0, %s21
      %s24 = sphi 0, %s22
      %s25 = sphi 0, %s23
      %s26 = sphi 0, %s24
      %s38 = sphi 0, %s40
      %s41 = sphi 0, %s38
      %s42 = sphi 0, %s41
      %s58 = sphi 0, %s42
      %s64 = sphi 0, %s66
      %s67 = sphi 0, %s64
      %s68 = sphi 0, %s67
      %s84 = sphi 0, %s68
      %s90 = sphi 0, %s92
      %s93 = sphi 0, %s90
      %s94 = sphi 0, %s93
      %s110 = sphi 0, %s94
      %s114 = sphi 0, %s114
      %s116 = sphi 0, %s114
      %s117 = sphi 0, %s116
      %s131 = sphi 0, %s117
      %s135 = sphi 0, %s135
      %s137 = sphi 0, %s135
      %s138 = sphi 0, %s137
      %s152 = sphi 0, %s138
      %s156 = sphi 0, %s156
      %s158 = sphi 0, %s156
      %s159 = sphi 0, %s158
      %s173 = sphi 0, %s159
      %s177 = sphi 0, %s177
      %s179 = sphi 0, %s177
      %s180 = sphi 0, %s179
      %s194 = sphi 0, %s180
      %s198 = sphi 0, %s198
      %s200 = sphi 0, %s198
      %s201 = sphi 0, %s200
      %s215 = sphi 0, %s201
      %s221 = sphi 0, %s223
      %s224 = sphi 0, %s221
      %s225 = sphi 0, %s224
      %s241 = sphi 0, %s225
    $region4: #{node_level_gnn_forward.5} parent=1 // loop_header_branch
      %17 = sbr.rel (%p15) target = $region8
    $region5: #{node_level_gnn_forward.5} parent=1 // loop_body
      %s19 = ssub.s32 %s14, 1
      %s20 = ssub.s32 %s14, 2
      %s27 = sadd.s32 1, %s22
      %p28 = scmp.ge.s32.totalorder %s27, 2
      %s29 = scalar_select %p28, 0, %s27
      %s30 = sadd.s32 1, %s21
      %s31 = scalar_select %p28, %s30, %s21
      %p32 = scmp.ge.s32.totalorder %s31, 2
      %s33 = scalar_select %p32, 0, %s31
      %s34 = ssub.s32 %s21, %s33
      %s35 = ssub.s32 %s22, %s29
      %s36 = sor.u32 %s34, %s35
      %p37 = scmp.eq.s32.totalorder %s36, 0
      %s39 = sadd.s32 %s38, 1
      %s40 = scalar_select %p37, %s38, %s39
      %p43 = pneg %p37
      %p44 = scmp.eq.s32.totalorder %s14, 3
      %p45 = por %p43, %p44
      %p46 = scmp.ne.s32.totalorder %s38, %s41
      %p47 = scmp.eq.s32.totalorder %s14, 0
      %p48 = por %p46, %p47
      %p49 = scmp.ne.s32.totalorder %s38, %s41
      %p50 = scmp.eq.s32.totalorder %s19, 3
      %p51 = por %p49, %p50
      %p52 = scmp.ne.s32.totalorder %s41, %s42
      %p53 = scmp.eq.s32.totalorder %s19, 0
      %p54 = por %p52, %p53
      %p55 = scmp.ne.s32.totalorder %s41, %s42
      %p56 = scmp.eq.s32.totalorder %s20, 3
      %p57 = por %p55, %p56
      %p59 = scmp.ne.s32.totalorder %s42, %s58
      %p60 = scmp.eq.s32.totalorder %s20, 0
      %p61 = por %p59, %p60
      %s62 = ssub.s32 %s22, %s29
      %p63 = scmp.eq.s32.totalorder %s62, 0
      %s65 = sadd.s32 %s64, 1
      %s66 = scalar_select %p63, %s64, %s65
      %p69 = pneg %p63
      %p70 = scmp.eq.s32.totalorder %s14, 3
      %p71 = por %p69, %p70
      %p72 = scmp.ne.s32.totalorder %s64, %s67
      %p73 = scmp.eq.s32.totalorder %s14, 0
      %p74 = por %p72, %p73
      %p75 = scmp.ne.s32.totalorder %s64, %s67
      %p76 = scmp.eq.s32.totalorder %s19, 3
      %p77 = por %p75, %p76
      %p78 = scmp.ne.s32.totalorder %s67, %s68
      %p79 = scmp.eq.s32.totalorder %s19, 0
      %p80 = por %p78, %p79
      %p81 = scmp.ne.s32.totalorder %s67, %s68
      %p82 = scmp.eq.s32.totalorder %s20, 3
      %p83 = por %p81, %p82
      %p85 = scmp.ne.s32.totalorder %s68, %s84
      %p86 = scmp.eq.s32.totalorder %s20, 0
      %p87 = por %p85, %p86
      %s88 = ssub.s32 %s21, %s33
      %p89 = scmp.eq.s32.totalorder %s88, 0
      %s91 = sadd.s32 %s90, 1
      %s92 = scalar_select %p89, %s90, %s91
      %p95 = pneg %p89
      %p96 = scmp.eq.s32.totalorder %s14, 3
      %p97 = por %p95, %p96
      %p98 = scmp.ne.s32.totalorder %s90, %s93
      %p99 = scmp.eq.s32.totalorder %s14, 0
      %p100 = por %p98, %p99
      %p101 = scmp.ne.s32.totalorder %s90, %s93
      %p102 = scmp.eq.s32.totalorder %s19, 3
      %p103 = por %p101, %p102
      %p104 = scmp.ne.s32.totalorder %s93, %s94
      %p105 = scmp.eq.s32.totalorder %s19, 0
      %p106 = por %p104, %p105
      %p107 = scmp.ne.s32.totalorder %s93, %s94
      %p108 = scmp.eq.s32.totalorder %s20, 3
      %p109 = por %p107, %p108
      %p111 = scmp.ne.s32.totalorder %s94, %s110
      %p112 = scmp.eq.s32.totalorder %s20, 0
      %p113 = por %p111, %p112
      %s115 = sadd.s32 %s114, 1
      %p118 = scmp.eq.s32.totalorder %s14, 3
      %p119 = scmp.ne.s32.totalorder %s114, %s116
      %p120 = scmp.eq.s32.totalorder %s14, 0
      %p121 = por %p119, %p120
      %p122 = scmp.ne.s32.totalorder %s114, %s116
      %p123 = scmp.eq.s32.totalorder %s19, 3
      %p124 = por %p122, %p123
      %p125 = scmp.ne.s32.totalorder %s116, %s117
      %p126 = scmp.eq.s32.totalorder %s19, 0
      %p127 = por %p125, %p126
      %p128 = scmp.ne.s32.totalorder %s116, %s117
      %p129 = scmp.eq.s32.totalorder %s20, 3
      %p130 = por %p128, %p129
      %p132 = scmp.ne.s32.totalorder %s117, %s131
      %p133 = scmp.eq.s32.totalorder %s20, 0
      %p134 = por %p132, %p133
      %s136 = sadd.s32 %s135, 1
      %p139 = scmp.eq.s32.totalorder %s14, 3
      %p140 = scmp.ne.s32.totalorder %s135, %s137
      %p141 = scmp.eq.s32.totalorder %s14, 0
      %p142 = por %p140, %p141
      %p143 = scmp.ne.s32.totalorder %s135, %s137
      %p144 = scmp.eq.s32.totalorder %s19, 3
      %p145 = por %p143, %p144
      %p146 = scmp.ne.s32.totalorder %s137, %s138
      %p147 = scmp.eq.s32.totalorder %s19, 0
      %p148 = por %p146, %p147
      %p149 = scmp.ne.s32.totalorder %s137, %s138
      %p150 = scmp.eq.s32.totalorder %s20, 3
      %p151 = por %p149, %p150
      %p153 = scmp.ne.s32.totalorder %s138, %s152
      %p154 = scmp.eq.s32.totalorder %s20, 0
      %p155 = por %p153, %p154
      %s157 = sadd.s32 %s156, 1
      %p160 = scmp.eq.s32.totalorder %s14, 3
      %p161 = scmp.ne.s32.totalorder %s156, %s158
      %p162 = scmp.eq.s32.totalorder %s14, 0
      %p163 = por %p161, %p162
      %p164 = scmp.ne.s32.totalorder %s156, %s158
      %p165 = scmp.eq.s32.totalorder %s19, 3
      %p166 = por %p164, %p165
      %p167 = scmp.ne.s32.totalorder %s158, %s159
      %p168 = scmp.eq.s32.totalorder %s19, 0
      %p169 = por %p167, %p168
      %p170 = scmp.ne.s32.totalorder %s158, %s159
      %p171 = scmp.eq.s32.totalorder %s20, 3
      %p172 = por %p170, %p171
      %p174 = scmp.ne.s32.totalorder %s159, %s173
      %p175 = scmp.eq.s32.totalorder %s20, 0
      %p176 = por %p174, %p175
      %s178 = sadd.s32 %s177, 1
      %p181 = scmp.eq.s32.totalorder %s14, 3
      %p182 = scmp.ne.s32.totalorder %s177, %s179
      %p183 = scmp.eq.s32.totalorder %s14, 0
      %p184 = por %p182, %p183
      %p185 = scmp.ne.s32.totalorder %s177, %s179
      %p186 = scmp.eq.s32.totalorder %s19, 3
      %p187 = por %p185, %p186
      %p188 = scmp.ne.s32.totalorder %s179, %s180
      %p189 = scmp.eq.s32.totalorder %s19, 0
      %p190 = por %p188, %p189
      %p191 = scmp.ne.s32.totalorder %s179, %s180
      %p192 = scmp.eq.s32.totalorder %s20, 3
      %p193 = por %p191, %p192
      %p195 = scmp.ne.s32.totalorder %s180, %s194
      %p196 = scmp.eq.s32.totalorder %s20, 0
      %p197 = por %p195, %p196
      %s199 = sadd.s32 %s198, 1
      %p202 = scmp.eq.s32.totalorder %s14, 3
      %p203 = scmp.ne.s32.totalorder %s198, %s200
      %p204 = scmp.eq.s32.totalorder %s14, 0
      %p205 = por %p203, %p204
      %p206 = scmp.ne.s32.totalorder %s198, %s200
      %p207 = scmp.eq.s32.totalorder %s19, 3
      %p208 = por %p206, %p207
      %p209 = scmp.ne.s32.totalorder %s200, %s201
      %p210 = scmp.eq.s32.totalorder %s19, 0
      %p211 = por %p209, %p210
      %p212 = scmp.ne.s32.totalorder %s200, %s201
      %p213 = scmp.eq.s32.totalorder %s20, 3
      %p214 = por %p212, %p213
      %p216 = scmp.ne.s32.totalorder %s201, %s215
      %p217 = scmp.eq.s32.totalorder %s20, 0
      %p218 = por %p216, %p217
      %s219 = ssub.s32 %s21, %s33
      %p220 = scmp.eq.s32.totalorder %s219, 0
      %s222 = sadd.s32 %s221, 1
      %s223 = scalar_select %p220, %s221, %s222
      %p226 = pneg %p220
      %p227 = scmp.eq.s32.totalorder %s14, 3
      %p228 = por %p226, %p227
      %p229 = scmp.ne.s32.totalorder %s221, %s224
      %p230 = scmp.eq.s32.totalorder %s14, 0
      %p231 = por %p229, %p230
      %p232 = scmp.ne.s32.totalorder %s221, %s224
      %p233 = scmp.eq.s32.totalorder %s19, 3
      %p234 = por %p232, %p233
      %p235 = scmp.ne.s32.totalorder %s224, %s225
      %p236 = scmp.eq.s32.totalorder %s19, 0
      %p237 = por %p235, %p236
      %p238 = scmp.ne.s32.totalorder %s224, %s225
      %p239 = scmp.eq.s32.totalorder %s20, 3
      %p240 = por %p238, %p239
      %p242 = scmp.ne.s32.totalorder %s225, %s241
      %p243 = scmp.eq.s32.totalorder %s20, 0
      %p244 = por %p242, %p243
      %p245 = scmp.le.s32.totalorder 1, %s14
      %p246 = scmp.lt.s32.totalorder %s14, 5
      %p247 = pnand %p245, %p246
      %p248 = pneg %p247
      // Predicated region
      $region9: #{node_level_gnn_forward.5} parent=5 // pred_check
        _
      $region10: #{node_level_gnn_forward.5} parent=5 // pred_check_branch
        %250 = sbr.rel (%p247) target = $region12
      $region11: #{node_level_gnn_forward.5} parent=5 // pred_region
        %s251 = ssub.s32 %s14, 1
        // Predicated region
        $region13: #{node_level_gnn_forward.5} parent=11 // pred_check
          %p252 = pneg %p127
        $region14: #{node_level_gnn_forward.5} parent=11 // pred_check_branch
          %254 = sbr.rel (%p252) target = $region16
        $region15: #{node_level_gnn_forward.5} parent=11 // pred_region
          _
        $region16: #{node_level_gnn_forward.5} parent=11 // pred_fallthru
          _
        // Predicated region
        $region17: #{node_level_gnn_forward.5} parent=11 // pred_check
          %p255 = pneg %p148
        $region18: #{node_level_gnn_forward.5} parent=11 // pred_check_branch
          %257 = sbr.rel (%p255) target = $region20
        $region19: #{node_level_gnn_forward.5} parent=11 // pred_region
          _
        $region20: #{node_level_gnn_forward.5} parent=11 // pred_fallthru
          _
        // Predicated region
        $region21: #{node_level_gnn_forward.5} parent=11 // pred_check
          %p258 = pneg %p169
        $region22: #{node_level_gnn_forward.5} parent=11 // pred_check_branch
          %260 = sbr.rel (%p258) target = $region24
        $region23: #{node_level_gnn_forward.5} parent=11 // pred_region
          _
        $region24: #{node_level_gnn_forward.5} parent=11 // pred_fallthru
          _
        // Predicated region
        $region25: #{node_level_gnn_forward.5} parent=11 // pred_check
          %p261 = pneg %p190
        $region26: #{node_level_gnn_forward.5} parent=11 // pred_check_branch
          %263 = sbr.rel (%p261) target = $region28
        $region27: #{node_level_gnn_forward.5} parent=11 // pred_region
          _
        $region28: #{node_level_gnn_forward.5} parent=11 // pred_fallthru
          _
        // Predicated region
        $region29: #{node_level_gnn_forward.5} parent=11 // pred_check
          %p264 = pneg %p211
        $region30: #{node_level_gnn_forward.5} parent=11 // pred_check_branch
          %266 = sbr.rel (%p264) target = $region32
        $region31: #{node_level_gnn_forward.5} parent=11 // pred_region
          _
        $region32: #{node_level_gnn_forward.5} parent=11 // pred_fallthru
          _
      $region12: #{node_level_gnn_forward.5} parent=5 // pred_fallthru
        _
      %p267 = scmp.lt.s32.totalorder %s14, 4
      // Predicated region
      $region33: #{node_level_gnn_forward.5} parent=5 // pred_check
        %p268 = pneg %p267
      $region34: #{node_level_gnn_forward.5} parent=5 // pred_check_branch
        %270 = sbr.rel (%p268) target = $region36
      $region35: #{node_level_gnn_forward.5} parent=5 // pred_region
        // Predicated region
        $region37: #{node_level_gnn_forward.5} parent=35 // pred_check
          %p271 = pneg %p48
        $region38: #{node_level_gnn_forward.5} parent=35 // pred_check_branch
          %273 = sbr.rel (%p271) target = $region40
        $region39: #{node_level_gnn_forward.5} parent=35 // pred_region
          %s274 = sand.u32 %s38, 1
          %s275 = sand.u32 %s38, 1
          %s276 = smul.addr %s275, 256
          %s277 = scalar_lea.vmem [#allocation3], %s276
          %s278 = smul.u32 32, %s21
          %s279 = smul.u32 2, %s22
          %s280 = smul.addr %s278, 4
          %s281 = sadd.s32 %s279, %s280
          %s282 = smul.addr %s281, 4
          %s283 = scalar_lea.vmem %s0, %s282
          // Predicated region
          $region41: #{node_level_gnn_forward.5} parent=39 // pred_check
            _
          $region42: #{node_level_gnn_forward.5} parent=39 // pred_check_branch
            %285 = sbr.rel (0) target = $region44
          $region43: #{node_level_gnn_forward.5} parent=39 // pred_region
            // Predicated region
            $region45: #{node_level_gnn_forward.5} parent=43 // pred_check
              _
            $region46: #{node_level_gnn_forward.5} parent=43 // pred_check_branch
              %287 = sbr.rel (0) target = $region48
            $region47: #{node_level_gnn_forward.5} parent=43 // pred_region
              // Predicated region
              $region60: #{node_level_gnn_forward.5} parent=47 // pred_check
                _
              $region61: #{node_level_gnn_forward.5} parent=47 // pred_check_branch
                %365 = sbr.rel (0) target = $region63
              $region62: #{node_level_gnn_forward.5} parent=47 // pred_region
                loop: start=0, step=1, limit=1
                $region64: #{node_level_gnn_forward.5} parent=62 // loop_pre_header
                  _
                $region65: #{node_level_gnn_forward.5} parent=62 // loop_header
                  %s367 = sphi 0, %s371
                  %p368 = scmp.ge.s32.totalorder %s367, 1
                  %s372 = sphi %s283, %s283
                  %s373 = sphi %s277, %s277
                $region66: #{node_level_gnn_forward.5} parent=62 // loop_header_branch
                  %370 = sbr.rel (%p368) target = $region70
                $region67: #{node_level_gnn_forward.5} parent=62 // loop_body
                  %v374 = vld [vmem:[%s372] sm:$0xff]
                  %375 = vst [vmem:[%s373] sm:$0xff] %v374
                  %v376 = vld [vmem:[%s372 + $0x10] sm:$0xff]
                  %377 = vst [vmem:[%s373 + $0x8] sm:$0xff] %v376
                  %v378 = vld [vmem:[%s372 + $0x20] sm:$0xff]
                  %379 = vst [vmem:[%s373 + $0x10] sm:$0xff] %v378
                  %v380 = vld [vmem:[%s372 + $0x30] sm:$0xff]
                  %381 = vst [vmem:[%s373 + $0x18] sm:$0xff] %v380
                  %v382 = vld [vmem:[%s372 + $0x40] sm:$0xff]
                  %383 = vst [vmem:[%s373 + $0x20] sm:$0xff] %v382
                  %v384 = vld [vmem:[%s372 + $0x50] sm:$0xff]
                  %385 = vst [vmem:[%s373 + $0x28] sm:$0xff] %v384
                  %v386 = vld [vmem:[%s372 + $0x60] sm:$0xff]
                  %387 = vst [vmem:[%s373 + $0x30] sm:$0xff] %v386
                  %v388 = vld [vmem:[%s372 + $0x70] sm:$0xff]
                  %389 = vst [vmem:[%s373 + $0x38] sm:$0xff] %v388
                  %v390 = vld [vmem:[%s372 + $0x80] sm:$0xff]
                  %391 = vst [vmem:[%s373 + $0x40] sm:$0xff] %v390
                  %v392 = vld [vmem:[%s372 + $0x90] sm:$0xff]
                  %393 = vst [vmem:[%s373 + $0x48] sm:$0xff] %v392
                  %v394 = vld [vmem:[%s372 + $0xa0] sm:$0xff]
                  %395 = vst [vmem:[%s373 + $0x50] sm:$0xff] %v394
                  %v396 = vld [vmem:[%s372 + $0xb0] sm:$0xff]
                  %397 = vst [vmem:[%s373 + $0x58] sm:$0xff] %v396
                  %v398 = vld [vmem:[%s372 + $0xc0] sm:$0xff]
                  %399 = vst [vmem:[%s373 + $0x60] sm:$0xff] %v398
                  %v400 = vld [vmem:[%s372 + $0xd0] sm:$0xff]
                  %401 = vst [vmem:[%s373 + $0x68] sm:$0xff] %v400
                  %v402 = vld [vmem:[%s372 + $0xe0] sm:$0xff]
                  %403 = vst [vmem:[%s373 + $0x70] sm:$0xff] %v402
                  %v404 = vld [vmem:[%s372 + $0xf0] sm:$0xff]
                  %405 = vst [vmem:[%s373 + $0x78] sm:$0xff] %v404
                  %v406 = vld [vmem:[%s372 + $0x100] sm:$0xff]
                  %407 = vst [vmem:[%s373 + $0x80] sm:$0xff] %v406
                  %v408 = vld [vmem:[%s372 + $0x110] sm:$0xff]
                  %409 = vst [vmem:[%s373 + $0x88] sm:$0xff] %v408
                  %v410 = vld [vmem:[%s372 + $0x120] sm:$0xff]
                  %411 = vst [vmem:[%s373 + $0x90] sm:$0xff] %v410
                  %v412 = vld [vmem:[%s372 + $0x130] sm:$0xff]
                  %413 = vst [vmem:[%s373 + $0x98] sm:$0xff] %v412
                  %v414 = vld [vmem:[%s372 + $0x140] sm:$0xff]
                  %415 = vst [vmem:[%s373 + $0xa0] sm:$0xff] %v414
                  %v416 = vld [vmem:[%s372 + $0x150] sm:$0xff]
                  %417 = vst [vmem:[%s373 + $0xa8] sm:$0xff] %v416
                  %v418 = vld [vmem:[%s372 + $0x160] sm:$0xff]
                  %419 = vst [vmem:[%s373 + $0xb0] sm:$0xff] %v418
                  %v420 = vld [vmem:[%s372 + $0x170] sm:$0xff]
                  %421 = vst [vmem:[%s373 + $0xb8] sm:$0xff] %v420
                  %v422 = vld [vmem:[%s372 + $0x180] sm:$0xff]
                  %423 = vst [vmem:[%s373 + $0xc0] sm:$0xff] %v422
                  %v424 = vld [vmem:[%s372 + $0x190] sm:$0xff]
                  %425 = vst [vmem:[%s373 + $0xc8] sm:$0xff] %v424
                  %v426 = vld [vmem:[%s372 + $0x1a0] sm:$0xff]
                  %427 = vst [vmem:[%s373 + $0xd0] sm:$0xff] %v426
                  %v428 = vld [vmem:[%s372 + $0x1b0] sm:$0xff]
                  %429 = vst [vmem:[%s373 + $0xd8] sm:$0xff] %v428
                  %v430 = vld [vmem:[%s372 + $0x1c0] sm:$0xff]
                  %431 = vst [vmem:[%s373 + $0xe0] sm:$0xff] %v430
                  %v432 = vld [vmem:[%s372 + $0x1d0] sm:$0xff]
                  %433 = vst [vmem:[%s373 + $0xe8] sm:$0xff] %v432
                  %v434 = vld [vmem:[%s372 + $0x1e0] sm:$0xff]
                  %435 = vst [vmem:[%s373 + $0xf0] sm:$0xff] %v434
                  %v436 = vld [vmem:[%s372 + $0x1f0] sm:$0xff]
                  %437 = vst [vmem:[%s373 + $0xf8] sm:$0xff] %v436
                $region68: #{node_level_gnn_forward.5} parent=62 // loop_footer
                  %s371 = sadd.s32 1, %s367
                $region69: #{node_level_gnn_forward.5} parent=62 // loop_footer_branch
                  %366 = sbr.rel target = $region65
                $region70: #{node_level_gnn_forward.5} parent=62 // loop_exit
                  _
              $region63: #{node_level_gnn_forward.5} parent=47 // pred_fallthru
                _
              // Predicated region
              $region71: #{node_level_gnn_forward.5} parent=47 // pred_check
                _
              $region72: #{node_level_gnn_forward.5} parent=47 // pred_check_branch
                %439 = sbr.rel target = $region74
              $region73: #{node_level_gnn_forward.5} parent=47 // pred_region
                _
              $region74: #{node_level_gnn_forward.5} parent=47 // pred_fallthru
                _
            $region48: #{node_level_gnn_forward.5} parent=43 // pred_fallthru
              _
            // Predicated region
            $region49: #{node_level_gnn_forward.5} parent=43 // pred_check
              _
            $region50: #{node_level_gnn_forward.5} parent=43 // pred_check_branch
              %289 = sbr.rel target = $region52
            $region51: #{node_level_gnn_forward.5} parent=43 // pred_region
              %s291 = ssub.s32 256, 1
              loop: start=0, step=1, limit=1
              $region53: #{node_level_gnn_forward.5} parent=51 // loop_pre_header
                _
              $region54: #{node_level_gnn_forward.5} parent=51 // loop_header
                %s293 = sphi 0, %s297
                %p294 = scmp.ge.s32.totalorder %s293, 1
                %s298 = sphi %s283, %s283
                %s299 = sphi %s277, %s277
              $region55: #{node_level_gnn_forward.5} parent=51 // loop_header_branch
                %296 = sbr.rel (%p294) target = $region59
              $region56: #{node_level_gnn_forward.5} parent=51 // loop_body
                %v300 = vld [vmem:[%s298] sm:%s291]
                %301 = vst [vmem:[%s299] sm:%s291] %v300
                %v302 = vld [vmem:[%s298 + $0x10] sm:%s291]
                %303 = vst [vmem:[%s299 + $0x8] sm:%s291] %v302
                %v304 = vld [vmem:[%s298 + $0x20] sm:%s291]
                %305 = vst [vmem:[%s299 + $0x10] sm:%s291] %v304
                %v306 = vld [vmem:[%s298 + $0x30] sm:%s291]
                %307 = vst [vmem:[%s299 + $0x18] sm:%s291] %v306
                %v308 = vld [vmem:[%s298 + $0x40] sm:%s291]
                %309 = vst [vmem:[%s299 + $0x20] sm:%s291] %v308
                %v310 = vld [vmem:[%s298 + $0x50] sm:%s291]
                %311 = vst [vmem:[%s299 + $0x28] sm:%s291] %v310
                %v312 = vld [vmem:[%s298 + $0x60] sm:%s291]
                %313 = vst [vmem:[%s299 + $0x30] sm:%s291] %v312
                %v314 = vld [vmem:[%s298 + $0x70] sm:%s291]
                %315 = vst [vmem:[%s299 + $0x38] sm:%s291] %v314
                %v316 = vld [vmem:[%s298 + $0x80] sm:%s291]
                %317 = vst [vmem:[%s299 + $0x40] sm:%s291] %v316
                %v318 = vld [vmem:[%s298 + $0x90] sm:%s291]
                %319 = vst [vmem:[%s299 + $0x48] sm:%s291] %v318
                %v320 = vld [vmem:[%s298 + $0xa0] sm:%s291]
                %321 = vst [vmem:[%s299 + $0x50] sm:%s291] %v320
                %v322 = vld [vmem:[%s298 + $0xb0] sm:%s291]
                %323 = vst [vmem:[%s299 + $0x58] sm:%s291] %v322
                %v324 = vld [vmem:[%s298 + $0xc0] sm:%s291]
                %325 = vst [vmem:[%s299 + $0x60] sm:%s291] %v324
                %v326 = vld [vmem:[%s298 + $0xd0] sm:%s291]
                %327 = vst [vmem:[%s299 + $0x68] sm:%s291] %v326
                %v328 = vld [vmem:[%s298 + $0xe0] sm:%s291]
                %329 = vst [vmem:[%s299 + $0x70] sm:%s291] %v328
                %v330 = vld [vmem:[%s298 + $0xf0] sm:%s291]
                %331 = vst [vmem:[%s299 + $0x78] sm:%s291] %v330
                %v332 = vld [vmem:[%s298 + $0x100] sm:%s291]
                %333 = vst [vmem:[%s299 + $0x80] sm:%s291] %v332
                %v334 = vld [vmem:[%s298 + $0x110] sm:%s291]
                %335 = vst [vmem:[%s299 + $0x88] sm:%s291] %v334
                %v336 = vld [vmem:[%s298 + $0x120] sm:%s291]
                %337 = vst [vmem:[%s299 + $0x90] sm:%s291] %v336
                %v338 = vld [vmem:[%s298 + $0x130] sm:%s291]
                %339 = vst [vmem:[%s299 + $0x98] sm:%s291] %v338
                %v340 = vld [vmem:[%s298 + $0x140] sm:%s291]
                %341 = vst [vmem:[%s299 + $0xa0] sm:%s291] %v340
                %v342 = vld [vmem:[%s298 + $0x150] sm:%s291]
                %343 = vst [vmem:[%s299 + $0xa8] sm:%s291] %v342
                %v344 = vld [vmem:[%s298 + $0x160] sm:%s291]
                %345 = vst [vmem:[%s299 + $0xb0] sm:%s291] %v344
                %v346 = vld [vmem:[%s298 + $0x170] sm:%s291]
                %347 = vst [vmem:[%s299 + $0xb8] sm:%s291] %v346
                %v348 = vld [vmem:[%s298 + $0x180] sm:%s291]
                %349 = vst [vmem:[%s299 + $0xc0] sm:%s291] %v348
                %v350 = vld [vmem:[%s298 + $0x190] sm:%s291]
                %351 = vst [vmem:[%s299 + $0xc8] sm:%s291] %v350
                %v352 = vld [vmem:[%s298 + $0x1a0] sm:%s291]
                %353 = vst [vmem:[%s299 + $0xd0] sm:%s291] %v352
                %v354 = vld [vmem:[%s298 + $0x1b0] sm:%s291]
                %355 = vst [vmem:[%s299 + $0xd8] sm:%s291] %v354
                %v356 = vld [vmem:[%s298 + $0x1c0] sm:%s291]
                %357 = vst [vmem:[%s299 + $0xe0] sm:%s291] %v356
                %v358 = vld [vmem:[%s298 + $0x1d0] sm:%s291]
                %359 = vst [vmem:[%s299 + $0xe8] sm:%s291] %v358
                %v360 = vld [vmem:[%s298 + $0x1e0] sm:%s291]
                %361 = vst [vmem:[%s299 + $0xf0] sm:%s291] %v360
                %v362 = vld [vmem:[%s298 + $0x1f0] sm:%s291]
                %363 = vst [vmem:[%s299 + $0xf8] sm:%s291] %v362
              $region57: #{node_level_gnn_forward.5} parent=51 // loop_footer
                %s297 = sadd.s32 1, %s293
              $region58: #{node_level_gnn_forward.5} parent=51 // loop_footer_branch
                %292 = sbr.rel target = $region54
              $region59: #{node_level_gnn_forward.5} parent=51 // loop_exit
                _
            $region52: #{node_level_gnn_forward.5} parent=43 // pred_fallthru
              _
          $region44: #{node_level_gnn_forward.5} parent=39 // pred_fallthru
            _
          %440 = vnop
        $region40: #{node_level_gnn_forward.5} parent=35 // pred_fallthru
          _
        // Predicated region
        $region75: #{node_level_gnn_forward.5} parent=35 // pred_check
          %p441 = pneg %p74
        $region76: #{node_level_gnn_forward.5} parent=35 // pred_check_branch
          %443 = sbr.rel (%p441) target = $region78
        $region77: #{node_level_gnn_forward.5} parent=35 // pred_region
          %s444 = smul.u32 32, %s22
          %p445 = scmp.lt.s32.totalorder %s444, 63
          %s446 = scalar_select %p445, %s444, 63
          %s447 = smul.addr %s446, 4
          %s448 = scalar_lea.vmem %s1, %s447
          %s449 = smul.u32 32, %s22
        $region78: #{node_level_gnn_forward.5} parent=35 // pred_fallthru
          _
        // Predicated region
        $region79: #{node_level_gnn_forward.5} parent=35 // pred_check
          %p450 = pneg %p100
        $region80: #{node_level_gnn_forward.5} parent=35 // pred_check_branch
          %452 = sbr.rel (%p450) target = $region82
        $region81: #{node_level_gnn_forward.5} parent=35 // pred_region
          %s453 = smul.u32 32, %s21
          %p454 = scmp.lt.s32.totalorder %s453, 63
          %s455 = scalar_select %p454, %s453, 63
          %s456 = smul.addr %s455, 4
          %s457 = scalar_lea.vmem %s2, %s456
          %s458 = smul.u32 32, %s21
        $region82: #{node_level_gnn_forward.5} parent=35 // pred_fallthru
          _
      $region36: #{node_level_gnn_forward.5} parent=5 // pred_fallthru
        _
      %p459 = scmp.le.s32.totalorder 1, %s14
      %p460 = scmp.lt.s32.totalorder %s14, 5
      %p461 = pnand %p459, %p460
      %p462 = pneg %p461
      // Predicated region
      $region83: #{node_level_gnn_forward.5} parent=5 // pred_check
        _
      $region84: #{node_level_gnn_forward.5} parent=5 // pred_check_branch
        %464 = sbr.rel (%p461) target = $region86
      $region85: #{node_level_gnn_forward.5} parent=5 // pred_region
        %s465 = ssub.s32 %s14, 1
        %s466 = sand.u32 %s41, 1
        %s467 = sand.u32 %s41, 1
        %s468 = smul.addr %s467, 256
        %s469 = scalar_lea.vmem [#allocation3], %s468
        // Predicated region
        $region87: #{node_level_gnn_forward.5} parent=85 // pred_check
          %p470 = pneg %p54
        $region88: #{node_level_gnn_forward.5} parent=85 // pred_check_branch
          %472 = sbr.rel (%p470) target = $region90
        $region89: #{node_level_gnn_forward.5} parent=85 // pred_region
          _
        $region90: #{node_level_gnn_forward.5} parent=85 // pred_fallthru
          _
        %s473 = sand.u32 %s41, 1
        %s474 = sand.u32 %s41, 1
        %s475 = smul.addr %s474, 256
        %s476 = scalar_lea.vmem [#allocation3], %s475
        %p477 = pneg %p54
        %p478 = pneg %p51
        %s479 = smul.u32 32, %s24
        %p480 = scmp.lt.s32.totalorder %s479, 63
        %s481 = scalar_select %p480, %s479, 63
        %s482 = smul.addr %s481, 4
        %s483 = scalar_lea.vmem %s1, %s482
        %p484 = pneg %p80
        %p485 = pneg %p77
        %s486 = smul.u32 32, %s23
        %p487 = scmp.lt.s32.totalorder %s486, 63
        %s488 = scalar_select %p487, %s486, 63
        %s489 = smul.addr %s488, 4
        %s490 = scalar_lea.vmem %s2, %s489
        %p491 = pneg %p106
        %p492 = pneg %p103
        %p493 = pneg %p127
        %p494 = pneg %p124
        %p495 = pneg %p148
        %p496 = pneg %p145
        %p497 = pneg %p169
        %p498 = pneg %p166
        %p499 = pneg %p190
        %p500 = pneg %p187
        %p501 = pneg %p211
        %p502 = pneg %p208
        %p503 = pneg %p237
        %p504 = pneg %p234
        %s505 = smul.u32 32, %s23
        %p506 = scmp.lt.s32.totalorder %s505, 63
        %s507 = scalar_select %p506, %s505, 63
        %s508 = smul.addr %s507, 8
        %s509 = scalar_lea.vmem %s8, %s508
        %s510 = smul.u32 32, %s23
        %s511 = smul.u32 2, %s24
        %s512 = smul.u32 32, %s24
        %p513 = scmp.lt.s32.totalorder %s512, 63
        %s514 = scalar_select %p513, %s512, 63
        %s515 = smul.addr %s514, 4
        %s516 = scalar_lea.vmem %s1, %s515
        %s517 = smul.u32 32, %s24
        %s518 = smul.u32 32, %s23
        %p519 = scmp.lt.s32.totalorder %s518, 63
        %s520 = scalar_select %p519, %s518, 63
        %s521 = smul.addr %s520, 4
        %s522 = scalar_lea.vmem %s2, %s521
        %s523 = smul.u32 32, %s23
        %s524 = smul.u32 32, %s23
        %p525 = scmp.lt.s32.totalorder %s524, 63
        %s526 = scalar_select %p525, %s524, 63
        %s527 = smul.addr %s526, 8
        %s528 = scalar_lea.vmem %s8, %s527
        %s529 = smul.u32 32, %s23
        %p531 = scmp.eq.s32.totalorder %s24, 0
        // Predicated region
        $region91: #{node_level_gnn_forward.5} parent=85 // pred_check
          %p532 = pneg %p531
        $region92: #{node_level_gnn_forward.5} parent=85 // pred_check_branch
          %534 = sbr.rel (%p532) target = $region94
        $region93: #{node_level_gnn_forward.5} parent=85 // pred_region
          %535 = vst [vmem:[#allocation2] sm:$0xff] 0.0
          %536 = vst [vmem:[#allocation2 + $0x8] sm:$0xff] 0.0
          %537 = vst [vmem:[#allocation2 + $0x10] sm:$0xff] 0.0
          %538 = vst [vmem:[#allocation2 + $0x18] sm:$0xff] 0.0
          %539 = vst [vmem:[#allocation2 + $0x20] sm:$0xff] 0.0
          %540 = vst [vmem:[#allocation2 + $0x28] sm:$0xff] 0.0
          %541 = vst [vmem:[#allocation2 + $0x30] sm:$0xff] 0.0
          %542 = vst [vmem:[#allocation2 + $0x38] sm:$0xff] 0.0
          %543 = vst [vmem:[#allocation2 + $0x40] sm:$0xff] 0.0
          %544 = vst [vmem:[#allocation2 + $0x48] sm:$0xff] 0.0
          %545 = vst [vmem:[#allocation2 + $0x50] sm:$0xff] 0.0
          %546 = vst [vmem:[#allocation2 + $0x58] sm:$0xff] 0.0
          %547 = vst [vmem:[#allocation2 + $0x60] sm:$0xff] 0.0
          %548 = vst [vmem:[#allocation2 + $0x68] sm:$0xff] 0.0
          %549 = vst [vmem:[#allocation2 + $0x70] sm:$0xff] 0.0
          %550 = vst [vmem:[#allocation2 + $0x78] sm:$0xff] 0.0
          %551 = vst [vmem:[#allocation2 + $0x80] sm:$0xff] 0.0
          %552 = vst [vmem:[#allocation2 + $0x88] sm:$0xff] 0.0
          %553 = vst [vmem:[#allocation2 + $0x90] sm:$0xff] 0.0
          %554 = vst [vmem:[#allocation2 + $0x98] sm:$0xff] 0.0
          %555 = vst [vmem:[#allocation2 + $0xa0] sm:$0xff] 0.0
          %556 = vst [vmem:[#allocation2 + $0xa8] sm:$0xff] 0.0
          %557 = vst [vmem:[#allocation2 + $0xb0] sm:$0xff] 0.0
          %558 = vst [vmem:[#allocation2 + $0xb8] sm:$0xff] 0.0
          %559 = vst [vmem:[#allocation2 + $0xc0] sm:$0xff] 0.0
          %560 = vst [vmem:[#allocation2 + $0xc8] sm:$0xff] 0.0
          %561 = vst [vmem:[#allocation2 + $0xd0] sm:$0xff] 0.0
          %562 = vst [vmem:[#allocation2 + $0xd8] sm:$0xff] 0.0
          %563 = vst [vmem:[#allocation2 + $0xe0] sm:$0xff] 0.0
          %564 = vst [vmem:[#allocation2 + $0xe8] sm:$0xff] 0.0
          %565 = vst [vmem:[#allocation2 + $0xf0] sm:$0xff] 0.0
          %566 = vst [vmem:[#allocation2 + $0xf8] sm:$0xff] 0.0
        $region94: #{node_level_gnn_forward.5} parent=85 // pred_fallthru
          _
        %v567 = vld [vmem:[#allocation2] sm:$0xff]
        %v568 = vld [vmem:[#allocation2 + $0x8] sm:$0xff]
        %v569 = vld [vmem:[#allocation2 + $0x10] sm:$0xff]
        %v570 = vld [vmem:[#allocation2 + $0x18] sm:$0xff]
        %v571 = vld [vmem:[#allocation2 + $0x20] sm:$0xff]
        %v572 = vld [vmem:[#allocation2 + $0x28] sm:$0xff]
        %v573 = vld [vmem:[#allocation2 + $0x30] sm:$0xff]
        %v574 = vld [vmem:[#allocation2 + $0x38] sm:$0xff]
        %v575 = vld [vmem:[#allocation2 + $0x40] sm:$0xff]
        %v576 = vld [vmem:[#allocation2 + $0x48] sm:$0xff]
        %v577 = vld [vmem:[#allocation2 + $0x50] sm:$0xff]
        %v578 = vld [vmem:[#allocation2 + $0x58] sm:$0xff]
        %v579 = vld [vmem:[#allocation2 + $0x60] sm:$0xff]
        %v580 = vld [vmem:[#allocation2 + $0x68] sm:$0xff]
        %v581 = vld [vmem:[#allocation2 + $0x70] sm:$0xff]
        %v582 = vld [vmem:[#allocation2 + $0x78] sm:$0xff]
        %v583 = vld [vmem:[#allocation2 + $0x80] sm:$0xff]
        %v584 = vld [vmem:[#allocation2 + $0x88] sm:$0xff]
        %v585 = vld [vmem:[#allocation2 + $0x90] sm:$0xff]
        %v586 = vld [vmem:[#allocation2 + $0x98] sm:$0xff]
        %v587 = vld [vmem:[#allocation2 + $0xa0] sm:$0xff]
        %v588 = vld [vmem:[#allocation2 + $0xa8] sm:$0xff]
        %v589 = vld [vmem:[#allocation2 + $0xb0] sm:$0xff]
        %v590 = vld [vmem:[#allocation2 + $0xb8] sm:$0xff]
        %v591 = vld [vmem:[#allocation2 + $0xc0] sm:$0xff]
        %v592 = vld [vmem:[#allocation2 + $0xc8] sm:$0xff]
        %v593 = vld [vmem:[#allocation2 + $0xd0] sm:$0xff]
        %v594 = vld [vmem:[#allocation2 + $0xd8] sm:$0xff]
        %v595 = vld [vmem:[#allocation2 + $0xe0] sm:$0xff]
        %v596 = vld [vmem:[#allocation2 + $0xe8] sm:$0xff]
        %v597 = vld [vmem:[#allocation2 + $0xf0] sm:$0xff]
        %v598 = vld [vmem:[#allocation2 + $0xf8] sm:$0xff]
        %v599 = vld [vmem:[%s469] sm:$0xff]
        %v600 = vld [vmem:[%s469 + $0x8] sm:$0xff]
        %v601 = vld [vmem:[%s469 + $0x10] sm:$0xff]
        %v602 = vld [vmem:[%s469 + $0x18] sm:$0xff]
        %v603 = vld [vmem:[%s469 + $0x20] sm:$0xff]
        %v604 = vld [vmem:[%s469 + $0x28] sm:$0xff]
        %v605 = vld [vmem:[%s469 + $0x30] sm:$0xff]
        %v606 = vld [vmem:[%s469 + $0x38] sm:$0xff]
        %v607 = vld [vmem:[%s469 + $0x40] sm:$0xff]
        %v608 = vld [vmem:[%s469 + $0x48] sm:$0xff]
        %v609 = vld [vmem:[%s469 + $0x50] sm:$0xff]
        %v610 = vld [vmem:[%s469 + $0x58] sm:$0xff]
        %v611 = vld [vmem:[%s469 + $0x60] sm:$0xff]
        %v612 = vld [vmem:[%s469 + $0x68] sm:$0xff]
        %v613 = vld [vmem:[%s469 + $0x70] sm:$0xff]
        %v614 = vld [vmem:[%s469 + $0x78] sm:$0xff]
        %v615 = vld [vmem:[%s469 + $0x80] sm:$0xff]
        %v616 = vld [vmem:[%s469 + $0x88] sm:$0xff]
        %v617 = vld [vmem:[%s469 + $0x90] sm:$0xff]
        %v618 = vld [vmem:[%s469 + $0x98] sm:$0xff]
        %v619 = vld [vmem:[%s469 + $0xa0] sm:$0xff]
        %v620 = vld [vmem:[%s469 + $0xa8] sm:$0xff]
        %v621 = vld [vmem:[%s469 + $0xb0] sm:$0xff]
        %v622 = vld [vmem:[%s469 + $0xb8] sm:$0xff]
        %v623 = vld [vmem:[%s469 + $0xc0] sm:$0xff]
        %v624 = vld [vmem:[%s469 + $0xc8] sm:$0xff]
        %v625 = vld [vmem:[%s469 + $0xd0] sm:$0xff]
        %v626 = vld [vmem:[%s469 + $0xd8] sm:$0xff]
        %v627 = vld [vmem:[%s469 + $0xe0] sm:$0xff]
        %v628 = vld [vmem:[%s469 + $0xe8] sm:$0xff]
        %v629 = vld [vmem:[%s469 + $0xf0] sm:$0xff]
        %v630 = vld [vmem:[%s469 + $0xf8] sm:$0xff]
        %v631 = vld [vmem:[%s516] sm:$0xf]
        %v632 = vld [vmem:[%s516 + $0x4] sm:$0xf]
        %v633 = vld [vmem:[%s516 + $0x8] sm:$0xf]
        %v634 = vld [vmem:[%s516 + $0xc] sm:$0xf]
        %v635 = vld [vmem:[%s516 + $0x10] sm:$0xf]
        %v636 = vld [vmem:[%s516 + $0x14] sm:$0xf]
        %v637 = vld [vmem:[%s516 + $0x18] sm:$0xf]
        %v638 = vld [vmem:[%s516 + $0x1c] sm:$0xf]
        %v639 = vld [vmem:[%s516 + $0x20] sm:$0xf]
        %v640 = vld [vmem:[%s516 + $0x24] sm:$0xf]
        %v641 = vld [vmem:[%s516 + $0x28] sm:$0xf]
        %v642 = vld [vmem:[%s516 + $0x2c] sm:$0xf]
        %v643 = vld [vmem:[%s516 + $0x30] sm:$0xf]
        %v644 = vld [vmem:[%s516 + $0x34] sm:$0xf]
        %v645 = vld [vmem:[%s516 + $0x38] sm:$0xf]
        %v646 = vld [vmem:[%s516 + $0x3c] sm:$0xf]
        %v647 = vld [vmem:[%s516 + $0x40] sm:$0xf]
        %v648 = vld [vmem:[%s516 + $0x44] sm:$0xf]
        %v649 = vld [vmem:[%s516 + $0x48] sm:$0xf]
        %v650 = vld [vmem:[%s516 + $0x4c] sm:$0xf]
        %v651 = vld [vmem:[%s516 + $0x50] sm:$0xf]
        %v652 = vld [vmem:[%s516 + $0x54] sm:$0xf]
        %v653 = vld [vmem:[%s516 + $0x58] sm:$0xf]
        %v654 = vld [vmem:[%s516 + $0x5c] sm:$0xf]
        %v655 = vld [vmem:[%s516 + $0x60] sm:$0xf]
        %v656 = vld [vmem:[%s516 + $0x64] sm:$0xf]
        %v657 = vld [vmem:[%s516 + $0x68] sm:$0xf]
        %v658 = vld [vmem:[%s516 + $0x6c] sm:$0xf]
        %v659 = vld [vmem:[%s516 + $0x70] sm:$0xf]
        %v660 = vld [vmem:[%s516 + $0x74] sm:$0xf]
        %v661 = vld [vmem:[%s516 + $0x78] sm:$0xf]
        %v662 = vld [vmem:[%s516 + $0x7c] sm:$0xf]
        %v695 = vunpack.c.l.b16 %v599
        %v696 = vunpack.c.h.b16 %v599
        %v697 = vunpack.c.l.b16 %v600
        %v698 = vunpack.c.h.b16 %v600
        %v699 = vunpack.c.l.b16 %v601
        %v700 = vunpack.c.h.b16 %v601
        %v701 = vunpack.c.l.b16 %v602
        %v702 = vunpack.c.h.b16 %v602
        %v703 = vunpack.c.l.b16 %v603
        %v704 = vunpack.c.h.b16 %v603
        %v705 = vunpack.c.l.b16 %v604
        %v706 = vunpack.c.h.b16 %v604
        %v707 = vunpack.c.l.b16 %v605
        %v708 = vunpack.c.h.b16 %v605
        %v709 = vunpack.c.l.b16 %v606
        %v710 = vunpack.c.h.b16 %v606
        %v711 = vunpack.c.l.b16 %v607
        %v712 = vunpack.c.h.b16 %v607
        %v713 = vunpack.c.l.b16 %v608
        %v714 = vunpack.c.h.b16 %v608
        %v715 = vunpack.c.l.b16 %v609
        %v716 = vunpack.c.h.b16 %v609
        %v717 = vunpack.c.l.b16 %v610
        %v718 = vunpack.c.h.b16 %v610
        %v719 = vunpack.c.l.b16 %v611
        %v720 = vunpack.c.h.b16 %v611
        %v721 = vunpack.c.l.b16 %v612
        %v722 = vunpack.c.h.b16 %v612
        %v723 = vunpack.c.l.b16 %v613
        %v724 = vunpack.c.h.b16 %v613
        %v725 = vunpack.c.l.b16 %v614
        %v726 = vunpack.c.h.b16 %v614
        %v727 = vunpack.c.l.b16 %v615
        %v728 = vunpack.c.h.b16 %v615
        %v729 = vunpack.c.l.b16 %v616
        %v730 = vunpack.c.h.b16 %v616
        %v731 = vunpack.c.l.b16 %v617
        %v732 = vunpack.c.h.b16 %v617
        %v733 = vunpack.c.l.b16 %v618
        %v734 = vunpack.c.h.b16 %v618
        %v735 = vunpack.c.l.b16 %v619
        %v736 = vunpack.c.h.b16 %v619
        %v737 = vunpack.c.l.b16 %v620
        %v738 = vunpack.c.h.b16 %v620
        %v739 = vunpack.c.l.b16 %v621
        %v740 = vunpack.c.h.b16 %v621
        %v741 = vunpack.c.l.b16 %v622
        %v742 = vunpack.c.h.b16 %v622
        %v743 = vunpack.c.l.b16 %v623
        %v744 = vunpack.c.h.b16 %v623
        %v745 = vunpack.c.l.b16 %v624
        %v746 = vunpack.c.h.b16 %v624
        %v747 = vunpack.c.l.b16 %v625
        %v748 = vunpack.c.h.b16 %v625
        %v749 = vunpack.c.l.b16 %v626
        %v750 = vunpack.c.h.b16 %v626
        %v751 = vunpack.c.l.b16 %v627
        %v752 = vunpack.c.h.b16 %v627
        %v753 = vunpack.c.l.b16 %v628
        %v754 = vunpack.c.h.b16 %v628
        %v755 = vunpack.c.l.b16 %v629
        %v756 = vunpack.c.h.b16 %v629
        %v757 = vunpack.c.l.b16 %v630
        %v758 = vunpack.c.h.b16 %v630
        %v759 = vpack.c.b16 %v697, %v695
        %v760 = vpack.c.b16 %v698, %v696
        %v761 = vpack.c.b16 %v701, %v699
        %v762 = vpack.c.b16 %v702, %v700
        %v763 = vpack.c.b16 %v705, %v703
        %v764 = vpack.c.b16 %v706, %v704
        %v765 = vpack.c.b16 %v709, %v707
        %v766 = vpack.c.b16 %v710, %v708
        %v767 = vpack.c.b16 %v713, %v711
        %v768 = vpack.c.b16 %v714, %v712
        %v769 = vpack.c.b16 %v717, %v715
        %v770 = vpack.c.b16 %v718, %v716
        %v771 = vpack.c.b16 %v721, %v719
        %v772 = vpack.c.b16 %v722, %v720
        %v773 = vpack.c.b16 %v725, %v723
        %v774 = vpack.c.b16 %v726, %v724
        %v775 = vpack.c.b16 %v729, %v727
        %v776 = vpack.c.b16 %v730, %v728
        %v777 = vpack.c.b16 %v733, %v731
        %v778 = vpack.c.b16 %v734, %v732
        %v779 = vpack.c.b16 %v737, %v735
        %v780 = vpack.c.b16 %v738, %v736
        %v781 = vpack.c.b16 %v741, %v739
        %v782 = vpack.c.b16 %v742, %v740
        %v783 = vpack.c.b16 %v745, %v743
        %v784 = vpack.c.b16 %v746, %v744
        %v785 = vpack.c.b16 %v749, %v747
        %v786 = vpack.c.b16 %v750, %v748
        %v787 = vpack.c.b16 %v753, %v751
        %v788 = vpack.c.b16 %v754, %v752
        %v789 = vpack.c.b16 %v757, %v755
        %v790 = vpack.c.b16 %v758, %v756
        %v855 = vunpack.c.l.b16 %v631
        %v856 = vunpack.c.l.b16 %v632
        %v857 = vunpack.c.l.b16 %v633
        %v858 = vunpack.c.l.b16 %v634
        %v859 = vunpack.c.l.b16 %v635
        %v860 = vunpack.c.l.b16 %v636
        %v861 = vunpack.c.l.b16 %v637
        %v862 = vunpack.c.l.b16 %v638
        %v863 = vunpack.c.l.b16 %v639
        %v864 = vunpack.c.l.b16 %v640
        %v865 = vunpack.c.l.b16 %v641
        %v866 = vunpack.c.l.b16 %v642
        %v867 = vunpack.c.l.b16 %v643
        %v868 = vunpack.c.l.b16 %v644
        %v869 = vunpack.c.l.b16 %v645
        %v870 = vunpack.c.l.b16 %v646
        %v871 = vunpack.c.l.b16 %v647
        %v872 = vunpack.c.l.b16 %v648
        %v873 = vunpack.c.l.b16 %v649
        %v874 = vunpack.c.l.b16 %v650
        %v875 = vunpack.c.l.b16 %v651
        %v876 = vunpack.c.l.b16 %v652
        %v877 = vunpack.c.l.b16 %v653
        %v878 = vunpack.c.l.b16 %v654
        %v879 = vunpack.c.l.b16 %v655
        %v880 = vunpack.c.l.b16 %v656
        %v881 = vunpack.c.l.b16 %v657
        %v882 = vunpack.c.l.b16 %v658
        %v883 = vunpack.c.l.b16 %v659
        %v884 = vunpack.c.l.b16 %v660
        %v885 = vunpack.c.l.b16 %v661
        %v886 = vunpack.c.l.b16 %v662
        %v887 = vpack.c.b16 %v856, %v855
        %v888 = vpack.c.b16 %v858, %v857
        %v889 = vpack.c.b16 %v860, %v859
        %v890 = vpack.c.b16 %v862, %v861
        %v891 = vpack.c.b16 %v864, %v863
        %v892 = vpack.c.b16 %v866, %v865
        %v893 = vpack.c.b16 %v868, %v867
        %v894 = vpack.c.b16 %v870, %v869
        %v895 = vpack.c.b16 %v872, %v871
        %v896 = vpack.c.b16 %v874, %v873
        %v897 = vpack.c.b16 %v876, %v875
        %v898 = vpack.c.b16 %v878, %v877
        %v899 = vpack.c.b16 %v880, %v879
        %v900 = vpack.c.b16 %v882, %v881
        %v901 = vpack.c.b16 %v884, %v883
        %v902 = vpack.c.b16 %v886, %v885
        %919 = vmatprep.subr.bf16.mxu0 0
        %920 = vmatpush1.bf16.msra.mxu0 %v894
        %921 = vmatprep.subr.bf16.mxu0 0
        %922 = vmatpush1.bf16.msra.mxu0 %v893
        %923 = vmatprep.subr.bf16.mxu0 0
        %924 = vmatpush1.bf16.msra.mxu0 %v892
        %925 = vmatprep.subr.bf16.mxu0 0
        %926 = vmatpush1.bf16.msra.mxu0 %v891
        %927 = vmatprep.subr.bf16.mxu0 0
        %928 = vmatpush1.bf16.msra.mxu0 %v890
        %929 = vmatprep.subr.bf16.mxu0 0
        %930 = vmatpush1.bf16.msra.mxu0 %v889
        %931 = vmatprep.subr.bf16.mxu0 0
        %932 = vmatpush1.bf16.msra.mxu0 %v888
        %933 = vmatprep.subr.bf16.mxu0 0
        %934 = vmatpush1.bf16.msra.mxu0 %v887
        %935 = vmatprep.subr.bf16.mxu0 0
        %936 = vmatpush2.bf16.msra.mxu0 %v902
        %937 = vmatprep.subr.bf16.mxu0 0
        %938 = vmatpush2.bf16.msra.mxu0 %v901
        %939 = vmatprep.subr.bf16.mxu0 0
        %940 = vmatpush2.bf16.msra.mxu0 %v900
        %941 = vmatprep.subr.bf16.mxu0 0
        %942 = vmatpush2.bf16.msra.mxu0 %v899
        %943 = vmatprep.subr.bf16.mxu0 0
        %944 = vmatpush2.bf16.msra.mxu0 %v898
        %945 = vmatprep.subr.bf16.mxu0 0
        %946 = vmatpush2.bf16.msra.mxu0 %v897
        %947 = vmatprep.subr.bf16.mxu0 0
        %948 = vmatpush2.bf16.msra.mxu0 %v896
        %949 = vmatprep.subr.bf16.mxu0 0
        %950 = vmatpush2.bf16.msra.mxu0 %v895
        %951 = vmatprep.mubr.bf16.mxu0 %v760
        %952 = vmatmul.mubr.bf16.gmra.mxu0 %v759
        %v953 = vpop.f32.mrf.mxu0
        %v954 = vadd.f32 0.0, %v953
        %v955 = vpop.f32.mrf.mxu0
        %v956 = vpop.f32.mrf.mxu0
        %v957 = vadd.f32 0.0, %v956
        %v958 = vpop.f32.mrf.mxu0
        %959 = vmatprep.mubr.bf16.mxu0 %v762
        %960 = vmatmul.mubr.bf16.gmra.mxu0 %v761
        %v961 = vpop.f32.mrf.mxu0
        %v962 = vadd.f32 0.0, %v961
        %v963 = vpop.f32.mrf.mxu0
        %v964 = vpop.f32.mrf.mxu0
        %v965 = vadd.f32 0.0, %v964
        %v966 = vpop.f32.mrf.mxu0
        %967 = vmatprep.mubr.bf16.mxu0 %v764
        %968 = vmatmul.mubr.bf16.gmra.mxu0 %v763
        %v969 = vpop.f32.mrf.mxu0
        %v970 = vadd.f32 0.0, %v969
        %v971 = vpop.f32.mrf.mxu0
        %v972 = vpop.f32.mrf.mxu0
        %v973 = vadd.f32 0.0, %v972
        %v974 = vpop.f32.mrf.mxu0
        %975 = vmatprep.mubr.bf16.mxu0 %v766
        %976 = vmatmul.mubr.bf16.gmra.mxu0 %v765
        %v977 = vpop.f32.mrf.mxu0
        %v978 = vadd.f32 0.0, %v977
        %v979 = vpop.f32.mrf.mxu0
        %v980 = vpop.f32.mrf.mxu0
        %v981 = vadd.f32 0.0, %v980
        %v982 = vpop.f32.mrf.mxu0
        %983 = vmatprep.mubr.bf16.mxu0 %v768
        %984 = vmatmul.mubr.bf16.gmra.mxu0 %v767
        %v985 = vpop.f32.mrf.mxu0
        %v986 = vadd.f32 0.0, %v985
        %v987 = vpop.f32.mrf.mxu0
        %v988 = vpop.f32.mrf.mxu0
        %v989 = vadd.f32 0.0, %v988
        %v990 = vpop.f32.mrf.mxu0
        %991 = vmatprep.mubr.bf16.mxu0 %v770
        %992 = vmatmul.mubr.bf16.gmra.mxu0 %v769
        %v993 = vpop.f32.mrf.mxu0
        %v994 = vadd.f32 0.0, %v993
        %v995 = vpop.f32.mrf.mxu0
        %v996 = vpop.f32.mrf.mxu0
        %v997 = vadd.f32 0.0, %v996
        %v998 = vpop.f32.mrf.mxu0
        %999 = vmatprep.mubr.bf16.mxu0 %v772
        %1000 = vmatmul.mubr.bf16.gmra.mxu0 %v771
        %v1001 = vpop.f32.mrf.mxu0
        %v1002 = vadd.f32 0.0, %v1001
        %v1003 = vpop.f32.mrf.mxu0
        %v1004 = vpop.f32.mrf.mxu0
        %v1005 = vadd.f32 0.0, %v1004
        %v1006 = vpop.f32.mrf.mxu0
        %1007 = vmatprep.mubr.bf16.mxu0 %v774
        %1008 = vmatmul.mubr.bf16.gmra.mxu0 %v773
        %v1009 = vpop.f32.mrf.mxu0
        %v1010 = vadd.f32 0.0, %v1009
        %v1011 = vpop.f32.mrf.mxu0
        %v1012 = vpop.f32.mrf.mxu0
        %v1013 = vadd.f32 0.0, %v1012
        %v1014 = vpop.f32.mrf.mxu0
        %1015 = vmatprep.mubr.bf16.mxu0 %v776
        %1016 = vmatmul.mubr.bf16.gmra.mxu0 %v775
        %v1017 = vpop.f32.mrf.mxu0
        %v1018 = vadd.f32 0.0, %v1017
        %v1019 = vpop.f32.mrf.mxu0
        %v1020 = vpop.f32.mrf.mxu0
        %v1021 = vadd.f32 0.0, %v1020
        %v1022 = vpop.f32.mrf.mxu0
        %1023 = vmatprep.mubr.bf16.mxu0 %v778
        %1024 = vmatmul.mubr.bf16.gmra.mxu0 %v777
        %v1025 = vpop.f32.mrf.mxu0
        %v1026 = vadd.f32 0.0, %v1025
        %v1027 = vpop.f32.mrf.mxu0
        %v1028 = vpop.f32.mrf.mxu0
        %v1029 = vadd.f32 0.0, %v1028
        %v1030 = vpop.f32.mrf.mxu0
        %1031 = vmatprep.mubr.bf16.mxu0 %v780
        %1032 = vmatmul.mubr.bf16.gmra.mxu0 %v779
        %v1033 = vpop.f32.mrf.mxu0
        %v1034 = vadd.f32 0.0, %v1033
        %v1035 = vpop.f32.mrf.mxu0
        %v1036 = vpop.f32.mrf.mxu0
        %v1037 = vadd.f32 0.0, %v1036
        %v1038 = vpop.f32.mrf.mxu0
        %1039 = vmatprep.mubr.bf16.mxu0 %v782
        %1040 = vmatmul.mubr.bf16.gmra.mxu0 %v781
        %v1041 = vpop.f32.mrf.mxu0
        %v1042 = vadd.f32 0.0, %v1041
        %v1043 = vpop.f32.mrf.mxu0
        %v1044 = vpop.f32.mrf.mxu0
        %v1045 = vadd.f32 0.0, %v1044
        %v1046 = vpop.f32.mrf.mxu0
        %1047 = vmatprep.mubr.bf16.mxu0 %v784
        %1048 = vmatmul.mubr.bf16.gmra.mxu0 %v783
        %v1049 = vpop.f32.mrf.mxu0
        %v1050 = vadd.f32 0.0, %v1049
        %v1051 = vpop.f32.mrf.mxu0
        %v1052 = vpop.f32.mrf.mxu0
        %v1053 = vadd.f32 0.0, %v1052
        %v1054 = vpop.f32.mrf.mxu0
        %1055 = vmatprep.mubr.bf16.mxu0 %v786
        %1056 = vmatmul.mubr.bf16.gmra.mxu0 %v785
        %v1057 = vpop.f32.mrf.mxu0
        %v1058 = vadd.f32 0.0, %v1057
        %v1059 = vpop.f32.mrf.mxu0
        %v1060 = vpop.f32.mrf.mxu0
        %v1061 = vadd.f32 0.0, %v1060
        %v1062 = vpop.f32.mrf.mxu0
        %1063 = vmatprep.mubr.bf16.mxu0 %v788
        %1064 = vmatmul.mubr.bf16.gmra.mxu0 %v787
        %v1065 = vpop.f32.mrf.mxu0
        %v1066 = vadd.f32 0.0, %v1065
        %v1067 = vpop.f32.mrf.mxu0
        %v1068 = vpop.f32.mrf.mxu0
        %v1069 = vadd.f32 0.0, %v1068
        %v1070 = vpop.f32.mrf.mxu0
        %1071 = vmatprep.mubr.bf16.mxu0 %v790
        %1072 = vmatmul.mubr.bf16.gmra.mxu0 %v789
        %v1073 = vpop.f32.mrf.mxu0
        %v1074 = vadd.f32 0.0, %v1073
        %v1075 = vpop.f32.mrf.mxu0
        %v1076 = vpop.f32.mrf.mxu0
        %v1077 = vadd.f32 0.0, %v1076
        %v1078 = vpop.f32.mrf.mxu0
        %1079 = vdwg.mxu0
        %v1080 = vadd.f32 %v567, %v954
        %v1081 = vadd.f32 %v568, %v957
        %v1082 = vadd.f32 %v569, %v962
        %v1083 = vadd.f32 %v570, %v965
        %v1084 = vadd.f32 %v571, %v970
        %v1085 = vadd.f32 %v572, %v973
        %v1086 = vadd.f32 %v573, %v978
        %v1087 = vadd.f32 %v574, %v981
        %v1088 = vadd.f32 %v575, %v986
        %v1089 = vadd.f32 %v576, %v989
        %v1090 = vadd.f32 %v577, %v994
        %v1091 = vadd.f32 %v578, %v997
        %v1092 = vadd.f32 %v579, %v1002
        %v1093 = vadd.f32 %v580, %v1005
        %v1094 = vadd.f32 %v581, %v1010
        %v1095 = vadd.f32 %v582, %v1013
        %v1096 = vadd.f32 %v583, %v1018
        %v1097 = vadd.f32 %v584, %v1021
        %v1098 = vadd.f32 %v585, %v1026
        %v1099 = vadd.f32 %v586, %v1029
        %v1100 = vadd.f32 %v587, %v1034
        %v1101 = vadd.f32 %v588, %v1037
        %v1102 = vadd.f32 %v589, %v1042
        %v1103 = vadd.f32 %v590, %v1045
        %v1104 = vadd.f32 %v591, %v1050
        %v1105 = vadd.f32 %v592, %v1053
        %v1106 = vadd.f32 %v593, %v1058
        %v1107 = vadd.f32 %v594, %v1061
        %v1108 = vadd.f32 %v595, %v1066
        %v1109 = vadd.f32 %v596, %v1069
        %v1110 = vadd.f32 %v597, %v1074
        %v1111 = vadd.f32 %v598, %v1077
        %1112 = vst [vmem:[#allocation2] sm:$0xff] %v1080
        %1113 = vst [vmem:[#allocation2 + $0x8] sm:$0xff] %v1081
        %1114 = vst [vmem:[#allocation2 + $0x10] sm:$0xff] %v1082
        %1115 = vst [vmem:[#allocation2 + $0x18] sm:$0xff] %v1083
        %1116 = vst [vmem:[#allocation2 + $0x20] sm:$0xff] %v1084
        %1117 = vst [vmem:[#allocation2 + $0x28] sm:$0xff] %v1085
        %1118 = vst [vmem:[#allocation2 + $0x30] sm:$0xff] %v1086
        %1119 = vst [vmem:[#allocation2 + $0x38] sm:$0xff] %v1087
        %1120 = vst [vmem:[#allocation2 + $0x40] sm:$0xff] %v1088
        %1121 = vst [vmem:[#allocation2 + $0x48] sm:$0xff] %v1089
        %1122 = vst [vmem:[#allocation2 + $0x50] sm:$0xff] %v1090
        %1123 = vst [vmem:[#allocation2 + $0x58] sm:$0xff] %v1091
        %1124 = vst [vmem:[#allocation2 + $0x60] sm:$0xff] %v1092
        %1125 = vst [vmem:[#allocation2 + $0x68] sm:$0xff] %v1093
        %1126 = vst [vmem:[#allocation2 + $0x70] sm:$0xff] %v1094
        %1127 = vst [vmem:[#allocation2 + $0x78] sm:$0xff] %v1095
        %1128 = vst [vmem:[#allocation2 + $0x80] sm:$0xff] %v1096
        %1129 = vst [vmem:[#allocation2 + $0x88] sm:$0xff] %v1097
        %1130 = vst [vmem:[#allocation2 + $0x90] sm:$0xff] %v1098
        %1131 = vst [vmem:[#allocation2 + $0x98] sm:$0xff] %v1099
        %1132 = vst [vmem:[#allocation2 + $0xa0] sm:$0xff] %v1100
        %1133 = vst [vmem:[#allocation2 + $0xa8] sm:$0xff] %v1101
        %1134 = vst [vmem:[#allocation2 + $0xb0] sm:$0xff] %v1102
        %1135 = vst [vmem:[#allocation2 + $0xb8] sm:$0xff] %v1103
        %1136 = vst [vmem:[#allocation2 + $0xc0] sm:$0xff] %v1104
        %1137 = vst [vmem:[#allocation2 + $0xc8] sm:$0xff] %v1105
        %1138 = vst [vmem:[#allocation2 + $0xd0] sm:$0xff] %v1106
        %1139 = vst [vmem:[#allocation2 + $0xd8] sm:$0xff] %v1107
        %1140 = vst [vmem:[#allocation2 + $0xe0] sm:$0xff] %v1108
        %1141 = vst [vmem:[#allocation2 + $0xe8] sm:$0xff] %v1109
        %1142 = vst [vmem:[#allocation2 + $0xf0] sm:$0xff] %v1110
        %1143 = vst [vmem:[#allocation2 + $0xf8] sm:$0xff] %v1111
        %p1144 = scmp.eq.s32.totalorder %s24, 1
        // Predicated region
        $region95: #{node_level_gnn_forward.5} parent=85 // pred_check
          %p1145 = pneg %p1144
        $region96: #{node_level_gnn_forward.5} parent=85 // pred_check_branch
          %1147 = sbr.rel (%p1145) target = $region98
        $region97: #{node_level_gnn_forward.5} parent=85 // pred_region
          %v1148 = vld [vmem:[%s522] sm:$0xf]
          %v1149 = vld [vmem:[%s522 + $0x4] sm:$0xf]
          %v1150 = vld [vmem:[%s522 + $0x8] sm:$0xf]
          %v1151 = vld [vmem:[%s522 + $0xc] sm:$0xf]
          %v1152 = vld [vmem:[%s522 + $0x10] sm:$0xf]
          %v1153 = vld [vmem:[%s522 + $0x14] sm:$0xf]
          %v1154 = vld [vmem:[%s522 + $0x18] sm:$0xf]
          %v1155 = vld [vmem:[%s522 + $0x1c] sm:$0xf]
          %v1156 = vld [vmem:[%s522 + $0x20] sm:$0xf]
          %v1157 = vld [vmem:[%s522 + $0x24] sm:$0xf]
          %v1158 = vld [vmem:[%s522 + $0x28] sm:$0xf]
          %v1159 = vld [vmem:[%s522 + $0x2c] sm:$0xf]
          %v1160 = vld [vmem:[%s522 + $0x30] sm:$0xf]
          %v1161 = vld [vmem:[%s522 + $0x34] sm:$0xf]
          %v1162 = vld [vmem:[%s522 + $0x38] sm:$0xf]
          %v1163 = vld [vmem:[%s522 + $0x3c] sm:$0xf]
          %v1164 = vld [vmem:[%s522 + $0x40] sm:$0xf]
          %v1165 = vld [vmem:[%s522 + $0x44] sm:$0xf]
          %v1166 = vld [vmem:[%s522 + $0x48] sm:$0xf]
          %v1167 = vld [vmem:[%s522 + $0x4c] sm:$0xf]
          %v1168 = vld [vmem:[%s522 + $0x50] sm:$0xf]
          %v1169 = vld [vmem:[%s522 + $0x54] sm:$0xf]
          %v1170 = vld [vmem:[%s522 + $0x58] sm:$0xf]
          %v1171 = vld [vmem:[%s522 + $0x5c] sm:$0xf]
          %v1172 = vld [vmem:[%s522 + $0x60] sm:$0xf]
          %v1173 = vld [vmem:[%s522 + $0x64] sm:$0xf]
          %v1174 = vld [vmem:[%s522 + $0x68] sm:$0xf]
          %v1175 = vld [vmem:[%s522 + $0x6c] sm:$0xf]
          %v1176 = vld [vmem:[%s522 + $0x70] sm:$0xf]
          %v1177 = vld [vmem:[%s522 + $0x74] sm:$0xf]
          %v1178 = vld [vmem:[%s522 + $0x78] sm:$0xf]
          %v1179 = vld [vmem:[%s522 + $0x7c] sm:$0xf]
          %v1180 = vld [vmem:[#allocation2] sm:$0xff]
          %v1181 = vld [vmem:[#allocation2 + $0x8] sm:$0xff]
          %v1182 = vld [vmem:[#allocation2 + $0x10] sm:$0xff]
          %v1183 = vld [vmem:[#allocation2 + $0x18] sm:$0xff]
          %v1184 = vld [vmem:[#allocation2 + $0x20] sm:$0xff]
          %v1185 = vld [vmem:[#allocation2 + $0x28] sm:$0xff]
          %v1186 = vld [vmem:[#allocation2 + $0x30] sm:$0xff]
          %v1187 = vld [vmem:[#allocation2 + $0x38] sm:$0xff]
          %v1188 = vld [vmem:[#allocation2 + $0x40] sm:$0xff]
          %v1189 = vld [vmem:[#allocation2 + $0x48] sm:$0xff]
          %v1190 = vld [vmem:[#allocation2 + $0x50] sm:$0xff]
          %v1191 = vld [vmem:[#allocation2 + $0x58] sm:$0xff]
          %v1192 = vld [vmem:[#allocation2 + $0x60] sm:$0xff]
          %v1193 = vld [vmem:[#allocation2 + $0x68] sm:$0xff]
          %v1194 = vld [vmem:[#allocation2 + $0x70] sm:$0xff]
          %v1195 = vld [vmem:[#allocation2 + $0x78] sm:$0xff]
          %v1196 = vld [vmem:[#allocation2 + $0x80] sm:$0xff]
          %v1197 = vld [vmem:[#allocation2 + $0x88] sm:$0xff]
          %v1198 = vld [vmem:[#allocation2 + $0x90] sm:$0xff]
          %v1199 = vld [vmem:[#allocation2 + $0x98] sm:$0xff]
          %v1200 = vld [vmem:[#allocation2 + $0xa0] sm:$0xff]
          %v1201 = vld [vmem:[#allocation2 + $0xa8] sm:$0xff]
          %v1202 = vld [vmem:[#allocation2 + $0xb0] sm:$0xff]
          %v1203 = vld [vmem:[#allocation2 + $0xb8] sm:$0xff]
          %v1204 = vld [vmem:[#allocation2 + $0xc0] sm:$0xff]
          %v1205 = vld [vmem:[#allocation2 + $0xc8] sm:$0xff]
          %v1206 = vld [vmem:[#allocation2 + $0xd0] sm:$0xff]
          %v1207 = vld [vmem:[#allocation2 + $0xd8] sm:$0xff]
          %v1208 = vld [vmem:[#allocation2 + $0xe0] sm:$0xff]
          %v1209 = vld [vmem:[#allocation2 + $0xe8] sm:$0xff]
          %v1210 = vld [vmem:[#allocation2 + $0xf0] sm:$0xff]
          %v1211 = vld [vmem:[#allocation2 + $0xf8] sm:$0xff]
          %v1212 = vpack.c.bf16 %v1181, %v1180
          %v1213 = vpack.c.bf16 %v1183, %v1182
          %v1214 = vpack.c.bf16 %v1185, %v1184
          %v1215 = vpack.c.bf16 %v1187, %v1186
          %v1216 = vpack.c.bf16 %v1189, %v1188
          %v1217 = vpack.c.bf16 %v1191, %v1190
          %v1218 = vpack.c.bf16 %v1193, %v1192
          %v1219 = vpack.c.bf16 %v1195, %v1194
          %v1220 = vpack.c.bf16 %v1197, %v1196
          %v1221 = vpack.c.bf16 %v1199, %v1198
          %v1222 = vpack.c.bf16 %v1201, %v1200
          %v1223 = vpack.c.bf16 %v1203, %v1202
          %v1224 = vpack.c.bf16 %v1205, %v1204
          %v1225 = vpack.c.bf16 %v1207, %v1206
          %v1226 = vpack.c.bf16 %v1209, %v1208
          %v1227 = vpack.c.bf16 %v1211, %v1210
          %v1228 = vld [vmem:[%s3] sm:$0xf]
          %v1229 = vld [vmem:[%s3 + $0x4] sm:$0xf]
          %v1230 = vld [vmem:[%s3 + $0x8] sm:$0xf]
          %v1231 = vld [vmem:[%s3 + $0xc] sm:$0xf]
          %v1232 = vld [vmem:[%s3 + $0x10] sm:$0xf]
          %v1233 = vld [vmem:[%s3 + $0x14] sm:$0xf]
          %v1234 = vld [vmem:[%s3 + $0x18] sm:$0xf]
          %v1235 = vld [vmem:[%s3 + $0x1c] sm:$0xf]
          %v1236 = vld [vmem:[%s3 + $0x20] sm:$0xf]
          %v1237 = vld [vmem:[%s3 + $0x24] sm:$0xf]
          %v1238 = vld [vmem:[%s3 + $0x28] sm:$0xf]
          %v1239 = vld [vmem:[%s3 + $0x2c] sm:$0xf]
          %v1240 = vld [vmem:[%s3 + $0x30] sm:$0xf]
          %v1241 = vld [vmem:[%s3 + $0x34] sm:$0xf]
          %v1242 = vld [vmem:[%s3 + $0x38] sm:$0xf]
          %v1243 = vld [vmem:[%s3 + $0x3c] sm:$0xf]
          %v1244 = vld [vmem:[%s4] sm:$0xf]
          %v1245 = vld [vmem:[%s4 + $0x4] sm:$0xf]
          %v1246 = vld [vmem:[%s4 + $0x8] sm:$0xf]
          %v1247 = vld [vmem:[%s4 + $0xc] sm:$0xf]
          %v1248 = vld [vmem:[%s4 + $0x10] sm:$0xf]
          %v1249 = vld [vmem:[%s4 + $0x14] sm:$0xf]
          %v1250 = vld [vmem:[%s4 + $0x18] sm:$0xf]
          %v1251 = vld [vmem:[%s4 + $0x1c] sm:$0xf]
          %v1252 = vld [vmem:[%s4 + $0x20] sm:$0xf]
          %v1253 = vld [vmem:[%s4 + $0x24] sm:$0xf]
          %v1254 = vld [vmem:[%s4 + $0x28] sm:$0xf]
          %v1255 = vld [vmem:[%s4 + $0x2c] sm:$0xf]
          %v1256 = vld [vmem:[%s4 + $0x30] sm:$0xf]
          %v1257 = vld [vmem:[%s4 + $0x34] sm:$0xf]
          %v1258 = vld [vmem:[%s4 + $0x38] sm:$0xf]
          %v1259 = vld [vmem:[%s4 + $0x3c] sm:$0xf]
          %v1292 = vunpack.c.l.b16 %v1148
          %v1293 = vunpack.c.l.b16 %v1149
          %v1294 = vunpack.c.l.b16 %v1150
          %v1295 = vunpack.c.l.b16 %v1151
          %v1296 = vunpack.c.l.b16 %v1152
          %v1297 = vunpack.c.l.b16 %v1153
          %v1298 = vunpack.c.l.b16 %v1154
          %v1299 = vunpack.c.l.b16 %v1155
          %v1300 = vunpack.c.l.b16 %v1156
          %v1301 = vunpack.c.l.b16 %v1157
          %v1302 = vunpack.c.l.b16 %v1158
          %v1303 = vunpack.c.l.b16 %v1159
          %v1304 = vunpack.c.l.b16 %v1160
          %v1305 = vunpack.c.l.b16 %v1161
          %v1306 = vunpack.c.l.b16 %v1162
          %v1307 = vunpack.c.l.b16 %v1163
          %v1308 = vunpack.c.l.b16 %v1164
          %v1309 = vunpack.c.l.b16 %v1165
          %v1310 = vunpack.c.l.b16 %v1166
          %v1311 = vunpack.c.l.b16 %v1167
          %v1312 = vunpack.c.l.b16 %v1168
          %v1313 = vunpack.c.l.b16 %v1169
          %v1314 = vunpack.c.l.b16 %v1170
          %v1315 = vunpack.c.l.b16 %v1171
          %v1316 = vunpack.c.l.b16 %v1172
          %v1317 = vunpack.c.l.b16 %v1173
          %v1318 = vunpack.c.l.b16 %v1174
          %v1319 = vunpack.c.l.b16 %v1175
          %v1320 = vunpack.c.l.b16 %v1176
          %v1321 = vunpack.c.l.b16 %v1177
          %v1322 = vunpack.c.l.b16 %v1178
          %v1323 = vunpack.c.l.b16 %v1179
          %v1324 = vpack.c.b16 %v1293, %v1292
          %v1325 = vpack.c.b16 %v1295, %v1294
          %v1326 = vpack.c.b16 %v1297, %v1296
          %v1327 = vpack.c.b16 %v1299, %v1298
          %v1328 = vpack.c.b16 %v1301, %v1300
          %v1329 = vpack.c.b16 %v1303, %v1302
          %v1330 = vpack.c.b16 %v1305, %v1304
          %v1331 = vpack.c.b16 %v1307, %v1306
          %v1332 = vpack.c.b16 %v1309, %v1308
          %v1333 = vpack.c.b16 %v1311, %v1310
          %v1334 = vpack.c.b16 %v1313, %v1312
          %v1335 = vpack.c.b16 %v1315, %v1314
          %v1336 = vpack.c.b16 %v1317, %v1316
          %v1337 = vpack.c.b16 %v1319, %v1318
          %v1338 = vpack.c.b16 %v1321, %v1320
          %v1339 = vpack.c.b16 %v1323, %v1322
          %v1372 = vunpack.c.l.b16 %v1244
          %v1373 = vunpack.c.l.b16 %v1245
          %v1374 = vunpack.c.l.b16 %v1246
          %v1375 = vunpack.c.l.b16 %v1247
          %v1376 = vunpack.c.l.b16 %v1248
          %v1377 = vunpack.c.l.b16 %v1249
          %v1378 = vunpack.c.l.b16 %v1250
          %v1379 = vunpack.c.l.b16 %v1251
          %v1380 = vunpack.c.l.b16 %v1252
          %v1381 = vunpack.c.l.b16 %v1253
          %v1382 = vunpack.c.l.b16 %v1254
          %v1383 = vunpack.c.l.b16 %v1255
          %v1384 = vunpack.c.l.b16 %v1256
          %v1385 = vunpack.c.l.b16 %v1257
          %v1386 = vunpack.c.l.b16 %v1258
          %v1387 = vunpack.c.l.b16 %v1259
          %v1388 = vpack.c.b16 %v1373, %v1372
          %v1389 = vpack.c.b16 %v1375, %v1374
          %v1390 = vpack.c.b16 %v1377, %v1376
          %v1391 = vpack.c.b16 %v1379, %v1378
          %v1392 = vpack.c.b16 %v1381, %v1380
          %v1393 = vpack.c.b16 %v1383, %v1382
          %v1394 = vpack.c.b16 %v1385, %v1384
          %v1395 = vpack.c.b16 %v1387, %v1386
          %1404 = vmatprep.subr.bf16.mxu0 0
          %1405 = vmatpush1.bf16.msra.mxu0 %v1395
          %1406 = vmatprep.subr.bf16.mxu0 0
          %1407 = vmatpush1.bf16.msra.mxu0 %v1394
          %1408 = vmatprep.subr.bf16.mxu0 0
          %1409 = vmatpush1.bf16.msra.mxu0 %v1393
          %1410 = vmatprep.subr.bf16.mxu0 0
          %1411 = vmatpush1.bf16.msra.mxu0 %v1392
          %1412 = vmatprep.subr.bf16.mxu0 0
          %1413 = vmatpush1.bf16.msra.mxu0 %v1391
          %1414 = vmatprep.subr.bf16.mxu0 0
          %1415 = vmatpush1.bf16.msra.mxu0 %v1390
          %1416 = vmatprep.subr.bf16.mxu0 0
          %1417 = vmatpush1.bf16.msra.mxu0 %v1389
          %1418 = vmatprep.subr.bf16.mxu0 0
          %1419 = vmatpush1.bf16.msra.mxu0 %v1388
          %1420 = vmatprep.subr.bf16.mxu0 0
          %1421 = vmatpush2.bf16.msra.mxu0 0
          %1422 = vmatprep.subr.bf16.mxu0 0
          %1423 = vmatpush2.bf16.msra.mxu0 0
          %1424 = vmatprep.subr.bf16.mxu0 0
          %1425 = vmatpush2.bf16.msra.mxu0 0
          %1426 = vmatprep.subr.bf16.mxu0 0
          %1427 = vmatpush2.bf16.msra.mxu0 0
          %1428 = vmatprep.subr.bf16.mxu0 0
          %1429 = vmatpush2.bf16.msra.mxu0 0
          %1430 = vmatprep.subr.bf16.mxu0 0
          %1431 = vmatpush2.bf16.msra.mxu0 0
          %1432 = vmatprep.subr.bf16.mxu0 0
          %1433 = vmatpush2.bf16.msra.mxu0 0
          %1434 = vmatprep.subr.bf16.mxu0 0
          %1435 = vmatpush2.bf16.msra.mxu0 0
          %1436 = vmatprep.mubr.bf16.mxu0 0
          %1437 = vmatmul.mubr.bf16.gmra.mxu0 %v1324
          %v1438 = vpop.f32.mrf.mxu0
          %v1439 = vadd.f32 0.0, %v1438
          %v1440 = vpop.f32.mrf.mxu0
          %v1441 = vpop.f32.mrf.mxu0
          %v1442 = vadd.f32 0.0, %v1441
          %v1443 = vpop.f32.mrf.mxu0
          %1444 = vmatprep.mubr.bf16.mxu0 0
          %1445 = vmatmul.mubr.bf16.gmra.mxu0 %v1325
          %v1446 = vpop.f32.mrf.mxu0
          %v1447 = vadd.f32 0.0, %v1446
          %v1448 = vpop.f32.mrf.mxu0
          %v1449 = vpop.f32.mrf.mxu0
          %v1450 = vadd.f32 0.0, %v1449
          %v1451 = vpop.f32.mrf.mxu0
          %1452 = vmatprep.mubr.bf16.mxu0 0
          %1453 = vmatmul.mubr.bf16.gmra.mxu0 %v1326
          %v1454 = vpop.f32.mrf.mxu0
          %v1455 = vadd.f32 0.0, %v1454
          %v1456 = vpop.f32.mrf.mxu0
          %v1457 = vpop.f32.mrf.mxu0
          %v1458 = vadd.f32 0.0, %v1457
          %v1459 = vpop.f32.mrf.mxu0
          %1460 = vmatprep.mubr.bf16.mxu0 0
          %1461 = vmatmul.mubr.bf16.gmra.mxu0 %v1327
          %v1462 = vpop.f32.mrf.mxu0
          %v1463 = vadd.f32 0.0, %v1462
          %v1464 = vpop.f32.mrf.mxu0
          %v1465 = vpop.f32.mrf.mxu0
          %v1466 = vadd.f32 0.0, %v1465
          %v1467 = vpop.f32.mrf.mxu0
          %1468 = vmatprep.mubr.bf16.mxu0 0
          %1469 = vmatmul.mubr.bf16.gmra.mxu0 %v1328
          %v1470 = vpop.f32.mrf.mxu0
          %v1471 = vadd.f32 0.0, %v1470
          %v1472 = vpop.f32.mrf.mxu0
          %v1473 = vpop.f32.mrf.mxu0
          %v1474 = vadd.f32 0.0, %v1473
          %v1475 = vpop.f32.mrf.mxu0
          %1476 = vmatprep.mubr.bf16.mxu0 0
          %1477 = vmatmul.mubr.bf16.gmra.mxu0 %v1329
          %v1478 = vpop.f32.mrf.mxu0
          %v1479 = vadd.f32 0.0, %v1478
          %v1480 = vpop.f32.mrf.mxu0
          %v1481 = vpop.f32.mrf.mxu0
          %v1482 = vadd.f32 0.0, %v1481
          %v1483 = vpop.f32.mrf.mxu0
          %1484 = vmatprep.mubr.bf16.mxu0 0
          %1485 = vmatmul.mubr.bf16.gmra.mxu0 %v1330
          %v1486 = vpop.f32.mrf.mxu0
          %v1487 = vadd.f32 0.0, %v1486
          %v1488 = vpop.f32.mrf.mxu0
          %v1489 = vpop.f32.mrf.mxu0
          %v1490 = vadd.f32 0.0, %v1489
          %v1491 = vpop.f32.mrf.mxu0
          %1492 = vmatprep.mubr.bf16.mxu0 0
          %1493 = vmatmul.mubr.bf16.gmra.mxu0 %v1331
          %v1494 = vpop.f32.mrf.mxu0
          %v1495 = vadd.f32 0.0, %v1494
          %v1496 = vpop.f32.mrf.mxu0
          %v1497 = vpop.f32.mrf.mxu0
          %v1498 = vadd.f32 0.0, %v1497
          %v1499 = vpop.f32.mrf.mxu0
          %1500 = vmatprep.mubr.bf16.mxu0 0
          %1501 = vmatmul.mubr.bf16.gmra.mxu0 %v1332
          %v1502 = vpop.f32.mrf.mxu0
          %v1503 = vadd.f32 0.0, %v1502
          %v1504 = vpop.f32.mrf.mxu0
          %v1505 = vpop.f32.mrf.mxu0
          %v1506 = vadd.f32 0.0, %v1505
          %v1507 = vpop.f32.mrf.mxu0
          %1508 = vmatprep.mubr.bf16.mxu0 0
          %1509 = vmatmul.mubr.bf16.gmra.mxu0 %v1333
          %v1510 = vpop.f32.mrf.mxu0
          %v1511 = vadd.f32 0.0, %v1510
          %v1512 = vpop.f32.mrf.mxu0
          %v1513 = vpop.f32.mrf.mxu0
          %v1514 = vadd.f32 0.0, %v1513
          %v1515 = vpop.f32.mrf.mxu0
          %1516 = vmatprep.mubr.bf16.mxu0 0
          %1517 = vmatmul.mubr.bf16.gmra.mxu0 %v1334
          %v1518 = vpop.f32.mrf.mxu0
          %v1519 = vadd.f32 0.0, %v1518
          %v1520 = vpop.f32.mrf.mxu0
          %v1521 = vpop.f32.mrf.mxu0
          %v1522 = vadd.f32 0.0, %v1521
          %v1523 = vpop.f32.mrf.mxu0
          %1524 = vmatprep.mubr.bf16.mxu0 0
          %1525 = vmatmul.mubr.bf16.gmra.mxu0 %v1335
          %v1526 = vpop.f32.mrf.mxu0
          %v1527 = vadd.f32 0.0, %v1526
          %v1528 = vpop.f32.mrf.mxu0
          %v1529 = vpop.f32.mrf.mxu0
          %v1530 = vadd.f32 0.0, %v1529
          %v1531 = vpop.f32.mrf.mxu0
          %1532 = vmatprep.mubr.bf16.mxu0 0
          %1533 = vmatmul.mubr.bf16.gmra.mxu0 %v1336
          %v1534 = vpop.f32.mrf.mxu0
          %v1535 = vadd.f32 0.0, %v1534
          %v1536 = vpop.f32.mrf.mxu0
          %v1537 = vpop.f32.mrf.mxu0
          %v1538 = vadd.f32 0.0, %v1537
          %v1539 = vpop.f32.mrf.mxu0
          %1540 = vmatprep.mubr.bf16.mxu0 0
          %1541 = vmatmul.mubr.bf16.gmra.mxu0 %v1337
          %v1542 = vpop.f32.mrf.mxu0
          %v1543 = vadd.f32 0.0, %v1542
          %v1544 = vpop.f32.mrf.mxu0
          %v1545 = vpop.f32.mrf.mxu0
          %v1546 = vadd.f32 0.0, %v1545
          %v1547 = vpop.f32.mrf.mxu0
          %1548 = vmatprep.mubr.bf16.mxu0 0
          %1549 = vmatmul.mubr.bf16.gmra.mxu0 %v1338
          %v1550 = vpop.f32.mrf.mxu0
          %v1551 = vadd.f32 0.0, %v1550
          %v1552 = vpop.f32.mrf.mxu0
          %v1553 = vpop.f32.mrf.mxu0
          %v1554 = vadd.f32 0.0, %v1553
          %v1555 = vpop.f32.mrf.mxu0
          %1556 = vmatprep.mubr.bf16.mxu0 0
          %1557 = vmatmul.mubr.bf16.gmra.mxu0 %v1339
          %v1558 = vpop.f32.mrf.mxu0
          %v1559 = vadd.f32 0.0, %v1558
          %v1560 = vpop.f32.mrf.mxu0
          %v1561 = vpop.f32.mrf.mxu0
          %v1562 = vadd.f32 0.0, %v1561
          %v1563 = vpop.f32.mrf.mxu0
          %1564 = vdwg.mxu0
          %v1581 = vunpack.c.l.b16 %v1228
          %v1582 = vunpack.c.l.b16 %v1229
          %v1583 = vunpack.c.l.b16 %v1230
          %v1584 = vunpack.c.l.b16 %v1231
          %v1585 = vunpack.c.l.b16 %v1232
          %v1586 = vunpack.c.l.b16 %v1233
          %v1587 = vunpack.c.l.b16 %v1234
          %v1588 = vunpack.c.l.b16 %v1235
          %v1589 = vunpack.c.l.b16 %v1236
          %v1590 = vunpack.c.l.b16 %v1237
          %v1591 = vunpack.c.l.b16 %v1238
          %v1592 = vunpack.c.l.b16 %v1239
          %v1593 = vunpack.c.l.b16 %v1240
          %v1594 = vunpack.c.l.b16 %v1241
          %v1595 = vunpack.c.l.b16 %v1242
          %v1596 = vunpack.c.l.b16 %v1243
          %v1597 = vpack.c.b16 %v1582, %v1581
          %v1598 = vpack.c.b16 %v1584, %v1583
          %v1599 = vpack.c.b16 %v1586, %v1585
          %v1600 = vpack.c.b16 %v1588, %v1587
          %v1601 = vpack.c.b16 %v1590, %v1589
          %v1602 = vpack.c.b16 %v1592, %v1591
          %v1603 = vpack.c.b16 %v1594, %v1593
          %v1604 = vpack.c.b16 %v1596, %v1595
          %1613 = vmatprep.subr.bf16.mxu0 0
          %1614 = vmatpush1.bf16.msra.mxu0 %v1604
          %1615 = vmatprep.subr.bf16.mxu0 0
          %1616 = vmatpush1.bf16.msra.mxu0 %v1603
          %1617 = vmatprep.subr.bf16.mxu0 0
          %1618 = vmatpush1.bf16.msra.mxu0 %v1602
          %1619 = vmatprep.subr.bf16.mxu0 0
          %1620 = vmatpush1.bf16.msra.mxu0 %v1601
          %1621 = vmatprep.subr.bf16.mxu0 0
          %1622 = vmatpush1.bf16.msra.mxu0 %v1600
          %1623 = vmatprep.subr.bf16.mxu0 0
          %1624 = vmatpush1.bf16.msra.mxu0 %v1599
          %1625 = vmatprep.subr.bf16.mxu0 0
          %1626 = vmatpush1.bf16.msra.mxu0 %v1598
          %1627 = vmatprep.subr.bf16.mxu0 0
          %1628 = vmatpush1.bf16.msra.mxu0 %v1597
          %1629 = vmatprep.subr.bf16.mxu0 0
          %1630 = vmatpush2.bf16.msra.mxu0 0
          %1631 = vmatprep.subr.bf16.mxu0 0
          %1632 = vmatpush2.bf16.msra.mxu0 0
          %1633 = vmatprep.subr.bf16.mxu0 0
          %1634 = vmatpush2.bf16.msra.mxu0 0
          %1635 = vmatprep.subr.bf16.mxu0 0
          %1636 = vmatpush2.bf16.msra.mxu0 0
          %1637 = vmatprep.subr.bf16.mxu0 0
          %1638 = vmatpush2.bf16.msra.mxu0 0
          %1639 = vmatprep.subr.bf16.mxu0 0
          %1640 = vmatpush2.bf16.msra.mxu0 0
          %1641 = vmatprep.subr.bf16.mxu0 0
          %1642 = vmatpush2.bf16.msra.mxu0 0
          %1643 = vmatprep.subr.bf16.mxu0 0
          %1644 = vmatpush2.bf16.msra.mxu0 0
          %1645 = vmatprep.mubr.bf16.mxu0 0
          %1646 = vmatmul.mubr.bf16.gmra.mxu0 %v1212
          %v1647 = vpop.f32.mrf.mxu0
          %v1648 = vadd.f32 %v1439, %v1647
          %v1649 = vpop.f32.mrf.mxu0
          %v1650 = vpop.f32.mrf.mxu0
          %v1651 = vadd.f32 %v1442, %v1650
          %v1652 = vpop.f32.mrf.mxu0
          %1653 = vmatprep.mubr.bf16.mxu0 0
          %1654 = vmatmul.mubr.bf16.gmra.mxu0 %v1213
          %v1655 = vpop.f32.mrf.mxu0
          %v1656 = vadd.f32 %v1447, %v1655
          %v1657 = vpop.f32.mrf.mxu0
          %v1658 = vpop.f32.mrf.mxu0
          %v1659 = vadd.f32 %v1450, %v1658
          %v1660 = vpop.f32.mrf.mxu0
          %1661 = vmatprep.mubr.bf16.mxu0 0
          %1662 = vmatmul.mubr.bf16.gmra.mxu0 %v1214
          %v1663 = vpop.f32.mrf.mxu0
          %v1664 = vadd.f32 %v1455, %v1663
          %v1665 = vpop.f32.mrf.mxu0
          %v1666 = vpop.f32.mrf.mxu0
          %v1667 = vadd.f32 %v1458, %v1666
          %v1668 = vpop.f32.mrf.mxu0
          %1669 = vmatprep.mubr.bf16.mxu0 0
          %1670 = vmatmul.mubr.bf16.gmra.mxu0 %v1215
          %v1671 = vpop.f32.mrf.mxu0
          %v1672 = vadd.f32 %v1463, %v1671
          %v1673 = vpop.f32.mrf.mxu0
          %v1674 = vpop.f32.mrf.mxu0
          %v1675 = vadd.f32 %v1466, %v1674
          %v1676 = vpop.f32.mrf.mxu0
          %1677 = vmatprep.mubr.bf16.mxu0 0
          %1678 = vmatmul.mubr.bf16.gmra.mxu0 %v1216
          %v1679 = vpop.f32.mrf.mxu0
          %v1680 = vadd.f32 %v1471, %v1679
          %v1681 = vpop.f32.mrf.mxu0
          %v1682 = vpop.f32.mrf.mxu0
          %v1683 = vadd.f32 %v1474, %v1682
          %v1684 = vpop.f32.mrf.mxu0
          %1685 = vmatprep.mubr.bf16.mxu0 0
          %1686 = vmatmul.mubr.bf16.gmra.mxu0 %v1217
          %v1687 = vpop.f32.mrf.mxu0
          %v1688 = vadd.f32 %v1479, %v1687
          %v1689 = vpop.f32.mrf.mxu0
          %v1690 = vpop.f32.mrf.mxu0
          %v1691 = vadd.f32 %v1482, %v1690
          %v1692 = vpop.f32.mrf.mxu0
          %1693 = vmatprep.mubr.bf16.mxu0 0
          %1694 = vmatmul.mubr.bf16.gmra.mxu0 %v1218
          %v1695 = vpop.f32.mrf.mxu0
          %v1696 = vadd.f32 %v1487, %v1695
          %v1697 = vpop.f32.mrf.mxu0
          %v1698 = vpop.f32.mrf.mxu0
          %v1699 = vadd.f32 %v1490, %v1698
          %v1700 = vpop.f32.mrf.mxu0
          %1701 = vmatprep.mubr.bf16.mxu0 0
          %1702 = vmatmul.mubr.bf16.gmra.mxu0 %v1219
          %v1703 = vpop.f32.mrf.mxu0
          %v1704 = vadd.f32 %v1495, %v1703
          %v1705 = vpop.f32.mrf.mxu0
          %v1706 = vpop.f32.mrf.mxu0
          %v1707 = vadd.f32 %v1498, %v1706
          %v1708 = vpop.f32.mrf.mxu0
          %1709 = vmatprep.mubr.bf16.mxu0 0
          %1710 = vmatmul.mubr.bf16.gmra.mxu0 %v1220
          %v1711 = vpop.f32.mrf.mxu0
          %v1712 = vadd.f32 %v1503, %v1711
          %v1713 = vpop.f32.mrf.mxu0
          %v1714 = vpop.f32.mrf.mxu0
          %v1715 = vadd.f32 %v1506, %v1714
          %v1716 = vpop.f32.mrf.mxu0
          %1717 = vmatprep.mubr.bf16.mxu0 0
          %1718 = vmatmul.mubr.bf16.gmra.mxu0 %v1221
          %v1719 = vpop.f32.mrf.mxu0
          %v1720 = vadd.f32 %v1511, %v1719
          %v1721 = vpop.f32.mrf.mxu0
          %v1722 = vpop.f32.mrf.mxu0
          %v1723 = vadd.f32 %v1514, %v1722
          %v1724 = vpop.f32.mrf.mxu0
          %1725 = vmatprep.mubr.bf16.mxu0 0
          %1726 = vmatmul.mubr.bf16.gmra.mxu0 %v1222
          %v1727 = vpop.f32.mrf.mxu0
          %v1728 = vadd.f32 %v1519, %v1727
          %v1729 = vpop.f32.mrf.mxu0
          %v1730 = vpop.f32.mrf.mxu0
          %v1731 = vadd.f32 %v1522, %v1730
          %v1732 = vpop.f32.mrf.mxu0
          %1733 = vmatprep.mubr.bf16.mxu0 0
          %1734 = vmatmul.mubr.bf16.gmra.mxu0 %v1223
          %v1735 = vpop.f32.mrf.mxu0
          %v1736 = vadd.f32 %v1527, %v1735
          %v1737 = vpop.f32.mrf.mxu0
          %v1738 = vpop.f32.mrf.mxu0
          %v1739 = vadd.f32 %v1530, %v1738
          %v1740 = vpop.f32.mrf.mxu0
          %1741 = vmatprep.mubr.bf16.mxu0 0
          %1742 = vmatmul.mubr.bf16.gmra.mxu0 %v1224
          %v1743 = vpop.f32.mrf.mxu0
          %v1744 = vadd.f32 %v1535, %v1743
          %v1745 = vpop.f32.mrf.mxu0
          %v1746 = vpop.f32.mrf.mxu0
          %v1747 = vadd.f32 %v1538, %v1746
          %v1748 = vpop.f32.mrf.mxu0
          %1749 = vmatprep.mubr.bf16.mxu0 0
          %1750 = vmatmul.mubr.bf16.gmra.mxu0 %v1225
          %v1751 = vpop.f32.mrf.mxu0
          %v1752 = vadd.f32 %v1543, %v1751
          %v1753 = vpop.f32.mrf.mxu0
          %v1754 = vpop.f32.mrf.mxu0
          %v1755 = vadd.f32 %v1546, %v1754
          %v1756 = vpop.f32.mrf.mxu0
          %1757 = vmatprep.mubr.bf16.mxu0 0
          %1758 = vmatmul.mubr.bf16.gmra.mxu0 %v1226
          %v1759 = vpop.f32.mrf.mxu0
          %v1760 = vadd.f32 %v1551, %v1759
          %v1761 = vpop.f32.mrf.mxu0
          %v1762 = vpop.f32.mrf.mxu0
          %v1763 = vadd.f32 %v1554, %v1762
          %v1764 = vpop.f32.mrf.mxu0
          %1765 = vmatprep.mubr.bf16.mxu0 0
          %1766 = vmatmul.mubr.bf16.gmra.mxu0 %v1227
          %v1767 = vpop.f32.mrf.mxu0
          %v1768 = vadd.f32 %v1559, %v1767
          %v1769 = vpop.f32.mrf.mxu0
          %v1770 = vpop.f32.mrf.mxu0
          %v1771 = vadd.f32 %v1562, %v1770
          %v1772 = vpop.f32.mrf.mxu0
          %1773 = vdwg.mxu0
          %v1774 = vld [vmem:[%s5] sm:$0x1]
          %v1776 = vlaneseq
          %v1777 = vshrl.u32 %v1776, 7
          %v1778 = vsub.s32 0, %v1777
          %v1779 = vrot.slane %v1774, %v1778
          %v1781 = vadd.f32 %v1648, %v1779
          %v1782 = vadd.f32 %v1651, %v1779
          %v1783 = vadd.f32 %v1656, %v1779
          %v1784 = vadd.f32 %v1659, %v1779
          %v1785 = vadd.f32 %v1664, %v1779
          %v1786 = vadd.f32 %v1667, %v1779
          %v1787 = vadd.f32 %v1672, %v1779
          %v1788 = vadd.f32 %v1675, %v1779
          %v1789 = vadd.f32 %v1680, %v1779
          %v1790 = vadd.f32 %v1683, %v1779
          %v1791 = vadd.f32 %v1688, %v1779
          %v1792 = vadd.f32 %v1691, %v1779
          %v1793 = vadd.f32 %v1696, %v1779
          %v1794 = vadd.f32 %v1699, %v1779
          %v1795 = vadd.f32 %v1704, %v1779
          %v1796 = vadd.f32 %v1707, %v1779
          %v1797 = vadd.f32 %v1712, %v1779
          %v1798 = vadd.f32 %v1715, %v1779
          %v1799 = vadd.f32 %v1720, %v1779
          %v1800 = vadd.f32 %v1723, %v1779
          %v1801 = vadd.f32 %v1728, %v1779
          %v1802 = vadd.f32 %v1731, %v1779
          %v1803 = vadd.f32 %v1736, %v1779
          %v1804 = vadd.f32 %v1739, %v1779
          %v1805 = vadd.f32 %v1744, %v1779
          %v1806 = vadd.f32 %v1747, %v1779
          %v1807 = vadd.f32 %v1752, %v1779
          %v1808 = vadd.f32 %v1755, %v1779
          %v1809 = vadd.f32 %v1760, %v1779
          %v1810 = vadd.f32 %v1763, %v1779
          %v1811 = vadd.f32 %v1768, %v1779
          %v1812 = vadd.f32 %v1771, %v1779
          %v1813 = vunpack.c.l.bf16 %v1148
          %v1814 = vunpack.c.l.bf16 %v1149
          %v1815 = vunpack.c.l.bf16 %v1150
          %v1816 = vunpack.c.l.bf16 %v1151
          %v1817 = vunpack.c.l.bf16 %v1152
          %v1818 = vunpack.c.l.bf16 %v1153
          %v1819 = vunpack.c.l.bf16 %v1154
          %v1820 = vunpack.c.l.bf16 %v1155
          %v1821 = vunpack.c.l.bf16 %v1156
          %v1822 = vunpack.c.l.bf16 %v1157
          %v1823 = vunpack.c.l.bf16 %v1158
          %v1824 = vunpack.c.l.bf16 %v1159
          %v1825 = vunpack.c.l.bf16 %v1160
          %v1826 = vunpack.c.l.bf16 %v1161
          %v1827 = vunpack.c.l.bf16 %v1162
          %v1828 = vunpack.c.l.bf16 %v1163
          %v1829 = vunpack.c.l.bf16 %v1164
          %v1830 = vunpack.c.l.bf16 %v1165
          %v1831 = vunpack.c.l.bf16 %v1166
          %v1832 = vunpack.c.l.bf16 %v1167
          %v1833 = vunpack.c.l.bf16 %v1168
          %v1834 = vunpack.c.l.bf16 %v1169
          %v1835 = vunpack.c.l.bf16 %v1170
          %v1836 = vunpack.c.l.bf16 %v1171
          %v1837 = vunpack.c.l.bf16 %v1172
          %v1838 = vunpack.c.l.bf16 %v1173
          %v1839 = vunpack.c.l.bf16 %v1174
          %v1840 = vunpack.c.l.bf16 %v1175
          %v1841 = vunpack.c.l.bf16 %v1176
          %v1842 = vunpack.c.l.bf16 %v1177
          %v1843 = vunpack.c.l.bf16 %v1178
          %v1844 = vunpack.c.l.bf16 %v1179
          %v1845 = vadd.f32 %v1813, %v1781
          %v1846 = vadd.f32 %v1814, %v1782
          %v1847 = vadd.f32 %v1815, %v1783
          %v1848 = vadd.f32 %v1816, %v1784
          %v1849 = vadd.f32 %v1817, %v1785
          %v1850 = vadd.f32 %v1818, %v1786
          %v1851 = vadd.f32 %v1819, %v1787
          %v1852 = vadd.f32 %v1820, %v1788
          %v1853 = vadd.f32 %v1821, %v1789
          %v1854 = vadd.f32 %v1822, %v1790
          %v1855 = vadd.f32 %v1823, %v1791
          %v1856 = vadd.f32 %v1824, %v1792
          %v1857 = vadd.f32 %v1825, %v1793
          %v1858 = vadd.f32 %v1826, %v1794
          %v1859 = vadd.f32 %v1827, %v1795
          %v1860 = vadd.f32 %v1828, %v1796
          %v1861 = vadd.f32 %v1829, %v1797
          %v1862 = vadd.f32 %v1830, %v1798
          %v1863 = vadd.f32 %v1831, %v1799
          %v1864 = vadd.f32 %v1832, %v1800
          %v1865 = vadd.f32 %v1833, %v1801
          %v1866 = vadd.f32 %v1834, %v1802
          %v1867 = vadd.f32 %v1835, %v1803
          %v1868 = vadd.f32 %v1836, %v1804
          %v1869 = vadd.f32 %v1837, %v1805
          %v1870 = vadd.f32 %v1838, %v1806
          %v1871 = vadd.f32 %v1839, %v1807
          %v1872 = vadd.f32 %v1840, %v1808
          %v1873 = vadd.f32 %v1841, %v1809
          %v1874 = vadd.f32 %v1842, %v1810
          %v1875 = vadd.f32 %v1843, %v1811
          %v1876 = vadd.f32 %v1844, %v1812
          %v1877 = vmax.f32 %v1845, 0.0
          %v1878 = vmax.f32 %v1846, 0.0
          %v1879 = vmax.f32 %v1847, 0.0
          %v1880 = vmax.f32 %v1848, 0.0
          %v1881 = vmax.f32 %v1849, 0.0
          %v1882 = vmax.f32 %v1850, 0.0
          %v1883 = vmax.f32 %v1851, 0.0
          %v1884 = vmax.f32 %v1852, 0.0
          %v1885 = vmax.f32 %v1853, 0.0
          %v1886 = vmax.f32 %v1854, 0.0
          %v1887 = vmax.f32 %v1855, 0.0
          %v1888 = vmax.f32 %v1856, 0.0
          %v1889 = vmax.f32 %v1857, 0.0
          %v1890 = vmax.f32 %v1858, 0.0
          %v1891 = vmax.f32 %v1859, 0.0
          %v1892 = vmax.f32 %v1860, 0.0
          %v1893 = vmax.f32 %v1861, 0.0
          %v1894 = vmax.f32 %v1862, 0.0
          %v1895 = vmax.f32 %v1863, 0.0
          %v1896 = vmax.f32 %v1864, 0.0
          %v1897 = vmax.f32 %v1865, 0.0
          %v1898 = vmax.f32 %v1866, 0.0
          %v1899 = vmax.f32 %v1867, 0.0
          %v1900 = vmax.f32 %v1868, 0.0
          %v1901 = vmax.f32 %v1869, 0.0
          %v1902 = vmax.f32 %v1870, 0.0
          %v1903 = vmax.f32 %v1871, 0.0
          %v1904 = vmax.f32 %v1872, 0.0
          %v1905 = vmax.f32 %v1873, 0.0
          %v1906 = vmax.f32 %v1874, 0.0
          %v1907 = vmax.f32 %v1875, 0.0
          %v1908 = vmax.f32 %v1876, 0.0
          %v1909 = vpack.c.bf16 %v1878, %v1877
          %v1910 = vpack.c.bf16 %v1880, %v1879
          %v1911 = vpack.c.bf16 %v1882, %v1881
          %v1912 = vpack.c.bf16 %v1884, %v1883
          %v1913 = vpack.c.bf16 %v1886, %v1885
          %v1914 = vpack.c.bf16 %v1888, %v1887
          %v1915 = vpack.c.bf16 %v1890, %v1889
          %v1916 = vpack.c.bf16 %v1892, %v1891
          %v1917 = vpack.c.bf16 %v1894, %v1893
          %v1918 = vpack.c.bf16 %v1896, %v1895
          %v1919 = vpack.c.bf16 %v1898, %v1897
          %v1920 = vpack.c.bf16 %v1900, %v1899
          %v1921 = vpack.c.bf16 %v1902, %v1901
          %v1922 = vpack.c.bf16 %v1904, %v1903
          %v1923 = vpack.c.bf16 %v1906, %v1905
          %v1924 = vpack.c.bf16 %v1908, %v1907
          %v1925 = vld [vmem:[%s6] sm:$0xf]
          %v1926 = vld [vmem:[%s6 + $0x4] sm:$0xf]
          %v1927 = vld [vmem:[%s6 + $0x8] sm:$0xf]
          %v1928 = vld [vmem:[%s6 + $0xc] sm:$0xf]
          %v1929 = vld [vmem:[%s6 + $0x10] sm:$0xf]
          %v1930 = vld [vmem:[%s6 + $0x14] sm:$0xf]
          %v1931 = vld [vmem:[%s6 + $0x18] sm:$0xf]
          %v1932 = vld [vmem:[%s6 + $0x1c] sm:$0xf]
          %v1933 = vld [vmem:[%s6 + $0x20] sm:$0xf]
          %v1934 = vld [vmem:[%s6 + $0x24] sm:$0xf]
          %v1935 = vld [vmem:[%s6 + $0x28] sm:$0xf]
          %v1936 = vld [vmem:[%s6 + $0x2c] sm:$0xf]
          %v1937 = vld [vmem:[%s6 + $0x30] sm:$0xf]
          %v1938 = vld [vmem:[%s6 + $0x34] sm:$0xf]
          %v1939 = vld [vmem:[%s6 + $0x38] sm:$0xf]
          %v1940 = vld [vmem:[%s6 + $0x3c] sm:$0xf]
          %v1941 = vld [vmem:[%s7] sm:$0x1]
          %v1943 = vlaneseq
          %v1944 = vshrl.u32 %v1943, 7
          %v1945 = vsub.s32 0, %v1944
          %v1946 = vrot.slane %v1941, %v1945
          %v1964 = vunpack.c.l.b16 %v1925
          %v1965 = vunpack.c.l.b16 %v1926
          %v1966 = vunpack.c.l.b16 %v1927
          %v1967 = vunpack.c.l.b16 %v1928
          %v1968 = vunpack.c.l.b16 %v1929
          %v1969 = vunpack.c.l.b16 %v1930
          %v1970 = vunpack.c.l.b16 %v1931
          %v1971 = vunpack.c.l.b16 %v1932
          %v1972 = vunpack.c.l.b16 %v1933
          %v1973 = vunpack.c.l.b16 %v1934
          %v1974 = vunpack.c.l.b16 %v1935
          %v1975 = vunpack.c.l.b16 %v1936
          %v1976 = vunpack.c.l.b16 %v1937
          %v1977 = vunpack.c.l.b16 %v1938
          %v1978 = vunpack.c.l.b16 %v1939
          %v1979 = vunpack.c.l.b16 %v1940
          %v1980 = vpack.c.b16 %v1965, %v1964
          %v1981 = vpack.c.b16 %v1967, %v1966
          %v1982 = vpack.c.b16 %v1969, %v1968
          %v1983 = vpack.c.b16 %v1971, %v1970
          %v1984 = vpack.c.b16 %v1973, %v1972
          %v1985 = vpack.c.b16 %v1975, %v1974
          %v1986 = vpack.c.b16 %v1977, %v1976
          %v1987 = vpack.c.b16 %v1979, %v1978
          %1996 = vmatprep.subr.bf16.mxu0 0
          %1997 = vmatpush1.bf16.msra.mxu0 %v1987
          %1998 = vmatprep.subr.bf16.mxu0 0
          %1999 = vmatpush1.bf16.msra.mxu0 %v1986
          %2000 = vmatprep.subr.bf16.mxu0 0
          %2001 = vmatpush1.bf16.msra.mxu0 %v1985
          %2002 = vmatprep.subr.bf16.mxu0 0
          %2003 = vmatpush1.bf16.msra.mxu0 %v1984
          %2004 = vmatprep.subr.bf16.mxu0 0
          %2005 = vmatpush1.bf16.msra.mxu0 %v1983
          %2006 = vmatprep.subr.bf16.mxu0 0
          %2007 = vmatpush1.bf16.msra.mxu0 %v1982
          %2008 = vmatprep.subr.bf16.mxu0 0
          %2009 = vmatpush1.bf16.msra.mxu0 %v1981
          %2010 = vmatprep.subr.bf16.mxu0 0
          %2011 = vmatpush1.bf16.msra.mxu0 %v1980
          %2012 = vmatprep.subr.bf16.mxu0 0
          %2013 = vmatpush2.bf16.msra.mxu0 0
          %2014 = vmatprep.subr.bf16.mxu0 0
          %2015 = vmatpush2.bf16.msra.mxu0 0
          %2016 = vmatprep.subr.bf16.mxu0 0
          %2017 = vmatpush2.bf16.msra.mxu0 0
          %2018 = vmatprep.subr.bf16.mxu0 0
          %2019 = vmatpush2.bf16.msra.mxu0 0
          %2020 = vmatprep.subr.bf16.mxu0 0
          %2021 = vmatpush2.bf16.msra.mxu0 0
          %2022 = vmatprep.subr.bf16.mxu0 0
          %2023 = vmatpush2.bf16.msra.mxu0 0
          %2024 = vmatprep.subr.bf16.mxu0 0
          %2025 = vmatpush2.bf16.msra.mxu0 0
          %2026 = vmatprep.subr.bf16.mxu0 0
          %2027 = vmatpush2.bf16.msra.mxu0 0
          %2028 = vmatprep.mubr.bf16.mxu0 0
          %2029 = vmatmul.mubr.bf16.gmra.mxu0 %v1909
          %v2030 = vpop.f32.mrf.mxu0
          %v2031 = vadd.f32 %v1946, %v2030
          %v2032 = vpop.f32.mrf.mxu0
          %v2033 = vpop.f32.mrf.mxu0
          %v2034 = vadd.f32 %v1946, %v2033
          %v2035 = vpop.f32.mrf.mxu0
          %2036 = vmatprep.mubr.bf16.mxu0 0
          %2037 = vmatmul.mubr.bf16.gmra.mxu0 %v1910
          %v2038 = vpop.f32.mrf.mxu0
          %v2039 = vadd.f32 %v1946, %v2038
          %v2040 = vpop.f32.mrf.mxu0
          %v2041 = vpop.f32.mrf.mxu0
          %v2042 = vadd.f32 %v1946, %v2041
          %v2043 = vpop.f32.mrf.mxu0
          %2044 = vmatprep.mubr.bf16.mxu0 0
          %2045 = vmatmul.mubr.bf16.gmra.mxu0 %v1911
          %v2046 = vpop.f32.mrf.mxu0
          %v2047 = vadd.f32 %v1946, %v2046
          %v2048 = vpop.f32.mrf.mxu0
          %v2049 = vpop.f32.mrf.mxu0
          %v2050 = vadd.f32 %v1946, %v2049
          %v2051 = vpop.f32.mrf.mxu0
          %2052 = vmatprep.mubr.bf16.mxu0 0
          %2053 = vmatmul.mubr.bf16.gmra.mxu0 %v1912
          %v2054 = vpop.f32.mrf.mxu0
          %v2055 = vadd.f32 %v1946, %v2054
          %v2056 = vpop.f32.mrf.mxu0
          %v2057 = vpop.f32.mrf.mxu0
          %v2058 = vadd.f32 %v1946, %v2057
          %v2059 = vpop.f32.mrf.mxu0
          %2060 = vmatprep.mubr.bf16.mxu0 0
          %2061 = vmatmul.mubr.bf16.gmra.mxu0 %v1913
          %v2062 = vpop.f32.mrf.mxu0
          %v2063 = vadd.f32 %v1946, %v2062
          %v2064 = vpop.f32.mrf.mxu0
          %v2065 = vpop.f32.mrf.mxu0
          %v2066 = vadd.f32 %v1946, %v2065
          %v2067 = vpop.f32.mrf.mxu0
          %2068 = vmatprep.mubr.bf16.mxu0 0
          %2069 = vmatmul.mubr.bf16.gmra.mxu0 %v1914
          %v2070 = vpop.f32.mrf.mxu0
          %v2071 = vadd.f32 %v1946, %v2070
          %v2072 = vpop.f32.mrf.mxu0
          %v2073 = vpop.f32.mrf.mxu0
          %v2074 = vadd.f32 %v1946, %v2073
          %v2075 = vpop.f32.mrf.mxu0
          %2076 = vmatprep.mubr.bf16.mxu0 0
          %2077 = vmatmul.mubr.bf16.gmra.mxu0 %v1915
          %v2078 = vpop.f32.mrf.mxu0
          %v2079 = vadd.f32 %v1946, %v2078
          %v2080 = vpop.f32.mrf.mxu0
          %v2081 = vpop.f32.mrf.mxu0
          %v2082 = vadd.f32 %v1946, %v2081
          %v2083 = vpop.f32.mrf.mxu0
          %2084 = vmatprep.mubr.bf16.mxu0 0
          %2085 = vmatmul.mubr.bf16.gmra.mxu0 %v1916
          %v2086 = vpop.f32.mrf.mxu0
          %v2087 = vadd.f32 %v1946, %v2086
          %v2088 = vpop.f32.mrf.mxu0
          %v2089 = vpop.f32.mrf.mxu0
          %v2090 = vadd.f32 %v1946, %v2089
          %v2091 = vpop.f32.mrf.mxu0
          %2092 = vmatprep.mubr.bf16.mxu0 0
          %2093 = vmatmul.mubr.bf16.gmra.mxu0 %v1917
          %v2094 = vpop.f32.mrf.mxu0
          %v2095 = vadd.f32 %v1946, %v2094
          %v2096 = vpop.f32.mrf.mxu0
          %v2097 = vpop.f32.mrf.mxu0
          %v2098 = vadd.f32 %v1946, %v2097
          %v2099 = vpop.f32.mrf.mxu0
          %2100 = vmatprep.mubr.bf16.mxu0 0
          %2101 = vmatmul.mubr.bf16.gmra.mxu0 %v1918
          %v2102 = vpop.f32.mrf.mxu0
          %v2103 = vadd.f32 %v1946, %v2102
          %v2104 = vpop.f32.mrf.mxu0
          %v2105 = vpop.f32.mrf.mxu0
          %v2106 = vadd.f32 %v1946, %v2105
          %v2107 = vpop.f32.mrf.mxu0
          %2108 = vmatprep.mubr.bf16.mxu0 0
          %2109 = vmatmul.mubr.bf16.gmra.mxu0 %v1919
          %v2110 = vpop.f32.mrf.mxu0
          %v2111 = vadd.f32 %v1946, %v2110
          %v2112 = vpop.f32.mrf.mxu0
          %v2113 = vpop.f32.mrf.mxu0
          %v2114 = vadd.f32 %v1946, %v2113
          %v2115 = vpop.f32.mrf.mxu0
          %2116 = vmatprep.mubr.bf16.mxu0 0
          %2117 = vmatmul.mubr.bf16.gmra.mxu0 %v1920
          %v2118 = vpop.f32.mrf.mxu0
          %v2119 = vadd.f32 %v1946, %v2118
          %v2120 = vpop.f32.mrf.mxu0
          %v2121 = vpop.f32.mrf.mxu0
          %v2122 = vadd.f32 %v1946, %v2121
          %v2123 = vpop.f32.mrf.mxu0
          %2124 = vmatprep.mubr.bf16.mxu0 0
          %2125 = vmatmul.mubr.bf16.gmra.mxu0 %v1921
          %v2126 = vpop.f32.mrf.mxu0
          %v2127 = vadd.f32 %v1946, %v2126
          %v2128 = vpop.f32.mrf.mxu0
          %v2129 = vpop.f32.mrf.mxu0
          %v2130 = vadd.f32 %v1946, %v2129
          %v2131 = vpop.f32.mrf.mxu0
          %2132 = vmatprep.mubr.bf16.mxu0 0
          %2133 = vmatmul.mubr.bf16.gmra.mxu0 %v1922
          %v2134 = vpop.f32.mrf.mxu0
          %v2135 = vadd.f32 %v1946, %v2134
          %v2136 = vpop.f32.mrf.mxu0
          %v2137 = vpop.f32.mrf.mxu0
          %v2138 = vadd.f32 %v1946, %v2137
          %v2139 = vpop.f32.mrf.mxu0
          %2140 = vmatprep.mubr.bf16.mxu0 0
          %2141 = vmatmul.mubr.bf16.gmra.mxu0 %v1923
          %v2142 = vpop.f32.mrf.mxu0
          %v2143 = vadd.f32 %v1946, %v2142
          %v2144 = vpop.f32.mrf.mxu0
          %v2145 = vpop.f32.mrf.mxu0
          %v2146 = vadd.f32 %v1946, %v2145
          %v2147 = vpop.f32.mrf.mxu0
          %2148 = vmatprep.mubr.bf16.mxu0 0
          %2149 = vmatmul.mubr.bf16.gmra.mxu0 %v1924
          %v2150 = vpop.f32.mrf.mxu0
          %v2151 = vadd.f32 %v1946, %v2150
          %v2152 = vpop.f32.mrf.mxu0
          %v2153 = vpop.f32.mrf.mxu0
          %v2154 = vadd.f32 %v1946, %v2153
          %v2155 = vpop.f32.mrf.mxu0
          %2156 = vdwg.mxu0
          %v2157 = vsub.f32 0.0, %v2031
          %v2158 = vsub.f32 0.0, %v2034
          %v2159 = vsub.f32 0.0, %v2039
          %v2160 = vsub.f32 0.0, %v2042
          %v2161 = vsub.f32 0.0, %v2047
          %v2162 = vsub.f32 0.0, %v2050
          %v2163 = vsub.f32 0.0, %v2055
          %v2164 = vsub.f32 0.0, %v2058
          %v2165 = vsub.f32 0.0, %v2063
          %v2166 = vsub.f32 0.0, %v2066
          %v2167 = vsub.f32 0.0, %v2071
          %v2168 = vsub.f32 0.0, %v2074
          %v2169 = vsub.f32 0.0, %v2079
          %v2170 = vsub.f32 0.0, %v2082
          %v2171 = vsub.f32 0.0, %v2087
          %v2172 = vsub.f32 0.0, %v2090
          %v2173 = vsub.f32 0.0, %v2095
          %v2174 = vsub.f32 0.0, %v2098
          %v2175 = vsub.f32 0.0, %v2103
          %v2176 = vsub.f32 0.0, %v2106
          %v2177 = vsub.f32 0.0, %v2111
          %v2178 = vsub.f32 0.0, %v2114
          %v2179 = vsub.f32 0.0, %v2119
          %v2180 = vsub.f32 0.0, %v2122
          %v2181 = vsub.f32 0.0, %v2127
          %v2182 = vsub.f32 0.0, %v2130
          %v2183 = vsub.f32 0.0, %v2135
          %v2184 = vsub.f32 0.0, %v2138
          %v2185 = vsub.f32 0.0, %v2143
          %v2186 = vsub.f32 0.0, %v2146
          %v2187 = vsub.f32 0.0, %v2151
          %v2188 = vsub.f32 0.0, %v2154
          %v2189 = vmul.f32 %v2157, 1.442695
          %v2190 = vpow.pop %v2189
          %v2191 = vmul.f32 %v2158, 1.442695
          %v2192 = vpow.pop %v2191
          %v2193 = vmul.f32 %v2159, 1.442695
          %v2194 = vpow.pop %v2193
          %v2195 = vmul.f32 %v2160, 1.442695
          %v2196 = vpow.pop %v2195
          %v2197 = vmul.f32 %v2161, 1.442695
          %v2198 = vpow.pop %v2197
          %v2199 = vmul.f32 %v2162, 1.442695
          %v2200 = vpow.pop %v2199
          %v2201 = vmul.f32 %v2163, 1.442695
          %v2202 = vpow.pop %v2201
          %v2203 = vmul.f32 %v2164, 1.442695
          %v2204 = vpow.pop %v2203
          %v2205 = vmul.f32 %v2165, 1.442695
          %v2206 = vpow.pop %v2205
          %v2207 = vmul.f32 %v2166, 1.442695
          %v2208 = vpow.pop %v2207
          %v2209 = vmul.f32 %v2167, 1.442695
          %v2210 = vpow.pop %v2209
          %v2211 = vmul.f32 %v2168, 1.442695
          %v2212 = vpow.pop %v2211
          %v2213 = vmul.f32 %v2169, 1.442695
          %v2214 = vpow.pop %v2213
          %v2215 = vmul.f32 %v2170, 1.442695
          %v2216 = vpow.pop %v2215
          %v2217 = vmul.f32 %v2171, 1.442695
          %v2218 = vpow.pop %v2217
          %v2219 = vmul.f32 %v2172, 1.442695
          %v2220 = vpow.pop %v2219
          %v2221 = vmul.f32 %v2173, 1.442695
          %v2222 = vpow.pop %v2221
          %v2223 = vmul.f32 %v2174, 1.442695
          %v2224 = vpow.pop %v2223
          %v2225 = vmul.f32 %v2175, 1.442695
          %v2226 = vpow.pop %v2225
          %v2227 = vmul.f32 %v2176, 1.442695
          %v2228 = vpow.pop %v2227
          %v2229 = vmul.f32 %v2177, 1.442695
          %v2230 = vpow.pop %v2229
          %v2231 = vmul.f32 %v2178, 1.442695
          %v2232 = vpow.pop %v2231
          %v2233 = vmul.f32 %v2179, 1.442695
          %v2234 = vpow.pop %v2233
          %v2235 = vmul.f32 %v2180, 1.442695
          %v2236 = vpow.pop %v2235
          %v2237 = vmul.f32 %v2181, 1.442695
          %v2238 = vpow.pop %v2237
          %v2239 = vmul.f32 %v2182, 1.442695
          %v2240 = vpow.pop %v2239
          %v2241 = vmul.f32 %v2183, 1.442695
          %v2242 = vpow.pop %v2241
          %v2243 = vmul.f32 %v2184, 1.442695
          %v2244 = vpow.pop %v2243
          %v2245 = vmul.f32 %v2185, 1.442695
          %v2246 = vpow.pop %v2245
          %v2247 = vmul.f32 %v2186, 1.442695
          %v2248 = vpow.pop %v2247
          %v2249 = vmul.f32 %v2187, 1.442695
          %v2250 = vpow.pop %v2249
          %v2251 = vmul.f32 %v2188, 1.442695
          %v2252 = vpow.pop %v2251
          %v2253 = vadd.f32 %v2190, 1.0
          %v2254 = vadd.f32 %v2192, 1.0
          %v2255 = vadd.f32 %v2194, 1.0
          %v2256 = vadd.f32 %v2196, 1.0
          %v2257 = vadd.f32 %v2198, 1.0
          %v2258 = vadd.f32 %v2200, 1.0
          %v2259 = vadd.f32 %v2202, 1.0
          %v2260 = vadd.f32 %v2204, 1.0
          %v2261 = vadd.f32 %v2206, 1.0
          %v2262 = vadd.f32 %v2208, 1.0
          %v2263 = vadd.f32 %v2210, 1.0
          %v2264 = vadd.f32 %v2212, 1.0
          %v2265 = vadd.f32 %v2214, 1.0
          %v2266 = vadd.f32 %v2216, 1.0
          %v2267 = vadd.f32 %v2218, 1.0
          %v2268 = vadd.f32 %v2220, 1.0
          %v2269 = vadd.f32 %v2222, 1.0
          %v2270 = vadd.f32 %v2224, 1.0
          %v2271 = vadd.f32 %v2226, 1.0
          %v2272 = vadd.f32 %v2228, 1.0
          %v2273 = vadd.f32 %v2230, 1.0
          %v2274 = vadd.f32 %v2232, 1.0
          %v2275 = vadd.f32 %v2234, 1.0
          %v2276 = vadd.f32 %v2236, 1.0
          %v2277 = vadd.f32 %v2238, 1.0
          %v2278 = vadd.f32 %v2240, 1.0
          %v2279 = vadd.f32 %v2242, 1.0
          %v2280 = vadd.f32 %v2244, 1.0
          %v2281 = vadd.f32 %v2246, 1.0
          %v2282 = vadd.f32 %v2248, 1.0
          %v2283 = vadd.f32 %v2250, 1.0
          %v2284 = vadd.f32 %v2252, 1.0
          %v2285 = vrcp.pop %v2253
          %v2286 = vrcp.pop %v2254
          %v2287 = vrcp.pop %v2255
          %v2288 = vrcp.pop %v2256
          %v2289 = vrcp.pop %v2257
          %v2290 = vrcp.pop %v2258
          %v2291 = vrcp.pop %v2259
          %v2292 = vrcp.pop %v2260
          %v2293 = vrcp.pop %v2261
          %v2294 = vrcp.pop %v2262
          %v2295 = vrcp.pop %v2263
          %v2296 = vrcp.pop %v2264
          %v2297 = vrcp.pop %v2265
          %v2298 = vrcp.pop %v2266
          %v2299 = vrcp.pop %v2267
          %v2300 = vrcp.pop %v2268
          %v2301 = vrcp.pop %v2269
          %v2302 = vrcp.pop %v2270
          %v2303 = vrcp.pop %v2271
          %v2304 = vrcp.pop %v2272
          %v2305 = vrcp.pop %v2273
          %v2306 = vrcp.pop %v2274
          %v2307 = vrcp.pop %v2275
          %v2308 = vrcp.pop %v2276
          %v2309 = vrcp.pop %v2277
          %v2310 = vrcp.pop %v2278
          %v2311 = vrcp.pop %v2279
          %v2312 = vrcp.pop %v2280
          %v2313 = vrcp.pop %v2281
          %v2314 = vrcp.pop %v2282
          %v2315 = vrcp.pop %v2283
          %v2316 = vrcp.pop %v2284
          %2317 = vst [vmem:[%s528] sm:$0xff] %v2285
          %2318 = vst [vmem:[%s528 + $0x8] sm:$0xff] %v2286
          %2319 = vst [vmem:[%s528 + $0x10] sm:$0xff] %v2287
          %2320 = vst [vmem:[%s528 + $0x18] sm:$0xff] %v2288
          %2321 = vst [vmem:[%s528 + $0x20] sm:$0xff] %v2289
          %2322 = vst [vmem:[%s528 + $0x28] sm:$0xff] %v2290
          %2323 = vst [vmem:[%s528 + $0x30] sm:$0xff] %v2291
          %2324 = vst [vmem:[%s528 + $0x38] sm:$0xff] %v2292
          %2325 = vst [vmem:[%s528 + $0x40] sm:$0xff] %v2293
          %2326 = vst [vmem:[%s528 + $0x48] sm:$0xff] %v2294
          %2327 = vst [vmem:[%s528 + $0x50] sm:$0xff] %v2295
          %2328 = vst [vmem:[%s528 + $0x58] sm:$0xff] %v2296
          %2329 = vst [vmem:[%s528 + $0x60] sm:$0xff] %v2297
          %2330 = vst [vmem:[%s528 + $0x68] sm:$0xff] %v2298
          %2331 = vst [vmem:[%s528 + $0x70] sm:$0xff] %v2299
          %2332 = vst [vmem:[%s528 + $0x78] sm:$0xff] %v2300
          %2333 = vst [vmem:[%s528 + $0x80] sm:$0xff] %v2301
          %2334 = vst [vmem:[%s528 + $0x88] sm:$0xff] %v2302
          %2335 = vst [vmem:[%s528 + $0x90] sm:$0xff] %v2303
          %2336 = vst [vmem:[%s528 + $0x98] sm:$0xff] %v2304
          %2337 = vst [vmem:[%s528 + $0xa0] sm:$0xff] %v2305
          %2338 = vst [vmem:[%s528 + $0xa8] sm:$0xff] %v2306
          %2339 = vst [vmem:[%s528 + $0xb0] sm:$0xff] %v2307
          %2340 = vst [vmem:[%s528 + $0xb8] sm:$0xff] %v2308
          %2341 = vst [vmem:[%s528 + $0xc0] sm:$0xff] %v2309
          %2342 = vst [vmem:[%s528 + $0xc8] sm:$0xff] %v2310
          %2343 = vst [vmem:[%s528 + $0xd0] sm:$0xff] %v2311
          %2344 = vst [vmem:[%s528 + $0xd8] sm:$0xff] %v2312
          %2345 = vst [vmem:[%s528 + $0xe0] sm:$0xff] %v2313
          %2346 = vst [vmem:[%s528 + $0xe8] sm:$0xff] %v2314
          %2347 = vst [vmem:[%s528 + $0xf0] sm:$0xff] %v2315
          %2348 = vst [vmem:[%s528 + $0xf8] sm:$0xff] %v2316
        $region98: #{node_level_gnn_forward.5} parent=85 // pred_fallthru
          _
        %s2349 = smul.u32 32, %s23
        %p2350 = scmp.lt.s32.totalorder %s2349, 63
        %s2351 = scalar_select %p2350, %s2349, 63
        %s2352 = smul.addr %s2351, 8
        %s2353 = scalar_lea.vmem %s8, %s2352
        // Predicated region
        $region99: #{node_level_gnn_forward.5} parent=85 // pred_check
          %p2354 = pneg %p234
        $region100: #{node_level_gnn_forward.5} parent=85 // pred_check_branch
          %2356 = sbr.rel (%p2354) target = $region102
        $region101: #{node_level_gnn_forward.5} parent=85 // pred_region
          %s2357 = smul.u32 32, %s23
        $region102: #{node_level_gnn_forward.5} parent=85 // pred_fallthru
          _
      $region86: #{node_level_gnn_forward.5} parent=5 // pred_fallthru
        _
      %p2358 = scmp.le.s32.totalorder 2, %s14
      // Predicated region
      $region103: #{node_level_gnn_forward.5} parent=5 // pred_check
        %p2359 = pneg %p2358
      $region104: #{node_level_gnn_forward.5} parent=5 // pred_check_branch
        %2361 = sbr.rel (%p2359) target = $region106
      $region105: #{node_level_gnn_forward.5} parent=5 // pred_region
        %s2362 = ssub.s32 %s14, 2
        // Predicated region
        $region107: #{node_level_gnn_forward.5} parent=105 // pred_check
          %p2363 = pneg %p240
        $region108: #{node_level_gnn_forward.5} parent=105 // pred_check_branch
          %2365 = sbr.rel (%p2363) target = $region110
        $region109: #{node_level_gnn_forward.5} parent=105 // pred_region
          %s2366 = smul.u32 32, %s25
          %p2367 = scmp.lt.s32.totalorder %s2366, 63
          %s2368 = scalar_select %p2367, %s2366, 63
          %s2369 = smul.addr %s2368, 8
          %s2370 = scalar_lea.vmem %s8, %s2369
        $region110: #{node_level_gnn_forward.5} parent=105 // pred_fallthru
          _
      $region106: #{node_level_gnn_forward.5} parent=5 // pred_fallthru
        _
    $region6: #{node_level_gnn_forward.5} parent=1 // loop_footer
      %s18 = sadd.s32 1, %s14
    $region7: #{node_level_gnn_forward.5} parent=1 // loop_footer_branch
      %13 = sbr.rel target = $region3
    $region8: #{node_level_gnn_forward.5} parent=1 // loop_exit
      _

</llo_original>
